<compile_context>
chip_gen: v5e
topology: v5e:2x2
jax: 0.10.0
libtpu: 0.0.40
codegen_flags: <defaults>
</compile_context>

<pallas_src>
import functools

import jax
import jax.numpy as jnp
from jax.experimental import pallas as pl
from jax.experimental.pallas import tpu as pltpu

LN_EPS = 1e-5
NEG_BIG = -1e30           # finite "masked" value: safe even for fully-padded rows
MXU_DTYPE = jnp.bfloat16  # MXU operand dtype; accumulation stays f32


# ----------------------------- kernel helpers ------------------------------

def _layernorm_f32(x, w, b):
    # PyTorch LayerNorm subclass always computes in float32.
    xf = x.astype(jnp.float32)
    mu = jnp.mean(xf, axis=-1, keepdims=True)
    var = jnp.mean((xf - mu) ** 2, axis=-1, keepdims=True)
    return (xf - mu) * jax.lax.rsqrt(var + LN_EPS) * w + b


def _quick_gelu(x):
    return x * jax.nn.sigmoid(1.702 * x)   # sigmoid -> EUP slot


# ----------------------- fused transformer-stack kernel ---------------------

def transformer_kernel(x_ref,
                       ln1w_ref, ln1b_ref, wqkv_ref, bqkv_ref, wout_ref, bout_ref,
                       ln2w_ref, ln2b_ref, wfc_ref, bfc_ref, wpr_ref, bpr_ref,
                       o_ref, *, n_head):
    # Grid = (batch_tile, layer).  o_ref maps to the same block for every
    # layer, so it acts as the VMEM-resident residual stream across layers.
    layer = pl.program_id(1)

    @pl.when(layer == 0)
    def _():
        o_ref[...] = x_ref[...]

    x = o_ref[...].astype(jnp.float32)          # (TB, Lp, C) residual state
    TB, Lp, C = x.shape
    dh = C // n_head
    scale = 1.0 / (dh ** 0.5)

    xw = x.reshape(TB * Lp, C)                  # flat slab for the big matmuls

    # ---- attention branch: attn(ln_1(x)) ----
    xn = _layernorm_f32(xw, ln1w_ref[0], ln1b_ref[0])
    qkv = jnp.dot(xn.astype(MXU_DTYPE), wqkv_ref[0],
                  preferred_element_type=jnp.float32) + bqkv_ref[0]
    q = (qkv[:, 0:C] * scale).reshape(TB, Lp, C).astype(MXU_DTYPE)
    k = qkv[:, C:2 * C].reshape(TB, Lp, C).astype(MXU_DTYPE)
    v = qkv[:, 2 * C:3 * C].reshape(TB, Lp, C).astype(MXU_DTYPE)

    # Causal additive mask built in-kernel (no HBM mask input / VMEM buffer).
    row = jax.lax.broadcasted_iota(jnp.int32, (Lp, Lp), 0)
    col = jax.lax.broadcasted_iota(jnp.int32, (Lp, Lp), 1)
    bias = jnp.where(col > row, jnp.float32(NEG_BIG), jnp.float32(0.0))

    head_outs = []
    for h in range(n_head):                     # static unroll; each iter TB-batched
        qh = q[:, :, h * dh:(h + 1) * dh]
        kh = k[:, :, h * dh:(h + 1) * dh]
        vh = v[:, :, h * dh:(h + 1) * dh]
        s = jnp.einsum('bqd,bkd->bqk', qh, kh,
                       preferred_element_type=jnp.float32)   # (TB, Lp, Lp) f32
        s = s + bias[None]
        m = jnp.max(s, axis=-1, keepdims=True)
        e = jnp.exp(s - m)
        denom = jnp.sum(e, axis=-1, keepdims=True)
        p = e * pl.reciprocal(denom, approx=True)            # EUP reciprocal
        oh = jnp.einsum('bqk,bkd->bqd', p.astype(MXU_DTYPE), vh,
                        preferred_element_type=jnp.float32)  # (TB, Lp, dh)
        head_outs.append(oh.reshape(TB * Lp, dh))
    attn = head_outs[0] if n_head == 1 else jnp.concatenate(head_outs, axis=-1)
    attn = jnp.dot(attn.astype(MXU_DTYPE), wout_ref[0],
                   preferred_element_type=jnp.float32) + bout_ref[0]

    x1 = xw + attn

    # ---- MLP branch: mlp(ln_2(x)) ----
    xn2 = _layernorm_f32(x1, ln2w_ref[0], ln2b_ref[0])
    hid = jnp.dot(xn2.astype(MXU_DTYPE), wfc_ref[0],
                  preferred_element_type=jnp.float32) + bfc_ref[0]
    hid = _quick_gelu(hid)
    mlp = jnp.dot(hid.astype(MXU_DTYPE), wpr_ref[0],
                  preferred_element_type=jnp.float32) + bpr_ref[0]

    o_ref[...] = (x1 + mlp).reshape(TB, Lp, C).astype(o_ref.dtype)


def transformer(x, stacked, n_head, tb):
    """x: (BKp, Lp, C) f32, BKp divisible by tb, Lp multiple of 8.
    stacked: dict of per-layer weights stacked along a leading layer dim."""
    BKp, Lp, C = x.shape
    n_layers = stacked["wqkv"].shape[0]
    grid = (BKp // tb, n_layers)

    def wspec(shape):
        # One layer's weight slab per grid step; prefetched while the previous
        # layer computes (standard BlockSpec double-buffering).
        return pl.BlockSpec((1,) + shape,
                            lambda b, l, _s=shape: (l,) + (0,) * len(_s))

    in_specs = [
        pl.BlockSpec((tb, Lp, C), lambda b, l: (b, 0, 0)),   # activation tile
        wspec((1, C)), wspec((1, C)),                        # ln1 w, b
        wspec((C, 3 * C)), wspec((1, 3 * C)),                # in_proj W^T (bf16), b
        wspec((C, C)), wspec((1, C)),                        # out_proj W^T (bf16), b
        wspec((1, C)), wspec((1, C)),                        # ln2 w, b
        wspec((C, 4 * C)), wspec((1, 4 * C)),                # c_fc W^T (bf16), b
        wspec((4 * C, C)), wspec((1, C)),                    # c_proj W^T (bf16), b
    ]
    return pl.pallas_call(
        functools.partial(transformer_kernel, n_head=n_head),
        out_shape=jax.ShapeDtypeStruct((BKp, Lp, C), x.dtype),
        grid=grid,
        in_specs=in_specs,
        out_specs=pl.BlockSpec((tb, Lp, C), lambda b, l: (b, 0, 0)),
        compiler_params=pltpu.CompilerParams(
            dimension_semantics=("parallel", "arbitrary"),
            vmem_limit_bytes=64 * 1024 * 1024),
    )(x,
      stacked["ln1w"], stacked["ln1b"], stacked["wqkv"], stacked["bqkv"],
      stacked["wout"], stacked["bout"], stacked["ln2w"], stacked["ln2b"],
      stacked["wfc"], stacked["bfc"], stacked["wpr"], stacked["bpr"])


# ------------------- final LayerNorm + text_projection kernel ---------------

def head_kernel(x_ref, lnw_ref, lnb_ref, proj_ref, o_ref):
    xn = _layernorm_f32(x_ref[...], lnw_ref[...], lnb_ref[...])
    o_ref[...] = jnp.dot(xn.astype(MXU_DTYPE), proj_ref[...],
                         preferred_element_type=jnp.float32).astype(o_ref.dtype)


def final_head(x_eos, lnw, lnb, proj):
    BK, C = x_eos.shape
    E = proj.shape[1]
    rows = pl.cdiv(BK, 8) * 8          # sublane-align the row dim
    tb = min(rows, 256)                # row tile
    rows = pl.cdiv(rows, tb) * tb
    xp = jnp.pad(x_eos, ((0, rows - BK), (0, 0)))
    out = pl.pallas_call(
        head_kernel,
        out_shape=jax.ShapeDtypeStruct((rows, E), x_eos.dtype),
        grid=(rows // tb,),
        in_specs=[pl.BlockSpec((tb, C), lambda i: (i, 0)),
                  pl.BlockSpec((1, C), lambda i: (0, 0)),
                  pl.BlockSpec((1, C), lambda i: (0, 0)),
                  pl.BlockSpec((C, E), lambda i: (0, 0))],
        out_specs=pl.BlockSpec((tb, E), lambda i: (i, 0)),
        compiler_params=pltpu.CompilerParams(
            dimension_semantics=("parallel",)),
    )(xp, lnw, lnb, proj)
    return out[:BK]


# ------------------------------ TextEncoder glue -----------------------------

def _pick_batch_tile(bk, lp, target_rows=512):
    """Batch-tile so TB*Lp ~ target matmul M, keeping >=2 grid steps (megacore)."""
    tb = max(1, min(bk, max(1, target_rows // max(lp, 1))))
    if bk >= 2:
        tb = min(tb, -(-bk // 2))
    return tb


def text_encoder_forward(params, text, context, prompt_gen=None):
    """text: (K, N1) int32 token ids; context: (B, N2, C) float32."""
    x_text = params["token_embedding"][text]                  # (K, N1, C)
    K, N1, C = x_text.shape
    B, N2, _ = context.shape
    L = N1 + N2
    assert C % params["n_head"] == 0

    x_text_b = jnp.broadcast_to(x_text[None], (B, K, N1, C))
    context_b = jnp.broadcast_to(context[:, None], (B, K, N2, C))
    x = jnp.concatenate([x_text_b[:, :, 0:1], context_b, x_text_b[:, :, 1:]], axis=2)
    x = x.reshape(B * K, L, C)

    # TODO(synk): prompt_gen branch of the reference reshapes inconsistently
    # (only valid for B==1); only the prompt_gen=None path is implemented.

    x = x + params["positional_embedding"][None, :L]           # (BK, L, C)

    # Pad L to a sublane multiple and BK to a multiple of the batch tile.
    BK = B * K
    Lp = pl.cdiv(L, 8) * 8
    tb = _pick_batch_tile(BK, Lp)
    BKp = pl.cdiv(BK, tb) * tb
    x = jnp.pad(x, ((0, BKp - BK), (0, Lp - L), (0, 0)))

    # Single fused-stack kernel: activation tile stays VMEM-resident across
    # all layers; per-layer weights are pipelined along the inner grid axis.
    x = transformer(x, params["stacked"], params["n_head"], tb)

    x = x[:BK, :L]
    # Reference CLIP assumption: EOT token has the largest id.
    eos_idx = jnp.argmax(text, axis=-1) + N2                    # (K,)
    eos_idx = jnp.broadcast_to(eos_idx[None], (B, K)).reshape(-1)
    x_eos = x[jnp.arange(BK), eos_idx]                          # (BK, C) gather in JAX

    out = final_head(x_eos, params["ln_final_w"], params["ln_final_b"],
                     params["text_projection"])                 # (BK, E)
    return out.reshape(B, K, -1)


# ------------------------------- param init ----------------------------------

def init_params(key, *, vocab, width, layers, heads, context_len, embed_dim):
    C = width
    keys = jax.random.split(key, 4 + layers)
    params = {
        "token_embedding": 0.02 * jax.random.normal(keys[0], (vocab, C), jnp.float32),
        "positional_embedding": 0.01 * jax.random.normal(keys[1], (context_len, C), jnp.float32),
        "ln_final_w": jnp.ones((1, C), jnp.float32),
        "ln_final_b": jnp.zeros((1, C), jnp.float32),
        "text_projection": ((C ** -0.5)
                            * jax.random.normal(keys[2], (C, embed_dim), jnp.float32)
                            ).astype(MXU_DTYPE),
        "n_head": heads,
    }
    std = C ** -0.5
    acc = {k: [] for k in ["ln1w", "ln1b", "wqkv", "bqkv", "wout", "bout",
                           "ln2w", "ln2b", "wfc", "bfc", "wpr", "bpr"]}
    for li in range(layers):
        lk = jax.random.split(keys[4 + li], 8)
        acc["ln1w"].append(jnp.ones((1, C), jnp.float32))
        acc["ln1b"].append(jnp.zeros((1, C), jnp.float32))
        acc["wqkv"].append((std * jax.random.normal(lk[0], (C, 3 * C), jnp.float32)
                            ).astype(MXU_DTYPE))
        acc["bqkv"].append(0.01 * jax.random.normal(lk[1], (1, 3 * C), jnp.float32))
        acc["wout"].append((std * jax.random.normal(lk[2], (C, C), jnp.float32)
                            ).astype(MXU_DTYPE))
        acc["bout"].append(0.01 * jax.random.normal(lk[3], (1, C), jnp.float32))
        acc["ln2w"].append(jnp.ones((1, C), jnp.float32))
        acc["ln2b"].append(jnp.zeros((1, C), jnp.float32))
        acc["wfc"].append((std * jax.random.normal(lk[4], (C, 4 * C), jnp.float32)
                           ).astype(MXU_DTYPE))
        acc["bfc"].append(0.01 * jax.random.normal(lk[5], (1, 4 * C), jnp.float32))
        acc["wpr"].append(((2 * C) ** -0.5
                           * jax.random.normal(lk[6], (4 * C, C), jnp.float32)
                           ).astype(MXU_DTYPE))
        acc["bpr"].append(0.01 * jax.random.normal(lk[7], (1, C), jnp.float32))
    params["stacked"] = {k: jnp.stack(v) for k, v in acc.items()}
    return params


# ---------------------------------- main --------------------------------------

if __name__ == "__main__":
    key = jax.random.PRNGKey(0)
    B, K, N1, N2 = 2, 3, 8, 4          # context batch, #prompts, text len, context len
    width = 128                         # lane-dense C; transformer_heads = width // 64 = 2
    heads = width // 64
    embed_dim = 64
    n_layers = 2
    vocab = 50
    context_len = N1 + N2               # positional_embedding length

    k_param, k_text, k_ctx = jax.random.split(key, 3)
    params = init_params(k_param, vocab=vocab, width=width, layers=n_layers,
                         heads=heads, context_len=context_len, embed_dim=embed_dim)

    text = jax.random.randint(k_text, (K, N1), 0, vocab, dtype=jnp.int32)
    context = 0.02 * jax.random.normal(k_ctx, (B, N2, width), jnp.float32)

    out = text_encoder_forward(params, text, context, prompt_gen=None)
    out = jax.block_until_ready(out)

    assert out.shape == (B, K, embed_dim), out.shape
    assert bool(jnp.all(jnp.isfinite(out)))
    print("KERNEL_OK")
</pallas_src>

<mosaic_0001>
module attributes {stable_mosaic.version = 11 : i64} {
  func.func @transformer_kernel(%arg0: i32, %arg1: i32, %arg2: memref<3x16x128xf32, #tpu.memory_space<vmem>>, %arg3: memref<1x1x128xf32, #tpu.memory_space<vmem>>, %arg4: memref<1x1x128xf32, #tpu.memory_space<vmem>>, %arg5: memref<1x128x384xbf16, #tpu.memory_space<vmem>>, %arg6: memref<1x1x384xf32, #tpu.memory_space<vmem>>, %arg7: memref<1x128x128xbf16, #tpu.memory_space<vmem>>, %arg8: memref<1x1x128xf32, #tpu.memory_space<vmem>>, %arg9: memref<1x1x128xf32, #tpu.memory_space<vmem>>, %arg10: memref<1x1x128xf32, #tpu.memory_space<vmem>>, %arg11: memref<1x128x512xbf16, #tpu.memory_space<vmem>>, %arg12: memref<1x1x512xf32, #tpu.memory_space<vmem>>, %arg13: memref<1x512x128xbf16, #tpu.memory_space<vmem>>, %arg14: memref<1x1x128xf32, #tpu.memory_space<vmem>>, %arg15: memref<3x16x128xf32, #tpu.memory_space<vmem>>) attributes {dimension_semantics = [#tpu.dimension_semantics<parallel>, #tpu.dimension_semantics<arbitrary>], iteration_bounds = array<i64: 2, 2>, scalar_prefetch = 0 : i64, scratch_operands = 0 : i64, tpu.core_type = #tpu.core_type<tc>, window_params = [{transform_indices = @transform_0, window_bounds = array<i64: 3, 16, 128>}, {transform_indices = @transform_1, window_bounds = array<i64: 1, 1, 128>}, {transform_indices = @transform_2, window_bounds = array<i64: 1, 1, 128>}, {transform_indices = @transform_3, window_bounds = array<i64: 1, 128, 384>}, {transform_indices = @transform_4, window_bounds = array<i64: 1, 1, 384>}, {transform_indices = @transform_5, window_bounds = array<i64: 1, 128, 128>}, {transform_indices = @transform_6, window_bounds = array<i64: 1, 1, 128>}, {transform_indices = @transform_7, window_bounds = array<i64: 1, 1, 128>}, {transform_indices = @transform_8, window_bounds = array<i64: 1, 1, 128>}, {transform_indices = @transform_9, window_bounds = array<i64: 1, 128, 512>}, {transform_indices = @transform_10, window_bounds = array<i64: 1, 1, 512>}, {transform_indices = @transform_11, window_bounds = array<i64: 1, 512, 128>}, {transform_indices = @transform_12, window_bounds = array<i64: 1, 1, 128>}, {transform_indices = @transform_13, window_bounds = array<i64: 3, 16, 128>}]} {
    %c0_i32 = arith.constant 0 : i32
    %0 = arith.cmpi eq, %arg1, %c0_i32 : i32
    %1 = arith.extui %0 : i1 to i32
    %c0_i32_0 = arith.constant 0 : i32
    %2 = arith.cmpi ne, %1, %c0_i32_0 : i32
    scf.if %2 {
      %c0_68 = arith.constant 0 : index
      %c0_69 = arith.constant 0 : index
      %c0_70 = arith.constant 0 : index
      %159 = vector.load %arg2[%c0_68, %c0_69, %c0_70] : memref<3x16x128xf32, #tpu.memory_space<vmem>>, vector<3x16x128xf32>
      %c0_71 = arith.constant 0 : index
      %c0_72 = arith.constant 0 : index
      %c0_73 = arith.constant 0 : index
      %160 = vector.load %arg15[%c0_71, %c0_72, %c0_73] : memref<3x16x128xf32, #tpu.memory_space<vmem>>, vector<3x16x128xf32>
      tpu.vector_store %arg15[%c0_71, %c0_72, %c0_73], %159 {strides = array<i32>} : memref<3x16x128xf32, #tpu.memory_space<vmem>>, vector<3x16x128xf32>,
    } else {
    }
    %c0 = arith.constant 0 : index
    %c0_1 = arith.constant 0 : index
    %c0_2 = arith.constant 0 : index
    %3 = vector.load %arg15[%c0, %c0_1, %c0_2] : memref<3x16x128xf32, #tpu.memory_space<vmem>>, vector<3x16x128xf32>
    %4 = vector.shape_cast %3 : vector<3x16x128xf32> to vector<48x128xf32>
    %c0_3 = arith.constant 0 : index
    %c0_4 = arith.constant 0 : index
    %c0_5 = arith.constant 0 : index
    %5 = vector.load %arg3[%c0_3, %c0_4, %c0_5] : memref<1x1x128xf32, #tpu.memory_space<vmem>>, vector<1x1x128xf32>
    %6 = vector.shape_cast %5 : vector<1x1x128xf32> to vector<1x128xf32>
    %c0_6 = arith.constant 0 : index
    %c0_7 = arith.constant 0 : index
    %c0_8 = arith.constant 0 : index
    %7 = vector.load %arg4[%c0_6, %c0_7, %c0_8] : memref<1x1x128xf32, #tpu.memory_space<vmem>>, vector<1x1x128xf32>
    %8 = vector.shape_cast %7 : vector<1x1x128xf32> to vector<1x128xf32>
    %cst = arith.constant dense<0.000000e+00> : vector<48xf32>
    %9 = vector.multi_reduction <add>, %4, %cst [1] : vector<48x128xf32> to vector<48xf32>
    %10 = vector.shape_cast %9 : vector<48xf32> to vector<48x1xf32>
    %cst_9 = arith.constant 1.280000e+02 : f32
    %11 = vector.broadcast %cst_9 : f32 to vector<48x1xf32>
    %12 = arith.divf %10, %11 : vector<48x1xf32>
    %13 = vector.broadcast %12 : vector<48x1xf32> to vector<48x128xf32>
    %14 = arith.subf %4, %13 : vector<48x128xf32>
    %15 = arith.mulf %14, %14 : vector<48x128xf32>
    %cst_10 = arith.constant dense<0.000000e+00> : vector<48xf32>
    %16 = vector.multi_reduction <add>, %15, %cst_10 [1] : vector<48x128xf32> to vector<48xf32>
    %17 = vector.shape_cast %16 : vector<48xf32> to vector<48x1xf32>
    %cst_11 = arith.constant 1.280000e+02 : f32
    %18 = vector.broadcast %cst_11 : f32 to vector<48x1xf32>
    %19 = arith.divf %17, %18 : vector<48x1xf32>
    %20 = vector.broadcast %12 : vector<48x1xf32> to vector<48x128xf32>
    %21 = arith.subf %4, %20 : vector<48x128xf32>
    %cst_12 = arith.constant 9.99999974E-6 : f32
    %22 = vector.broadcast %cst_12 : f32 to vector<48x1xf32>
    %23 = arith.addf %19, %22 : vector<48x1xf32>
    %24 = math.rsqrt %23 : vector<48x1xf32>
    %25 = vector.broadcast %24 : vector<48x1xf32> to vector<48x128xf32>
    %26 = arith.mulf %21, %25 : vector<48x128xf32>
    %27 = vector.broadcast %6 : vector<1x128xf32> to vector<48x128xf32>
    %28 = arith.mulf %26, %27 : vector<48x128xf32>
    %29 = vector.broadcast %8 : vector<1x128xf32> to vector<48x128xf32>
    %30 = arith.addf %28, %29 : vector<48x128xf32>
    %31 = arith.truncf %30 : vector<48x128xf32> to vector<48x128xbf16>
    %c0_13 = arith.constant 0 : index
    %c0_14 = arith.constant 0 : index
    %c0_15 = arith.constant 0 : index
    %32 = vector.load %arg5[%c0_13, %c0_14, %c0_15] : memref<1x128x384xbf16, #tpu.memory_space<vmem>>, vector<1x128x384xbf16>
    %33 = vector.shape_cast %32 : vector<1x128x384xbf16> to vector<128x384xbf16>
    %cst_16 = arith.constant dense<0.000000e+00> : vector<48x384xf32>
    %34 = tpu.matmul %31, %33, %cst_16 {dimension_numbers = #tpu.dot_dimension_numbers<[1], [0], [0], [1], [0, 0, 1, 1], [], []>} : vector<48x128xbf16>, vector<128x384xbf16>, vector<48x384xf32> -> vector<48x384xf32>
    %c0_17 = arith.constant 0 : index
    %c0_18 = arith.constant 0 : index
    %c0_19 = arith.constant 0 : index
    %35 = vector.load %arg6[%c0_17, %c0_18, %c0_19] : memref<1x1x384xf32, #tpu.memory_space<vmem>>, vector<1x1x384xf32>
    %36 = vector.shape_cast %35 : vector<1x1x384xf32> to vector<1x384xf32>
    %37 = vector.broadcast %36 : vector<1x384xf32> to vector<48x384xf32>
    %38 = arith.addf %34, %37 : vector<48x384xf32>
    %39 = vector.extract_strided_slice %38 {offsets = [0, 0], sizes = [48, 128], strides = [1, 1]} : vector<48x384xf32> to vector<48x128xf32>
    %cst_20 = arith.constant 1.250000e-01 : f32
    %40 = vector.broadcast %cst_20 : f32 to vector<48x128xf32>
    %41 = arith.mulf %39, %40 : vector<48x128xf32>
    %42 = vector.shape_cast %41 : vector<48x128xf32> to vector<3x16x128xf32>
    %43 = arith.truncf %42 : vector<3x16x128xf32> to vector<3x16x128xbf16>
    %44 = vector.extract_strided_slice %38 {offsets = [0, 128], sizes = [48, 128], strides = [1, 1]} : vector<48x384xf32> to vector<48x128xf32>
    %45 = vector.shape_cast %44 : vector<48x128xf32> to vector<3x16x128xf32>
    %46 = arith.truncf %45 : vector<3x16x128xf32> to vector<3x16x128xbf16>
    %47 = vector.extract_strided_slice %38 {offsets = [0, 256], sizes = [48, 128], strides = [1, 1]} : vector<48x384xf32> to vector<48x128xf32>
    %48 = vector.shape_cast %47 : vector<48x128xf32> to vector<3x16x128xf32>
    %49 = arith.truncf %48 : vector<3x16x128xf32> to vector<3x16x128xbf16>
    %50 = tpu.iota {dimensions = array<i32: 0>} : vector<16x16xi32>
    %51 = tpu.iota {dimensions = array<i32: 1>} : vector<16x16xi32>
    %52 = arith.cmpi sgt, %51, %50 : vector<16x16xi32>
    %cst_21 = arith.constant -1.000000e+30 : f32
    %cst_22 = arith.constant 0.000000e+00 : f32
    %53 = vector.broadcast %cst_21 : f32 to vector<16x16xf32>
    %54 = vector.broadcast %cst_22 : f32 to vector<16x16xf32>
    %55 = arith.select %52, %53, %54 : vector<16x16xi1>, vector<16x16xf32>
    %56 = vector.extract_strided_slice %43 {offsets = [0, 0, 0], sizes = [3, 16, 64], strides = [1, 1, 1]} : vector<3x16x128xbf16> to vector<3x16x64xbf16>
    %57 = vector.extract_strided_slice %46 {offsets = [0, 0, 0], sizes = [3, 16, 64], strides = [1, 1, 1]} : vector<3x16x128xbf16> to vector<3x16x64xbf16>
    %58 = vector.extract_strided_slice %49 {offsets = [0, 0, 0], sizes = [3, 16, 64], strides = [1, 1, 1]} : vector<3x16x128xbf16> to vector<3x16x64xbf16>
    "tpu.trace_start"() <{level = 10 : i32, message = "bqd,bkd->bqk"}> : () -> ()
    %cst_23 = arith.constant dense<0.000000e+00> : vector<3x16x16xf32>
    %59 = tpu.matmul %56, %57, %cst_23 {dimension_numbers = #tpu.dot_dimension_numbers<[2], [2], [1], [1], [0, 0, 0, 1, 1, 1], [0], [0]>} : vector<3x16x64xbf16>, vector<3x16x64xbf16>, vector<3x16x16xf32> -> vector<3x16x16xf32>
    "tpu.trace_stop"() : () -> ()
    %60 = vector.shape_cast %55 : vector<16x16xf32> to vector<1x16x16xf32>
    %61 = vector.broadcast %60 : vector<1x16x16xf32> to vector<3x16x16xf32>
    %62 = arith.addf %59, %61 : vector<3x16x16xf32>
    %cst_24 = arith.constant dense<0xFF800000> : vector<3x16xf32>
    %63 = vector.multi_reduction <maximumf>, %62, %cst_24 [2] : vector<3x16x16xf32> to vector<3x16xf32>
    %64 = vector.shape_cast %63 : vector<3x16xf32> to vector<3x16x1xf32>
    %65 = vector.broadcast %64 : vector<3x16x1xf32> to vector<3x16x16xf32>
    %66 = arith.subf %62, %65 : vector<3x16x16xf32>
    %67 = math.exp %66 : vector<3x16x16xf32>
    %cst_25 = arith.constant dense<0.000000e+00> : vector<3x16xf32>
    %68 = vector.multi_reduction <add>, %67, %cst_25 [2] : vector<3x16x16xf32> to vector<3x16xf32>
    %69 = vector.shape_cast %68 : vector<3x16xf32> to vector<3x16x1xf32>
    %70 = tpu.reciprocal %69 {approx = true} : vector<3x16x1xf32> -> vector<3x16x1xf32>
    %71 = vector.broadcast %70 : vector<3x16x1xf32> to vector<3x16x16xf32>
    %72 = arith.mulf %67, %71 : vector<3x16x16xf32>
    %73 = arith.truncf %72 : vector<3x16x16xf32> to vector<3x16x16xbf16>
    "tpu.trace_start"() <{level = 10 : i32, message = "bqk,bkd->bqd"}> : () -> ()
    %cst_26 = arith.constant dense<0.000000e+00> : vector<3x16x64xf32>
    %74 = tpu.matmul %73, %58, %cst_26 {dimension_numbers = #tpu.dot_dimension_numbers<[2], [1], [1], [2], [0, 0, 0, 1, 1, 2], [0], [0]>} : vector<3x16x16xbf16>, vector<3x16x64xbf16>, vector<3x16x64xf32> -> vector<3x16x64xf32>
    "tpu.trace_stop"() : () -> ()
    %75 = vector.shape_cast %74 : vector<3x16x64xf32> to vector<48x64xf32>
    %76 = vector.extract_strided_slice %43 {offsets = [0, 0, 64], sizes = [3, 16, 64], strides = [1, 1, 1]} : vector<3x16x128xbf16> to vector<3x16x64xbf16>
    %77 = vector.extract_strided_slice %46 {offsets = [0, 0, 64], sizes = [3, 16, 64], strides = [1, 1, 1]} : vector<3x16x128xbf16> to vector<3x16x64xbf16>
    %78 = vector.extract_strided_slice %49 {offsets = [0, 0, 64], sizes = [3, 16, 64], strides = [1, 1, 1]} : vector<3x16x128xbf16> to vector<3x16x64xbf16>
    "tpu.trace_start"() <{level = 10 : i32, message = "bqd,bkd->bqk"}> : () -> ()
    %cst_27 = arith.constant dense<0.000000e+00> : vector<3x16x16xf32>
    %79 = tpu.matmul %76, %77, %cst_27 {dimension_numbers = #tpu.dot_dimension_numbers<[2], [2], [1], [1], [0, 0, 0, 1, 1, 1], [0], [0]>} : vector<3x16x64xbf16>, vector<3x16x64xbf16>, vector<3x16x16xf32> -> vector<3x16x16xf32>
    "tpu.trace_stop"() : () -> ()
    %80 = vector.shape_cast %55 : vector<16x16xf32> to vector<1x16x16xf32>
    %81 = vector.broadcast %80 : vector<1x16x16xf32> to vector<3x16x16xf32>
    %82 = arith.addf %79, %81 : vector<3x16x16xf32>
    %cst_28 = arith.constant dense<0xFF800000> : vector<3x16xf32>
    %83 = vector.multi_reduction <maximumf>, %82, %cst_28 [2] : vector<3x16x16xf32> to vector<3x16xf32>
    %84 = vector.shape_cast %83 : vector<3x16xf32> to vector<3x16x1xf32>
    %85 = vector.broadcast %84 : vector<3x16x1xf32> to vector<3x16x16xf32>
    %86 = arith.subf %82, %85 : vector<3x16x16xf32>
    %87 = math.exp %86 : vector<3x16x16xf32>
    %cst_29 = arith.constant dense<0.000000e+00> : vector<3x16xf32>
    %88 = vector.multi_reduction <add>, %87, %cst_29 [2] : vector<3x16x16xf32> to vector<3x16xf32>
    %89 = vector.shape_cast %88 : vector<3x16xf32> to vector<3x16x1xf32>
    %90 = tpu.reciprocal %89 {approx = true} : vector<3x16x1xf32> -> vector<3x16x1xf32>
    %91 = vector.broadcast %90 : vector<3x16x1xf32> to vector<3x16x16xf32>
    %92 = arith.mulf %87, %91 : vector<3x16x16xf32>
    %93 = arith.truncf %92 : vector<3x16x16xf32> to vector<3x16x16xbf16>
    "tpu.trace_start"() <{level = 10 : i32, message = "bqk,bkd->bqd"}> : () -> ()
    %cst_30 = arith.constant dense<0.000000e+00> : vector<3x16x64xf32>
    %94 = tpu.matmul %93, %78, %cst_30 {dimension_numbers = #tpu.dot_dimension_numbers<[2], [1], [1], [2], [0, 0, 0, 1, 1, 2], [0], [0]>} : vector<3x16x16xbf16>, vector<3x16x64xbf16>, vector<3x16x64xf32> -> vector<3x16x64xf32>
    "tpu.trace_stop"() : () -> ()
    %95 = vector.shape_cast %94 : vector<3x16x64xf32> to vector<48x64xf32>
    %96 = tpu.concatenate %75, %95 in 1 : vector<48x64xf32>, vector<48x64xf32> -> vector<48x128xf32>
    %97 = arith.truncf %96 : vector<48x128xf32> to vector<48x128xbf16>
    %c0_31 = arith.constant 0 : index
    %c0_32 = arith.constant 0 : index
    %c0_33 = arith.constant 0 : index
    %98 = vector.load %arg7[%c0_31, %c0_32, %c0_33] : memref<1x128x128xbf16, #tpu.memory_space<vmem>>, vector<1x128x128xbf16>
    %99 = vector.shape_cast %98 : vector<1x128x128xbf16> to vector<128x128xbf16>
    %cst_34 = arith.constant dense<0.000000e+00> : vector<48x128xf32>
    %100 = tpu.matmul %97, %99, %cst_34 {dimension_numbers = #tpu.dot_dimension_numbers<[1], [0], [0], [1], [0, 0, 1, 1], [], []>} : vector<48x128xbf16>, vector<128x128xbf16>, vector<48x128xf32> -> vector<48x128xf32>
    %c0_35 = arith.constant 0 : index
    %c0_36 = arith.constant 0 : index
    %c0_37 = arith.constant 0 : index
    %101 = vector.load %arg8[%c0_35, %c0_36, %c0_37] : memref<1x1x128xf32, #tpu.memory_space<vmem>>, vector<1x1x128xf32>
    %102 = vector.shape_cast %101 : vector<1x1x128xf32> to vector<1x128xf32>
    %103 = vector.broadcast %102 : vector<1x128xf32> to vector<48x128xf32>
    %104 = arith.addf %100, %103 : vector<48x128xf32>
    %105 = arith.addf %4, %104 : vector<48x128xf32>
    %c0_38 = arith.constant 0 : index
    %c0_39 = arith.constant 0 : index
    %c0_40 = arith.constant 0 : index
    %106 = vector.load %arg9[%c0_38, %c0_39, %c0_40] : memref<1x1x128xf32, #tpu.memory_space<vmem>>, vector<1x1x128xf32>
    %107 = vector.shape_cast %106 : vector<1x1x128xf32> to vector<1x128xf32>
    %c0_41 = arith.constant 0 : index
    %c0_42 = arith.constant 0 : index
    %c0_43 = arith.constant 0 : index
    %108 = vector.load %arg10[%c0_41, %c0_42, %c0_43] : memref<1x1x128xf32, #tpu.memory_space<vmem>>, vector<1x1x128xf32>
    %109 = vector.shape_cast %108 : vector<1x1x128xf32> to vector<1x128xf32>
    %cst_44 = arith.constant dense<0.000000e+00> : vector<48xf32>
    %110 = vector.multi_reduction <add>, %105, %cst_44 [1] : vector<48x128xf32> to vector<48xf32>
    %111 = vector.shape_cast %110 : vector<48xf32> to vector<48x1xf32>
    %cst_45 = arith.constant 1.280000e+02 : f32
    %112 = vector.broadcast %cst_45 : f32 to vector<48x1xf32>
    %113 = arith.divf %111, %112 : vector<48x1xf32>
    %114 = vector.broadcast %113 : vector<48x1xf32> to vector<48x128xf32>
    %115 = arith.subf %105, %114 : vector<48x128xf32>
    %116 = arith.mulf %115, %115 : vector<48x128xf32>
    %cst_46 = arith.constant dense<0.000000e+00> : vector<48xf32>
    %117 = vector.multi_reduction <add>, %116, %cst_46 [1] : vector<48x128xf32> to vector<48xf32>
    %118 = vector.shape_cast %117 : vector<48xf32> to vector<48x1xf32>
    %cst_47 = arith.constant 1.280000e+02 : f32
    %119 = vector.broadcast %cst_47 : f32 to vector<48x1xf32>
    %120 = arith.divf %118, %119 : vector<48x1xf32>
    %121 = vector.broadcast %113 : vector<48x1xf32> to vector<48x128xf32>
    %122 = arith.subf %105, %121 : vector<48x128xf32>
    %cst_48 = arith.constant 9.99999974E-6 : f32
    %123 = vector.broadcast %cst_48 : f32 to vector<48x1xf32>
    %124 = arith.addf %120, %123 : vector<48x1xf32>
    %125 = math.rsqrt %124 : vector<48x1xf32>
    %126 = vector.broadcast %125 : vector<48x1xf32> to vector<48x128xf32>
    %127 = arith.mulf %122, %126 : vector<48x128xf32>
    %128 = vector.broadcast %107 : vector<1x128xf32> to vector<48x128xf32>
    %129 = arith.mulf %127, %128 : vector<48x128xf32>
    %130 = vector.broadcast %109 : vector<1x128xf32> to vector<48x128xf32>
    %131 = arith.addf %129, %130 : vector<48x128xf32>
    %132 = arith.truncf %131 : vector<48x128xf32> to vector<48x128xbf16>
    %c0_49 = arith.constant 0 : index
    %c0_50 = arith.constant 0 : index
    %c0_51 = arith.constant 0 : index
    %133 = vector.load %arg11[%c0_49, %c0_50, %c0_51] : memref<1x128x512xbf16, #tpu.memory_space<vmem>>, vector<1x128x512xbf16>
    %134 = vector.shape_cast %133 : vector<1x128x512xbf16> to vector<128x512xbf16>
    %cst_52 = arith.constant dense<0.000000e+00> : vector<48x512xf32>
    %135 = tpu.matmul %132, %134, %cst_52 {dimension_numbers = #tpu.dot_dimension_numbers<[1], [0], [0], [1], [0, 0, 1, 1], [], []>} : vector<48x128xbf16>, vector<128x512xbf16>, vector<48x512xf32> -> vector<48x512xf32>
    %c0_53 = arith.constant 0 : index
    %c0_54 = arith.constant 0 : index
    %c0_55 = arith.constant 0 : index
    %136 = vector.load %arg12[%c0_53, %c0_54, %c0_55] : memref<1x1x512xf32, #tpu.memory_space<vmem>>, vector<1x1x512xf32>
    %137 = vector.shape_cast %136 : vector<1x1x512xf32> to vector<1x512xf32>
    %138 = vector.broadcast %137 : vector<1x512xf32> to vector<48x512xf32>
    %139 = arith.addf %135, %138 : vector<48x512xf32>
    %cst_56 = arith.constant 1.702000e+00 : f32
    %140 = vector.broadcast %cst_56 : f32 to vector<48x512xf32>
    %141 = arith.mulf %140, %139 : vector<48x512xf32>
    %142 = arith.negf %141 : vector<48x512xf32>
    %143 = math.exp %142 : vector<48x512xf32>
    %cst_57 = arith.constant 1.000000e+00 : f32
    %144 = vector.broadcast %cst_57 : f32 to vector<48x512xf32>
    %145 = arith.addf %144, %143 : vector<48x512xf32>
    %146 = arith.divf %144, %145 : vector<48x512xf32>
    %147 = arith.mulf %139, %146 : vector<48x512xf32>
    %148 = arith.truncf %147 : vector<48x512xf32> to vector<48x512xbf16>
    %c0_58 = arith.constant 0 : index
    %c0_59 = arith.constant 0 : index
    %c0_60 = arith.constant 0 : index
    %149 = vector.load %arg13[%c0_58, %c0_59, %c0_60] : memref<1x512x128xbf16, #tpu.memory_space<vmem>>, vector<1x512x128xbf16>
    %150 = vector.shape_cast %149 : vector<1x512x128xbf16> to vector<512x128xbf16>
    %cst_61 = arith.constant dense<0.000000e+00> : vector<48x128xf32>
    %151 = tpu.matmul %148, %150, %cst_61 {dimension_numbers = #tpu.dot_dimension_numbers<[1], [0], [0], [1], [0, 0, 1, 1], [], []>} : vector<48x512xbf16>, vector<512x128xbf16>, vector<48x128xf32> -> vector<48x128xf32>
    %c0_62 = arith.constant 0 : index
    %c0_63 = arith.constant 0 : index
    %c0_64 = arith.constant 0 : index
    %152 = vector.load %arg14[%c0_62, %c0_63, %c0_64] : memref<1x1x128xf32, #tpu.memory_space<vmem>>, vector<1x1x128xf32>
    %153 = vector.shape_cast %152 : vector<1x1x128xf32> to vector<1x128xf32>
    %154 = vector.broadcast %153 : vector<1x128xf32> to vector<48x128xf32>
    %155 = arith.addf %151, %154 : vector<48x128xf32>
    %156 = arith.addf %105, %155 : vector<48x128xf32>
    %157 = vector.shape_cast %156 : vector<48x128xf32> to vector<3x16x128xf32>
    %c0_65 = arith.constant 0 : index
    %c0_66 = arith.constant 0 : index
    %c0_67 = arith.constant 0 : index
    %158 = vector.load %arg15[%c0_65, %c0_66, %c0_67] : memref<3x16x128xf32, #tpu.memory_space<vmem>>, vector<3x16x128xf32>
    tpu.vector_store %arg15[%c0_65, %c0_66, %c0_67], %157 {strides = array<i32>} : memref<3x16x128xf32, #tpu.memory_space<vmem>>, vector<3x16x128xf32>,
    return
  }
  func.func @transform_0(%arg0: i32, %arg1: i32) -> (i32, i32, i32) {
    %c0_i32 = arith.constant 0 : i32
    %c0_i32_0 = arith.constant 0 : i32
    %c0_i32_1 = arith.constant 0 : i32
    return %arg0, %c0_i32, %c0_i32_0 : i32, i32, i32
  }
  func.func @transform_1(%arg0: i32, %arg1: i32) -> (i32, i32, i32) {
    %c0_i32 = arith.constant 0 : i32
    %c0_i32_0 = arith.constant 0 : i32
    %c0_i32_1 = arith.constant 0 : i32
    return %arg1, %c0_i32, %c0_i32_0 : i32, i32, i32
  }
  func.func @transform_2(%arg0: i32, %arg1: i32) -> (i32, i32, i32) {
    %c0_i32 = arith.constant 0 : i32
    %c0_i32_0 = arith.constant 0 : i32
    %c0_i32_1 = arith.constant 0 : i32
    return %arg1, %c0_i32, %c0_i32_0 : i32, i32, i32
  }
  func.func @transform_3(%arg0: i32, %arg1: i32) -> (i32, i32, i32) {
    %c0_i32 = arith.constant 0 : i32
    %c0_i32_0 = arith.constant 0 : i32
    %c0_i32_1 = arith.constant 0 : i32
    return %arg1, %c0_i32, %c0_i32_0 : i32, i32, i32
  }
  func.func @transform_4(%arg0: i32, %arg1: i32) -> (i32, i32, i32) {
    %c0_i32 = arith.constant 0 : i32
    %c0_i32_0 = arith.constant 0 : i32
    %c0_i32_1 = arith.constant 0 : i32
    return %arg1, %c0_i32, %c0_i32_0 : i32, i32, i32
  }
  func.func @transform_5(%arg0: i32, %arg1: i32) -> (i32, i32, i32) {
    %c0_i32 = arith.constant 0 : i32
    %c0_i32_0 = arith.constant 0 : i32
    %c0_i32_1 = arith.constant 0 : i32
    return %arg1, %c0_i32, %c0_i32_0 : i32, i32, i32
  }
  func.func @transform_6(%arg0: i32, %arg1: i32) -> (i32, i32, i32) {
    %c0_i32 = arith.constant 0 : i32
    %c0_i32_0 = arith.constant 0 : i32
    %c0_i32_1 = arith.constant 0 : i32
    return %arg1, %c0_i32, %c0_i32_0 : i32, i32, i32
  }
  func.func @transform_7(%arg0: i32, %arg1: i32) -> (i32, i32, i32) {
    %c0_i32 = arith.constant 0 : i32
    %c0_i32_0 = arith.constant 0 : i32
    %c0_i32_1 = arith.constant 0 : i32
    return %arg1, %c0_i32, %c0_i32_0 : i32, i32, i32
  }
  func.func @transform_8(%arg0: i32, %arg1: i32) -> (i32, i32, i32) {
    %c0_i32 = arith.constant 0 : i32
    %c0_i32_0 = arith.constant 0 : i32
    %c0_i32_1 = arith.constant 0 : i32
    return %arg1, %c0_i32, %c0_i32_0 : i32, i32, i32
  }
  func.func @transform_9(%arg0: i32, %arg1: i32) -> (i32, i32, i32) {
    %c0_i32 = arith.constant 0 : i32
    %c0_i32_0 = arith.constant 0 : i32
    %c0_i32_1 = arith.constant 0 : i32
    return %arg1, %c0_i32, %c0_i32_0 : i32, i32, i32
  }
  func.func @transform_10(%arg0: i32, %arg1: i32) -> (i32, i32, i32) {
    %c0_i32 = arith.constant 0 : i32
    %c0_i32_0 = arith.constant 0 : i32
    %c0_i32_1 = arith.constant 0 : i32
    return %arg1, %c0_i32, %c0_i32_0 : i32, i32, i32
  }
  func.func @transform_11(%arg0: i32, %arg1: i32) -> (i32, i32, i32) {
    %c0_i32 = arith.constant 0 : i32
    %c0_i32_0 = arith.constant 0 : i32
    %c0_i32_1 = arith.constant 0 : i32
    return %arg1, %c0_i32, %c0_i32_0 : i32, i32, i32
  }
  func.func @transform_12(%arg0: i32, %arg1: i32) -> (i32, i32, i32) {
    %c0_i32 = arith.constant 0 : i32
    %c0_i32_0 = arith.constant 0 : i32
    %c0_i32_1 = arith.constant 0 : i32
    return %arg1, %c0_i32, %c0_i32_0 : i32, i32, i32
  }
  func.func @transform_13(%arg0: i32, %arg1: i32) -> (i32, i32, i32) {
    %c0_i32 = arith.constant 0 : i32
    %c0_i32_0 = arith.constant 0 : i32
    %c0_i32_1 = arith.constant 0 : i32
    return %arg0, %c0_i32, %c0_i32_0 : i32, i32, i32
  }
}

</mosaic_0001>

<llo_original>
// kernel: tpu_custom_call.1
$region0: #{tpu_custom_call.1}
  #allocation0 [shape = 'u32[]', space=smem, size = 0x4, offset = 0x4, fixed_abs, tag = 'smem constant byte address 0x4 - core index']
  #allocation1 [shape = 'u32[72,128]{1,0:T(1,128)}', space=vmem, size = 0x9000, scoped, tag = 'internal scratch']
  %s0 = inlined_call_operand.hbm [shape: f32[6,16,128], index: 0, kind: input, shape index: {}]
  %s1 = inlined_call_operand.hbm [shape: f32[2,1,128], index: 1, kind: input, shape index: {}]
  %s2 = inlined_call_operand.hbm [shape: f32[2,1,128], index: 2, kind: input, shape index: {}]
  %s3 = inlined_call_operand.hbm [shape: bf16[2,128,384], index: 3, kind: input, shape index: {}]
  %s4 = inlined_call_operand.hbm [shape: f32[2,1,384], index: 4, kind: input, shape index: {}]
  %s5 = inlined_call_operand.hbm [shape: bf16[2,128,128], index: 5, kind: input, shape index: {}]
  %s6 = inlined_call_operand.hbm [shape: f32[2,1,128], index: 6, kind: input, shape index: {}]
  %s7 = inlined_call_operand.hbm [shape: f32[2,1,128], index: 7, kind: input, shape index: {}]
  %s8 = inlined_call_operand.hbm [shape: f32[2,1,128], index: 8, kind: input, shape index: {}]
  %s9 = inlined_call_operand.hbm [shape: bf16[2,128,512], index: 9, kind: input, shape index: {}]
  %s10 = inlined_call_operand.vmem [shape: f32[2,1,512], index: 10, kind: input, shape index: {}]
  %s11 = inlined_call_operand.hbm [shape: bf16[2,512,128], index: 11, kind: input, shape index: {}]
  %s12 = inlined_call_operand.vmem [shape: f32[2,1,128], index: 12, kind: input, shape index: {}]
  %s13 = inlined_call_operand.hbm [shape: f32[6,16,128], index: 13, kind: output, shape index: {}]
  %s14 = sld [smem:[#allocation0]]
  $region133: #{tpu_custom_call.1} parent=0
    _
  %s16 = ssub.s32 1, %s14
  %s17 = scalar_select 0, %s16, %s14
  $region1: #{tpu_custom_call.1} parent=0
    #allocation2 [shape = 'u8[49152]{0}', space=vmem, size = 0xc000, scoped, tag = 'input window, operand 0']
    #allocation3 [shape = 's32[2]{0}', space=sflag, size = 0x8, scoped, tag = 'scoped memory for tpu_custom_call.1']
    #allocation4 [shape = 's32[2]{0}', space=sflag, size = 0x8, scoped, tag = 'scoped memory for tpu_custom_call.1']
    #allocation5 [shape = 'u8[1024]{0}', space=vmem, size = 0x400, scoped, tag = 'input window, operand 1']
    #allocation6 [shape = 's32[2]{0}', space=sflag, size = 0x8, scoped, tag = 'scoped memory for tpu_custom_call.1']
    #allocation7 [shape = 'u8[1024]{0}', space=vmem, size = 0x400, scoped, tag = 'input window, operand 2']
    #allocation8 [shape = 'u8[196608]{0}', space=vmem, size = 0x30000, scoped, tag = 'input window, operand 3']
    #allocation9 [shape = 's32[2]{0}', space=sflag, size = 0x8, scoped, tag = 'scoped memory for tpu_custom_call.1']
    #allocation10 [shape = 'u8[3072]{0}', space=vmem, size = 0xc00, scoped, tag = 'input window, operand 4']
    #allocation11 [shape = 'u8[65536]{0}', space=vmem, size = 0x10000, scoped, tag = 'input window, operand 5']
    #allocation12 [shape = 's32[2]{0}', space=sflag, size = 0x8, scoped, tag = 'scoped memory for tpu_custom_call.1']
    #allocation13 [shape = 'u8[1024]{0}', space=vmem, size = 0x400, scoped, tag = 'input window, operand 6']
    #allocation14 [shape = 'u8[1024]{0}', space=vmem, size = 0x400, scoped, tag = 'input window, operand 7']
    #allocation15 [shape = 's32[2]{0}', space=sflag, size = 0x8, scoped, tag = 'scoped memory for tpu_custom_call.1']
    #allocation16 [shape = 'u8[1024]{0}', space=vmem, size = 0x400, scoped, tag = 'input window, operand 8']
    #allocation17 [shape = 'u8[262144]{0}', space=vmem, size = 0x40000, scoped, tag = 'input window, operand 9']
    #allocation18 [shape = 's32[2]{0}', space=sflag, size = 0x8, scoped, tag = 'scoped memory for tpu_custom_call.1']
    #allocation19 [shape = 'u8[262144]{0}', space=vmem, size = 0x40000, scoped, tag = 'input window, operand 11']
    #allocation20 [shape = 'u8[49152]{0}', space=vmem, size = 0xc000, scoped, tag = 'output window, operand 0']
    %18 = vsyncpa [#allocation3], 0
    %s19 = scalar_lea.sflag [#allocation3], 1
    %20 = vsyncpa %s19, 0
    %21 = vsyncpa [#allocation6], 0
    %s22 = scalar_lea.sflag [#allocation6], 1
    %23 = vsyncpa %s22, 0
    %24 = vsyncpa [#allocation9], 0
    %s25 = scalar_lea.sflag [#allocation9], 1
    %26 = vsyncpa %s25, 0
    %27 = vsyncpa [#allocation12], 0
    %s28 = scalar_lea.sflag [#allocation12], 1
    %29 = vsyncpa %s28, 0
    %30 = vsyncpa [#allocation15], 0
    %s31 = scalar_lea.sflag [#allocation15], 1
    %32 = vsyncpa %s31, 0
    %33 = vsyncpa [#allocation18], 0
    %s34 = scalar_lea.sflag [#allocation18], 1
    %35 = vsyncpa %s34, 0
    %36 = vsyncpa [#allocation4], 0
    %s37 = scalar_lea.sflag [#allocation4], 1
    %38 = vsyncpa %s37, 0
    loop: start=0, step=1, limit=6
    $region2: #{tpu_custom_call.1} parent=1 // loop_pre_header
      _
    $region3: #{tpu_custom_call.1} parent=1 // loop_header
      %s40 = sphi 0, %s44
      %p41 = scmp.ge.s32.totalorder %s40, 6
      %s47 = sphi 0, %s59
      %s48 = sphi 0, %s55
      %s49 = sphi 0, %s47
      %s50 = sphi 0, %s48
      %s51 = sphi 0, %s49
      %s52 = sphi 0, %s50
      %s62 = sphi 0, %s64
      %s65 = sphi 0, %s62
      %s66 = sphi 0, %s65
      %s82 = sphi 0, %s66
      %s88 = sphi 0, %s90
      %s91 = sphi 0, %s88
      %s92 = sphi 0, %s91
      %s108 = sphi 0, %s92
      %s114 = sphi 0, %s116
      %s117 = sphi 0, %s114
      %s118 = sphi 0, %s117
      %s134 = sphi 0, %s118
      %s140 = sphi 0, %s142
      %s143 = sphi 0, %s140
      %s144 = sphi 0, %s143
      %s160 = sphi 0, %s144
      %s166 = sphi 0, %s168
      %s169 = sphi 0, %s166
      %s170 = sphi 0, %s169
      %s186 = sphi 0, %s170
      %s192 = sphi 0, %s194
      %s195 = sphi 0, %s192
      %s196 = sphi 0, %s195
      %s212 = sphi 0, %s196
      %s218 = sphi 0, %s220
      %s221 = sphi 0, %s218
      %s222 = sphi 0, %s221
      %s238 = sphi 0, %s222
      %s244 = sphi 0, %s246
      %s247 = sphi 0, %s244
      %s248 = sphi 0, %s247
      %s264 = sphi 0, %s248
      %s270 = sphi 0, %s272
      %s273 = sphi 0, %s270
      %s274 = sphi 0, %s273
      %s290 = sphi 0, %s274
      %s296 = sphi 0, %s298
      %s299 = sphi 0, %s296
      %s300 = sphi 0, %s299
      %s316 = sphi 0, %s300
      %s322 = sphi 0, %s324
      %s325 = sphi 0, %s322
      %s326 = sphi 0, %s325
      %s342 = sphi 0, %s326
      %s348 = sphi 0, %s350
      %s351 = sphi 0, %s348
      %s352 = sphi 0, %s351
      %s368 = sphi 0, %s352
      %s374 = sphi 0, %s376
      %s377 = sphi 0, %s374
      %s378 = sphi 0, %s377
      %s394 = sphi 0, %s378
      %s400 = sphi 0, %s402
      %s403 = sphi 0, %s400
      %s404 = sphi 0, %s403
      %s420 = sphi 0, %s404
    $region4: #{tpu_custom_call.1} parent=1 // loop_header_branch
      %43 = sbr.rel (%p41) target = $region8
    $region5: #{tpu_custom_call.1} parent=1 // loop_body
      %s45 = ssub.s32 %s40, 1
      %s46 = ssub.s32 %s40, 2
      %s53 = sadd.s32 1, %s48
      %p54 = scmp.ge.s32.totalorder %s53, 2
      %s55 = scalar_select %p54, 0, %s53
      %s56 = sadd.s32 1, %s47
      %s57 = scalar_select %p54, %s56, %s47
      %p58 = scmp.ge.s32.totalorder %s57, 2
      %s59 = scalar_select %p58, 0, %s57
      %s60 = ssub.s32 %s47, %s59
      %p61 = scmp.eq.s32.totalorder %s60, 0
      %s63 = sadd.s32 %s62, 1
      %s64 = scalar_select %p61, %s62, %s63
      %p67 = pneg %p61
      %p68 = scmp.eq.s32.totalorder %s40, 3
      %p69 = por %p67, %p68
      %p70 = scmp.ne.s32.totalorder %s62, %s65
      %p71 = scmp.eq.s32.totalorder %s40, 0
      %p72 = por %p70, %p71
      %p73 = scmp.ne.s32.totalorder %s62, %s65
      %p74 = scmp.eq.s32.totalorder %s45, 3
      %p75 = por %p73, %p74
      %p76 = scmp.ne.s32.totalorder %s65, %s66
      %p77 = scmp.eq.s32.totalorder %s45, 0
      %p78 = por %p76, %p77
      %p79 = scmp.ne.s32.totalorder %s65, %s66
      %p80 = scmp.eq.s32.totalorder %s46, 3
      %p81 = por %p79, %p80
      %p83 = scmp.ne.s32.totalorder %s66, %s82
      %p84 = scmp.eq.s32.totalorder %s46, 0
      %p85 = por %p83, %p84
      %s86 = ssub.s32 %s48, %s55
      %p87 = scmp.eq.s32.totalorder %s86, 0
      %s89 = sadd.s32 %s88, 1
      %s90 = scalar_select %p87, %s88, %s89
      %p93 = pneg %p87
      %p94 = scmp.eq.s32.totalorder %s40, 3
      %p95 = por %p93, %p94
      %p96 = scmp.ne.s32.totalorder %s88, %s91
      %p97 = scmp.eq.s32.totalorder %s40, 0
      %p98 = por %p96, %p97
      %p99 = scmp.ne.s32.totalorder %s88, %s91
      %p100 = scmp.eq.s32.totalorder %s45, 3
      %p101 = por %p99, %p100
      %p102 = scmp.ne.s32.totalorder %s91, %s92
      %p103 = scmp.eq.s32.totalorder %s45, 0
      %p104 = por %p102, %p103
      %p105 = scmp.ne.s32.totalorder %s91, %s92
      %p106 = scmp.eq.s32.totalorder %s46, 3
      %p107 = por %p105, %p106
      %p109 = scmp.ne.s32.totalorder %s92, %s108
      %p110 = scmp.eq.s32.totalorder %s46, 0
      %p111 = por %p109, %p110
      %s112 = ssub.s32 %s48, %s55
      %p113 = scmp.eq.s32.totalorder %s112, 0
      %s115 = sadd.s32 %s114, 1
      %s116 = scalar_select %p113, %s114, %s115
      %p119 = pneg %p113
      %p120 = scmp.eq.s32.totalorder %s40, 3
      %p121 = por %p119, %p120
      %p122 = scmp.ne.s32.totalorder %s114, %s117
      %p123 = scmp.eq.s32.totalorder %s40, 0
      %p124 = por %p122, %p123
      %p125 = scmp.ne.s32.totalorder %s114, %s117
      %p126 = scmp.eq.s32.totalorder %s45, 3
      %p127 = por %p125, %p126
      %p128 = scmp.ne.s32.totalorder %s117, %s118
      %p129 = scmp.eq.s32.totalorder %s45, 0
      %p130 = por %p128, %p129
      %p131 = scmp.ne.s32.totalorder %s117, %s118
      %p132 = scmp.eq.s32.totalorder %s46, 3
      %p133 = por %p131, %p132
      %p135 = scmp.ne.s32.totalorder %s118, %s134
      %p136 = scmp.eq.s32.totalorder %s46, 0
      %p137 = por %p135, %p136
      %s138 = ssub.s32 %s48, %s55
      %p139 = scmp.eq.s32.totalorder %s138, 0
      %s141 = sadd.s32 %s140, 1
      %s142 = scalar_select %p139, %s140, %s141
      %p145 = pneg %p139
      %p146 = scmp.eq.s32.totalorder %s40, 3
      %p147 = por %p145, %p146
      %p148 = scmp.ne.s32.totalorder %s140, %s143
      %p149 = scmp.eq.s32.totalorder %s40, 0
      %p150 = por %p148, %p149
      %p151 = scmp.ne.s32.totalorder %s140, %s143
      %p152 = scmp.eq.s32.totalorder %s45, 3
      %p153 = por %p151, %p152
      %p154 = scmp.ne.s32.totalorder %s143, %s144
      %p155 = scmp.eq.s32.totalorder %s45, 0
      %p156 = por %p154, %p155
      %p157 = scmp.ne.s32.totalorder %s143, %s144
      %p158 = scmp.eq.s32.totalorder %s46, 3
      %p159 = por %p157, %p158
      %p161 = scmp.ne.s32.totalorder %s144, %s160
      %p162 = scmp.eq.s32.totalorder %s46, 0
      %p163 = por %p161, %p162
      %s164 = ssub.s32 %s48, %s55
      %p165 = scmp.eq.s32.totalorder %s164, 0
      %s167 = sadd.s32 %s166, 1
      %s168 = scalar_select %p165, %s166, %s167
      %p171 = pneg %p165
      %p172 = scmp.eq.s32.totalorder %s40, 3
      %p173 = por %p171, %p172
      %p174 = scmp.ne.s32.totalorder %s166, %s169
      %p175 = scmp.eq.s32.totalorder %s40, 0
      %p176 = por %p174, %p175
      %p177 = scmp.ne.s32.totalorder %s166, %s169
      %p178 = scmp.eq.s32.totalorder %s45, 3
      %p179 = por %p177, %p178
      %p180 = scmp.ne.s32.totalorder %s169, %s170
      %p181 = scmp.eq.s32.totalorder %s45, 0
      %p182 = por %p180, %p181
      %p183 = scmp.ne.s32.totalorder %s169, %s170
      %p184 = scmp.eq.s32.totalorder %s46, 3
      %p185 = por %p183, %p184
      %p187 = scmp.ne.s32.totalorder %s170, %s186
      %p188 = scmp.eq.s32.totalorder %s46, 0
      %p189 = por %p187, %p188
      %s190 = ssub.s32 %s48, %s55
      %p191 = scmp.eq.s32.totalorder %s190, 0
      %s193 = sadd.s32 %s192, 1
      %s194 = scalar_select %p191, %s192, %s193
      %p197 = pneg %p191
      %p198 = scmp.eq.s32.totalorder %s40, 3
      %p199 = por %p197, %p198
      %p200 = scmp.ne.s32.totalorder %s192, %s195
      %p201 = scmp.eq.s32.totalorder %s40, 0
      %p202 = por %p200, %p201
      %p203 = scmp.ne.s32.totalorder %s192, %s195
      %p204 = scmp.eq.s32.totalorder %s45, 3
      %p205 = por %p203, %p204
      %p206 = scmp.ne.s32.totalorder %s195, %s196
      %p207 = scmp.eq.s32.totalorder %s45, 0
      %p208 = por %p206, %p207
      %p209 = scmp.ne.s32.totalorder %s195, %s196
      %p210 = scmp.eq.s32.totalorder %s46, 3
      %p211 = por %p209, %p210
      %p213 = scmp.ne.s32.totalorder %s196, %s212
      %p214 = scmp.eq.s32.totalorder %s46, 0
      %p215 = por %p213, %p214
      %s216 = ssub.s32 %s48, %s55
      %p217 = scmp.eq.s32.totalorder %s216, 0
      %s219 = sadd.s32 %s218, 1
      %s220 = scalar_select %p217, %s218, %s219
      %p223 = pneg %p217
      %p224 = scmp.eq.s32.totalorder %s40, 3
      %p225 = por %p223, %p224
      %p226 = scmp.ne.s32.totalorder %s218, %s221
      %p227 = scmp.eq.s32.totalorder %s40, 0
      %p228 = por %p226, %p227
      %p229 = scmp.ne.s32.totalorder %s218, %s221
      %p230 = scmp.eq.s32.totalorder %s45, 3
      %p231 = por %p229, %p230
      %p232 = scmp.ne.s32.totalorder %s221, %s222
      %p233 = scmp.eq.s32.totalorder %s45, 0
      %p234 = por %p232, %p233
      %p235 = scmp.ne.s32.totalorder %s221, %s222
      %p236 = scmp.eq.s32.totalorder %s46, 3
      %p237 = por %p235, %p236
      %p239 = scmp.ne.s32.totalorder %s222, %s238
      %p240 = scmp.eq.s32.totalorder %s46, 0
      %p241 = por %p239, %p240
      %s242 = ssub.s32 %s48, %s55
      %p243 = scmp.eq.s32.totalorder %s242, 0
      %s245 = sadd.s32 %s244, 1
      %s246 = scalar_select %p243, %s244, %s245
      %p249 = pneg %p243
      %p250 = scmp.eq.s32.totalorder %s40, 3
      %p251 = por %p249, %p250
      %p252 = scmp.ne.s32.totalorder %s244, %s247
      %p253 = scmp.eq.s32.totalorder %s40, 0
      %p254 = por %p252, %p253
      %p255 = scmp.ne.s32.totalorder %s244, %s247
      %p256 = scmp.eq.s32.totalorder %s45, 3
      %p257 = por %p255, %p256
      %p258 = scmp.ne.s32.totalorder %s247, %s248
      %p259 = scmp.eq.s32.totalorder %s45, 0
      %p260 = por %p258, %p259
      %p261 = scmp.ne.s32.totalorder %s247, %s248
      %p262 = scmp.eq.s32.totalorder %s46, 3
      %p263 = por %p261, %p262
      %p265 = scmp.ne.s32.totalorder %s248, %s264
      %p266 = scmp.eq.s32.totalorder %s46, 0
      %p267 = por %p265, %p266
      %s268 = ssub.s32 %s48, %s55
      %p269 = scmp.eq.s32.totalorder %s268, 0
      %s271 = sadd.s32 %s270, 1
      %s272 = scalar_select %p269, %s270, %s271
      %p275 = pneg %p269
      %p276 = scmp.eq.s32.totalorder %s40, 3
      %p277 = por %p275, %p276
      %p278 = scmp.ne.s32.totalorder %s270, %s273
      %p279 = scmp.eq.s32.totalorder %s40, 0
      %p280 = por %p278, %p279
      %p281 = scmp.ne.s32.totalorder %s270, %s273
      %p282 = scmp.eq.s32.totalorder %s45, 3
      %p283 = por %p281, %p282
      %p284 = scmp.ne.s32.totalorder %s273, %s274
      %p285 = scmp.eq.s32.totalorder %s45, 0
      %p286 = por %p284, %p285
      %p287 = scmp.ne.s32.totalorder %s273, %s274
      %p288 = scmp.eq.s32.totalorder %s46, 3
      %p289 = por %p287, %p288
      %p291 = scmp.ne.s32.totalorder %s274, %s290
      %p292 = scmp.eq.s32.totalorder %s46, 0
      %p293 = por %p291, %p292
      %s294 = ssub.s32 %s48, %s55
      %p295 = scmp.eq.s32.totalorder %s294, 0
      %s297 = sadd.s32 %s296, 1
      %s298 = scalar_select %p295, %s296, %s297
      %p301 = pneg %p295
      %p302 = scmp.eq.s32.totalorder %s40, 3
      %p303 = por %p301, %p302
      %p304 = scmp.ne.s32.totalorder %s296, %s299
      %p305 = scmp.eq.s32.totalorder %s40, 0
      %p306 = por %p304, %p305
      %p307 = scmp.ne.s32.totalorder %s296, %s299
      %p308 = scmp.eq.s32.totalorder %s45, 3
      %p309 = por %p307, %p308
      %p310 = scmp.ne.s32.totalorder %s299, %s300
      %p311 = scmp.eq.s32.totalorder %s45, 0
      %p312 = por %p310, %p311
      %p313 = scmp.ne.s32.totalorder %s299, %s300
      %p314 = scmp.eq.s32.totalorder %s46, 3
      %p315 = por %p313, %p314
      %p317 = scmp.ne.s32.totalorder %s300, %s316
      %p318 = scmp.eq.s32.totalorder %s46, 0
      %p319 = por %p317, %p318
      %s320 = ssub.s32 %s48, %s55
      %p321 = scmp.eq.s32.totalorder %s320, 0
      %s323 = sadd.s32 %s322, 1
      %s324 = scalar_select %p321, %s322, %s323
      %p327 = pneg %p321
      %p328 = scmp.eq.s32.totalorder %s40, 3
      %p329 = por %p327, %p328
      %p330 = scmp.ne.s32.totalorder %s322, %s325
      %p331 = scmp.eq.s32.totalorder %s40, 0
      %p332 = por %p330, %p331
      %p333 = scmp.ne.s32.totalorder %s322, %s325
      %p334 = scmp.eq.s32.totalorder %s45, 3
      %p335 = por %p333, %p334
      %p336 = scmp.ne.s32.totalorder %s325, %s326
      %p337 = scmp.eq.s32.totalorder %s45, 0
      %p338 = por %p336, %p337
      %p339 = scmp.ne.s32.totalorder %s325, %s326
      %p340 = scmp.eq.s32.totalorder %s46, 3
      %p341 = por %p339, %p340
      %p343 = scmp.ne.s32.totalorder %s326, %s342
      %p344 = scmp.eq.s32.totalorder %s46, 0
      %p345 = por %p343, %p344
      %s346 = ssub.s32 %s48, %s55
      %p347 = scmp.eq.s32.totalorder %s346, 0
      %s349 = sadd.s32 %s348, 1
      %s350 = scalar_select %p347, %s348, %s349
      %p353 = pneg %p347
      %p354 = scmp.eq.s32.totalorder %s40, 3
      %p355 = por %p353, %p354
      %p356 = scmp.ne.s32.totalorder %s348, %s351
      %p357 = scmp.eq.s32.totalorder %s40, 0
      %p358 = por %p356, %p357
      %p359 = scmp.ne.s32.totalorder %s348, %s351
      %p360 = scmp.eq.s32.totalorder %s45, 3
      %p361 = por %p359, %p360
      %p362 = scmp.ne.s32.totalorder %s351, %s352
      %p363 = scmp.eq.s32.totalorder %s45, 0
      %p364 = por %p362, %p363
      %p365 = scmp.ne.s32.totalorder %s351, %s352
      %p366 = scmp.eq.s32.totalorder %s46, 3
      %p367 = por %p365, %p366
      %p369 = scmp.ne.s32.totalorder %s352, %s368
      %p370 = scmp.eq.s32.totalorder %s46, 0
      %p371 = por %p369, %p370
      %s372 = ssub.s32 %s48, %s55
      %p373 = scmp.eq.s32.totalorder %s372, 0
      %s375 = sadd.s32 %s374, 1
      %s376 = scalar_select %p373, %s374, %s375
      %p379 = pneg %p373
      %p380 = scmp.eq.s32.totalorder %s40, 3
      %p381 = por %p379, %p380
      %p382 = scmp.ne.s32.totalorder %s374, %s377
      %p383 = scmp.eq.s32.totalorder %s40, 0
      %p384 = por %p382, %p383
      %p385 = scmp.ne.s32.totalorder %s374, %s377
      %p386 = scmp.eq.s32.totalorder %s45, 3
      %p387 = por %p385, %p386
      %p388 = scmp.ne.s32.totalorder %s377, %s378
      %p389 = scmp.eq.s32.totalorder %s45, 0
      %p390 = por %p388, %p389
      %p391 = scmp.ne.s32.totalorder %s377, %s378
      %p392 = scmp.eq.s32.totalorder %s46, 3
      %p393 = por %p391, %p392
      %p395 = scmp.ne.s32.totalorder %s378, %s394
      %p396 = scmp.eq.s32.totalorder %s46, 0
      %p397 = por %p395, %p396
      %s398 = ssub.s32 %s47, %s59
      %p399 = scmp.eq.s32.totalorder %s398, 0
      %s401 = sadd.s32 %s400, 1
      %s402 = scalar_select %p399, %s400, %s401
      %p405 = pneg %p399
      %p406 = scmp.eq.s32.totalorder %s40, 3
      %p407 = por %p405, %p406
      %p408 = scmp.ne.s32.totalorder %s400, %s403
      %p409 = scmp.eq.s32.totalorder %s40, 0
      %p410 = por %p408, %p409
      %p411 = scmp.ne.s32.totalorder %s400, %s403
      %p412 = scmp.eq.s32.totalorder %s45, 3
      %p413 = por %p411, %p412
      %p414 = scmp.ne.s32.totalorder %s403, %s404
      %p415 = scmp.eq.s32.totalorder %s45, 0
      %p416 = por %p414, %p415
      %p417 = scmp.ne.s32.totalorder %s403, %s404
      %p418 = scmp.eq.s32.totalorder %s46, 3
      %p419 = por %p417, %p418
      %p421 = scmp.ne.s32.totalorder %s404, %s420
      %p422 = scmp.eq.s32.totalorder %s46, 0
      %p423 = por %p421, %p422
      %p424 = scmp.le.s32.totalorder 1, %s40
      %p425 = scmp.lt.s32.totalorder %s40, 5
      %p426 = pnand %p424, %p425
      %p427 = pneg %p426
      // Predicated region
      $region9: #{tpu_custom_call.1} parent=5 // pred_check
        _
      $region10: #{tpu_custom_call.1} parent=5 // pred_check_branch
        %429 = sbr.rel (%p426) target = $region12
      $region11: #{tpu_custom_call.1} parent=5 // pred_region
        %s430 = ssub.s32 %s40, 1
      $region12: #{tpu_custom_call.1} parent=5 // pred_fallthru
        _
      %p431 = scmp.lt.s32.totalorder %s40, 4
      // Predicated region
      $region13: #{tpu_custom_call.1} parent=5 // pred_check
        %p432 = pneg %p431
      $region14: #{tpu_custom_call.1} parent=5 // pred_check_branch
        %434 = sbr.rel (%p432) target = $region16
      $region15: #{tpu_custom_call.1} parent=5 // pred_region
        // Predicated region
        $region17: #{tpu_custom_call.1} parent=15 // pred_check
          %p435 = pneg %p72
        $region18: #{tpu_custom_call.1} parent=15 // pred_check_branch
          %437 = sbr.rel (%p435) target = $region20
        $region19: #{tpu_custom_call.1} parent=15 // pred_region
          %s438 = sand.u32 %s62, 1
          %s439 = scalar_lea.sflag [#allocation3], %s438
          %s440 = sand.u32 %s62, 1
          %s441 = smul.addr %s440, 48
          %s442 = scalar_lea.vmem [#allocation2], %s441
          %s443 = smul.u32 3, %s47
          %445 = vsyncadd %s439, 0
          %s446 = smul.addr %s443, 2
          %s447 = smul.addr %s446, 8
          %s448 = scalar_lea.hbm %s0, %s447
          %s449 = sshll.u32 %s448, 4
          %s450 = int_to_ptr.hbm [resolvable:$true] %s449
          %s451 = sshll.u32 %s442, 4
          %s452 = int_to_ptr.vmem [resolvable:$true] %s451
          %457 = dma.hbm_to_vmem [thread:$0]  %s450, 768, %s452, %s439, 128, 128, 8
        $region20: #{tpu_custom_call.1} parent=15 // pred_fallthru
          _
        // Predicated region
        $region21: #{tpu_custom_call.1} parent=15 // pred_check
          %p458 = pneg %p98
        $region22: #{tpu_custom_call.1} parent=15 // pred_check_branch
          %460 = sbr.rel (%p458) target = $region24
        $region23: #{tpu_custom_call.1} parent=15 // pred_region
          %s461 = sand.u32 %s40, 1
          %s462 = scalar_lea.sflag [#allocation6], %s461
          %s463 = sand.u32 %s88, 1
          %s464 = scalar_lea.vmem [#allocation5], %s463
          %466 = vsyncadd %s462, 0
          %s467 = scalar_lea.hbm %s1, %s48
          %s469 = sshll.u32 %s467, 4
          %s470 = int_to_ptr.hbm [resolvable:$true] %s469
          %s471 = sshll.u32 %s464, 4
          %s472 = int_to_ptr.vmem [resolvable:$true] %s471
          %474 = dma.hbm_to_vmem [thread:$0]  %s470, 16, %s472, %s462
        $region24: #{tpu_custom_call.1} parent=15 // pred_fallthru
          _
        // Predicated region
        $region25: #{tpu_custom_call.1} parent=15 // pred_check
          %p475 = pneg %p124
        $region26: #{tpu_custom_call.1} parent=15 // pred_check_branch
          %477 = sbr.rel (%p475) target = $region28
        $region27: #{tpu_custom_call.1} parent=15 // pred_region
          %s478 = sand.u32 %s40, 1
          %s479 = scalar_lea.sflag [#allocation6], %s478
          %s480 = sand.u32 %s114, 1
          %s481 = scalar_lea.vmem [#allocation7], %s480
          %483 = vsyncadd %s479, 0
          %s484 = scalar_lea.hbm %s2, %s48
          %s486 = sshll.u32 %s484, 4
          %s487 = int_to_ptr.hbm [resolvable:$true] %s486
          %s488 = sshll.u32 %s481, 4
          %s489 = int_to_ptr.vmem [resolvable:$true] %s488
          %491 = dma.hbm_to_vmem [thread:$0]  %s487, 16, %s489, %s479
        $region28: #{tpu_custom_call.1} parent=15 // pred_fallthru
          _
        // Predicated region
        $region29: #{tpu_custom_call.1} parent=15 // pred_check
          %p492 = pneg %p150
        $region30: #{tpu_custom_call.1} parent=15 // pred_check_branch
          %494 = sbr.rel (%p492) target = $region32
        $region31: #{tpu_custom_call.1} parent=15 // pred_region
          %s495 = sand.u32 %s40, 1
          %s496 = scalar_lea.sflag [#allocation9], %s495
          %s497 = sand.u32 %s140, 1
          %s498 = smul.addr %s497, 192
          %s499 = scalar_lea.vmem [#allocation8], %s498
          %501 = vsyncadd %s496, 0
          %s502 = smul.addr %s48, 48
          %s503 = smul.addr %s502, 4
          %s504 = scalar_lea.hbm %s3, %s503
          %s505 = sshll.u32 %s504, 4
          %s506 = int_to_ptr.hbm [resolvable:$true] %s505
          %s507 = sshll.u32 %s499, 4
          %s508 = int_to_ptr.vmem [resolvable:$true] %s507
          %513 = dma.hbm_to_vmem [thread:$0]  %s506, 3072, %s508, %s496, 192, 192, 12
        $region32: #{tpu_custom_call.1} parent=15 // pred_fallthru
          _
        // Predicated region
        $region33: #{tpu_custom_call.1} parent=15 // pred_check
          %p514 = pneg %p176
        $region34: #{tpu_custom_call.1} parent=15 // pred_check_branch
          %516 = sbr.rel (%p514) target = $region36
        $region35: #{tpu_custom_call.1} parent=15 // pred_region
          %s517 = sand.u32 %s40, 1
          %s518 = scalar_lea.sflag [#allocation9], %s517
          %s519 = sand.u32 %s166, 1
          %s520 = smul.addr %s519, 3
          %s521 = scalar_lea.vmem [#allocation10], %s520
          %523 = vsyncadd %s518, 0
          %s524 = smul.addr %s48, 3
          %s525 = scalar_lea.hbm %s4, %s524
          %s527 = sshll.u32 %s525, 4
          %s528 = int_to_ptr.hbm [resolvable:$true] %s527
          %s529 = sshll.u32 %s521, 4
          %s530 = int_to_ptr.vmem [resolvable:$true] %s529
          %532 = dma.hbm_to_vmem [thread:$0]  %s528, 48, %s530, %s518
        $region36: #{tpu_custom_call.1} parent=15 // pred_fallthru
          _
        // Predicated region
        $region37: #{tpu_custom_call.1} parent=15 // pred_check
          %p533 = pneg %p202
        $region38: #{tpu_custom_call.1} parent=15 // pred_check_branch
          %535 = sbr.rel (%p533) target = $region40
        $region39: #{tpu_custom_call.1} parent=15 // pred_region
          %s536 = sand.u32 %s40, 1
          %s537 = scalar_lea.sflag [#allocation12], %s536
          %s538 = sand.u32 %s192, 1
          %s539 = smul.addr %s538, 64
          %s540 = scalar_lea.vmem [#allocation11], %s539
          %542 = vsyncadd %s537, 0
          %s543 = smul.addr %s48, 16
          %s544 = smul.addr %s543, 4
          %s545 = scalar_lea.hbm %s5, %s544
          %s546 = sshll.u32 %s545, 4
          %s547 = int_to_ptr.hbm [resolvable:$true] %s546
          %s548 = sshll.u32 %s540, 4
          %s549 = int_to_ptr.vmem [resolvable:$true] %s548
          %554 = dma.hbm_to_vmem [thread:$0]  %s547, 1024, %s549, %s537, 64, 64, 4
        $region40: #{tpu_custom_call.1} parent=15 // pred_fallthru
          _
        // Predicated region
        $region41: #{tpu_custom_call.1} parent=15 // pred_check
          %p555 = pneg %p228
        $region42: #{tpu_custom_call.1} parent=15 // pred_check_branch
          %557 = sbr.rel (%p555) target = $region44
        $region43: #{tpu_custom_call.1} parent=15 // pred_region
          %s558 = sand.u32 %s40, 1
          %s559 = scalar_lea.sflag [#allocation12], %s558
          %s560 = sand.u32 %s218, 1
          %s561 = scalar_lea.vmem [#allocation13], %s560
          %563 = vsyncadd %s559, 0
          %s564 = scalar_lea.hbm %s6, %s48
          %s566 = sshll.u32 %s564, 4
          %s567 = int_to_ptr.hbm [resolvable:$true] %s566
          %s568 = sshll.u32 %s561, 4
          %s569 = int_to_ptr.vmem [resolvable:$true] %s568
          %571 = dma.hbm_to_vmem [thread:$0]  %s567, 16, %s569, %s559
        $region44: #{tpu_custom_call.1} parent=15 // pred_fallthru
          _
        // Predicated region
        $region45: #{tpu_custom_call.1} parent=15 // pred_check
          %p572 = pneg %p254
        $region46: #{tpu_custom_call.1} parent=15 // pred_check_branch
          %574 = sbr.rel (%p572) target = $region48
        $region47: #{tpu_custom_call.1} parent=15 // pred_region
          %s575 = sand.u32 %s40, 1
          %s576 = scalar_lea.sflag [#allocation15], %s575
          %s577 = sand.u32 %s244, 1
          %s578 = scalar_lea.vmem [#allocation14], %s577
          %580 = vsyncadd %s576, 0
          %s581 = scalar_lea.hbm %s7, %s48
          %s583 = sshll.u32 %s581, 4
          %s584 = int_to_ptr.hbm [resolvable:$true] %s583
          %s585 = sshll.u32 %s578, 4
          %s586 = int_to_ptr.vmem [resolvable:$true] %s585
          %588 = dma.hbm_to_vmem [thread:$0]  %s584, 16, %s586, %s576
        $region48: #{tpu_custom_call.1} parent=15 // pred_fallthru
          _
        // Predicated region
        $region49: #{tpu_custom_call.1} parent=15 // pred_check
          %p589 = pneg %p280
        $region50: #{tpu_custom_call.1} parent=15 // pred_check_branch
          %591 = sbr.rel (%p589) target = $region52
        $region51: #{tpu_custom_call.1} parent=15 // pred_region
          %s592 = sand.u32 %s40, 1
          %s593 = scalar_lea.sflag [#allocation15], %s592
          %s594 = sand.u32 %s270, 1
          %s595 = scalar_lea.vmem [#allocation16], %s594
          %597 = vsyncadd %s593, 0
          %s598 = scalar_lea.hbm %s8, %s48
          %s600 = sshll.u32 %s598, 4
          %s601 = int_to_ptr.hbm [resolvable:$true] %s600
          %s602 = sshll.u32 %s595, 4
          %s603 = int_to_ptr.vmem [resolvable:$true] %s602
          %605 = dma.hbm_to_vmem [thread:$0]  %s601, 16, %s603, %s593
        $region52: #{tpu_custom_call.1} parent=15 // pred_fallthru
          _
        // Predicated region
        $region53: #{tpu_custom_call.1} parent=15 // pred_check
          %p606 = pneg %p306
        $region54: #{tpu_custom_call.1} parent=15 // pred_check_branch
          %608 = sbr.rel (%p606) target = $region56
        $region55: #{tpu_custom_call.1} parent=15 // pred_region
          %s609 = sand.u32 %s40, 1
          %s610 = scalar_lea.sflag [#allocation18], %s609
          %s611 = sand.u32 %s296, 1
          %s612 = smul.addr %s611, 256
          %s613 = scalar_lea.vmem [#allocation17], %s612
          %615 = vsyncadd %s610, 0
          %s616 = smul.addr %s48, 64
          %s617 = smul.addr %s616, 4
          %s618 = scalar_lea.hbm %s9, %s617
          %s619 = sshll.u32 %s618, 4
          %s620 = int_to_ptr.hbm [resolvable:$true] %s619
          %s621 = sshll.u32 %s613, 4
          %s622 = int_to_ptr.vmem [resolvable:$true] %s621
          %627 = dma.hbm_to_vmem [thread:$0]  %s620, 4096, %s622, %s610, 256, 256, 16
        $region56: #{tpu_custom_call.1} parent=15 // pred_fallthru
          _
        // Predicated region
        $region57: #{tpu_custom_call.1} parent=15 // pred_check
          %p628 = pneg %p332
        $region58: #{tpu_custom_call.1} parent=15 // pred_check_branch
          %630 = sbr.rel (%p628) target = $region60
        $region59: #{tpu_custom_call.1} parent=15 // pred_region
          %p631 = scmp.lt.s32.totalorder %s48, 1
          %s632 = scalar_select %p631, %s48, 1
          %s633 = smul.addr %s632, 4
          %s634 = scalar_lea.vmem %s10, %s633
        $region60: #{tpu_custom_call.1} parent=15 // pred_fallthru
          _
        // Predicated region
        $region61: #{tpu_custom_call.1} parent=15 // pred_check
          %p635 = pneg %p358
        $region62: #{tpu_custom_call.1} parent=15 // pred_check_branch
          %637 = sbr.rel (%p635) target = $region64
        $region63: #{tpu_custom_call.1} parent=15 // pred_region
          %s638 = sand.u32 %s40, 1
          %s639 = scalar_lea.sflag [#allocation18], %s638
          %s640 = sand.u32 %s348, 1
          %s641 = smul.addr %s640, 256
          %s642 = scalar_lea.vmem [#allocation19], %s641
          %644 = vsyncadd %s639, 0
          %s645 = smul.addr %s48, 64
          %s646 = smul.addr %s645, 4
          %s647 = scalar_lea.hbm %s11, %s646
          %s648 = sshll.u32 %s647, 4
          %s649 = int_to_ptr.hbm [resolvable:$true] %s648
          %s650 = sshll.u32 %s642, 4
          %s651 = int_to_ptr.vmem [resolvable:$true] %s650
          %656 = dma.hbm_to_vmem [thread:$0]  %s649, 4096, %s651, %s639, 64, 64, 4
        $region64: #{tpu_custom_call.1} parent=15 // pred_fallthru
          _
        // Predicated region
        $region65: #{tpu_custom_call.1} parent=15 // pred_check
          %p657 = pneg %p384
        $region66: #{tpu_custom_call.1} parent=15 // pred_check_branch
          %659 = sbr.rel (%p657) target = $region68
        $region67: #{tpu_custom_call.1} parent=15 // pred_region
          %p660 = scmp.lt.s32.totalorder %s48, 1
          %s661 = scalar_select %p660, %s48, 1
          %s662 = scalar_lea.vmem %s12, %s661
        $region68: #{tpu_custom_call.1} parent=15 // pred_fallthru
          _
      $region16: #{tpu_custom_call.1} parent=5 // pred_fallthru
        _
      %p663 = scmp.le.s32.totalorder 1, %s40
      %p664 = scmp.lt.s32.totalorder %s40, 5
      %p665 = pnand %p663, %p664
      %p666 = pneg %p665
      // Predicated region
      $region69: #{tpu_custom_call.1} parent=5 // pred_check
        _
      $region70: #{tpu_custom_call.1} parent=5 // pred_check_branch
        %668 = sbr.rel (%p665) target = $region72
      $region71: #{tpu_custom_call.1} parent=5 // pred_region
        %s669 = ssub.s32 %s40, 1
        %s670 = sand.u32 %s65, 1
        %s671 = scalar_lea.sflag [#allocation3], %s670
        %s672 = sand.u32 %s65, 1
        %s673 = smul.addr %s672, 48
        %s674 = scalar_lea.vmem [#allocation2], %s673
        // Predicated region
        $region73: #{tpu_custom_call.1} parent=71 // pred_check
          %p675 = pneg %p78
        $region74: #{tpu_custom_call.1} parent=71 // pred_check_branch
          %677 = sbr.rel (%p675) target = $region76
        $region75: #{tpu_custom_call.1} parent=71 // pred_region
          %679 = dma.done %s671, 768
        $region76: #{tpu_custom_call.1} parent=71 // pred_fallthru
          _
        %s680 = sand.u32 %s45, 1
        %s681 = scalar_lea.sflag [#allocation6], %s680
        %s682 = sand.u32 %s91, 1
        %s683 = scalar_lea.vmem [#allocation5], %s682
        // Predicated region
        $region77: #{tpu_custom_call.1} parent=71 // pred_check
          %p684 = pneg %p104
        $region78: #{tpu_custom_call.1} parent=71 // pred_check_branch
          %686 = sbr.rel (%p684) target = $region80
        $region79: #{tpu_custom_call.1} parent=71 // pred_region
          %688 = dma.done %s681, 16
        $region80: #{tpu_custom_call.1} parent=71 // pred_fallthru
          _
        %s689 = sand.u32 %s45, 1
        %s690 = scalar_lea.sflag [#allocation6], %s689
        %s691 = sand.u32 %s117, 1
        %s692 = scalar_lea.vmem [#allocation7], %s691
        // Predicated region
        $region81: #{tpu_custom_call.1} parent=71 // pred_check
          %p693 = pneg %p130
        $region82: #{tpu_custom_call.1} parent=71 // pred_check_branch
          %695 = sbr.rel (%p693) target = $region84
        $region83: #{tpu_custom_call.1} parent=71 // pred_region
          %697 = dma.done %s690, 16
        $region84: #{tpu_custom_call.1} parent=71 // pred_fallthru
          _
        %s698 = sand.u32 %s45, 1
        %s699 = scalar_lea.sflag [#allocation9], %s698
        %s700 = sand.u32 %s143, 1
        %s701 = smul.addr %s700, 192
        %s702 = scalar_lea.vmem [#allocation8], %s701
        // Predicated region
        $region85: #{tpu_custom_call.1} parent=71 // pred_check
          %p703 = pneg %p156
        $region86: #{tpu_custom_call.1} parent=71 // pred_check_branch
          %705 = sbr.rel (%p703) target = $region88
        $region87: #{tpu_custom_call.1} parent=71 // pred_region
          %707 = dma.done %s699, 3072
        $region88: #{tpu_custom_call.1} parent=71 // pred_fallthru
          _
        %s708 = sand.u32 %s45, 1
        %s709 = scalar_lea.sflag [#allocation9], %s708
        %s710 = sand.u32 %s169, 1
        %s711 = smul.addr %s710, 3
        %s712 = scalar_lea.vmem [#allocation10], %s711
        // Predicated region
        $region89: #{tpu_custom_call.1} parent=71 // pred_check
          %p713 = pneg %p182
        $region90: #{tpu_custom_call.1} parent=71 // pred_check_branch
          %715 = sbr.rel (%p713) target = $region92
        $region91: #{tpu_custom_call.1} parent=71 // pred_region
          %717 = dma.done %s709, 48
        $region92: #{tpu_custom_call.1} parent=71 // pred_fallthru
          _
        %s718 = sand.u32 %s45, 1
        %s719 = scalar_lea.sflag [#allocation12], %s718
        %s720 = sand.u32 %s195, 1
        %s721 = smul.addr %s720, 64
        %s722 = scalar_lea.vmem [#allocation11], %s721
        // Predicated region
        $region93: #{tpu_custom_call.1} parent=71 // pred_check
          %p723 = pneg %p208
        $region94: #{tpu_custom_call.1} parent=71 // pred_check_branch
          %725 = sbr.rel (%p723) target = $region96
        $region95: #{tpu_custom_call.1} parent=71 // pred_region
          %727 = dma.done %s719, 1024
        $region96: #{tpu_custom_call.1} parent=71 // pred_fallthru
          _
        %s728 = sand.u32 %s45, 1
        %s729 = scalar_lea.sflag [#allocation12], %s728
        %s730 = sand.u32 %s221, 1
        %s731 = scalar_lea.vmem [#allocation13], %s730
        // Predicated region
        $region97: #{tpu_custom_call.1} parent=71 // pred_check
          %p732 = pneg %p234
        $region98: #{tpu_custom_call.1} parent=71 // pred_check_branch
          %734 = sbr.rel (%p732) target = $region100
        $region99: #{tpu_custom_call.1} parent=71 // pred_region
          %736 = dma.done %s729, 16
        $region100: #{tpu_custom_call.1} parent=71 // pred_fallthru
          _
        %s737 = sand.u32 %s45, 1
        %s738 = scalar_lea.sflag [#allocation15], %s737
        %s739 = sand.u32 %s247, 1
        %s740 = scalar_lea.vmem [#allocation14], %s739
        // Predicated region
        $region101: #{tpu_custom_call.1} parent=71 // pred_check
          %p741 = pneg %p260
        $region102: #{tpu_custom_call.1} parent=71 // pred_check_branch
          %743 = sbr.rel (%p741) target = $region104
        $region103: #{tpu_custom_call.1} parent=71 // pred_region
          %745 = dma.done %s738, 16
        $region104: #{tpu_custom_call.1} parent=71 // pred_fallthru
          _
        %s746 = sand.u32 %s45, 1
        %s747 = scalar_lea.sflag [#allocation15], %s746
        %s748 = sand.u32 %s273, 1
        %s749 = scalar_lea.vmem [#allocation16], %s748
        // Predicated region
        $region105: #{tpu_custom_call.1} parent=71 // pred_check
          %p750 = pneg %p286
        $region106: #{tpu_custom_call.1} parent=71 // pred_check_branch
          %752 = sbr.rel (%p750) target = $region108
        $region107: #{tpu_custom_call.1} parent=71 // pred_region
          %754 = dma.done %s747, 16
        $region108: #{tpu_custom_call.1} parent=71 // pred_fallthru
          _
        %s755 = sand.u32 %s45, 1
        %s756 = scalar_lea.sflag [#allocation18], %s755
        %s757 = sand.u32 %s299, 1
        %s758 = smul.addr %s757, 256
        %s759 = scalar_lea.vmem [#allocation17], %s758
        // Predicated region
        $region109: #{tpu_custom_call.1} parent=71 // pred_check
          %p760 = pneg %p312
        $region110: #{tpu_custom_call.1} parent=71 // pred_check_branch
          %762 = sbr.rel (%p760) target = $region112
        $region111: #{tpu_custom_call.1} parent=71 // pred_region
          %764 = dma.done %s756, 4096
        $region112: #{tpu_custom_call.1} parent=71 // pred_fallthru
          _
        %s765 = sand.u32 %s45, 1
        %s766 = scalar_lea.sflag [#allocation18], %s765
        %s767 = sand.u32 %s351, 1
        %s768 = smul.addr %s767, 256
        %s769 = scalar_lea.vmem [#allocation19], %s768
        // Predicated region
        $region113: #{tpu_custom_call.1} parent=71 // pred_check
          %p770 = pneg %p364
        $region114: #{tpu_custom_call.1} parent=71 // pred_check_branch
          %772 = sbr.rel (%p770) target = $region116
        $region115: #{tpu_custom_call.1} parent=71 // pred_region
          %774 = dma.done %s766, 4096
        $region116: #{tpu_custom_call.1} parent=71 // pred_fallthru
          _
        %s775 = sand.u32 %s65, 1
        %s776 = scalar_lea.sflag [#allocation3], %s775
        %s777 = sand.u32 %s65, 1
        %s778 = smul.addr %s777, 48
        %s779 = scalar_lea.vmem [#allocation2], %s778
        %p780 = pneg %p78
        %p781 = pneg %p75
        %s782 = sand.u32 %s45, 1
        %s783 = scalar_lea.sflag [#allocation6], %s782
        %s784 = sand.u32 %s91, 1
        %s785 = scalar_lea.vmem [#allocation5], %s784
        %p786 = pneg %p104
        %p787 = pneg %p101
        %s788 = sand.u32 %s45, 1
        %s789 = scalar_lea.sflag [#allocation6], %s788
        %s790 = sand.u32 %s117, 1
        %s791 = scalar_lea.vmem [#allocation7], %s790
        %p792 = pneg %p130
        %p793 = pneg %p127
        %s794 = sand.u32 %s45, 1
        %s795 = scalar_lea.sflag [#allocation9], %s794
        %s796 = sand.u32 %s143, 1
        %s797 = smul.addr %s796, 192
        %s798 = scalar_lea.vmem [#allocation8], %s797
        %p799 = pneg %p156
        %p800 = pneg %p153
        %s801 = sand.u32 %s45, 1
        %s802 = scalar_lea.sflag [#allocation9], %s801
        %s803 = sand.u32 %s169, 1
        %s804 = smul.addr %s803, 3
        %s805 = scalar_lea.vmem [#allocation10], %s804
        %p806 = pneg %p182
        %p807 = pneg %p179
        %s808 = sand.u32 %s45, 1
        %s809 = scalar_lea.sflag [#allocation12], %s808
        %s810 = sand.u32 %s195, 1
        %s811 = smul.addr %s810, 64
        %s812 = scalar_lea.vmem [#allocation11], %s811
        %p813 = pneg %p208
        %p814 = pneg %p205
        %s815 = sand.u32 %s45, 1
        %s816 = scalar_lea.sflag [#allocation12], %s815
        %s817 = sand.u32 %s221, 1
        %s818 = scalar_lea.vmem [#allocation13], %s817
        %p819 = pneg %p234
        %p820 = pneg %p231
        %s821 = sand.u32 %s45, 1
        %s822 = scalar_lea.sflag [#allocation15], %s821
        %s823 = sand.u32 %s247, 1
        %s824 = scalar_lea.vmem [#allocation14], %s823
        %p825 = pneg %p260
        %p826 = pneg %p257
        %s827 = sand.u32 %s45, 1
        %s828 = scalar_lea.sflag [#allocation15], %s827
        %s829 = sand.u32 %s273, 1
        %s830 = scalar_lea.vmem [#allocation16], %s829
        %p831 = pneg %p286
        %p832 = pneg %p283
        %s833 = sand.u32 %s45, 1
        %s834 = scalar_lea.sflag [#allocation18], %s833
        %s835 = sand.u32 %s299, 1
        %s836 = smul.addr %s835, 256
        %s837 = scalar_lea.vmem [#allocation17], %s836
        %p838 = pneg %p312
        %p839 = pneg %p309
        %p840 = scmp.lt.s32.totalorder %s50, 1
        %s841 = scalar_select %p840, %s50, 1
        %s842 = smul.addr %s841, 4
        %s843 = scalar_lea.vmem %s10, %s842
        %p844 = pneg %p338
        %p845 = pneg %p335
        %s846 = sand.u32 %s45, 1
        %s847 = scalar_lea.sflag [#allocation18], %s846
        %s848 = sand.u32 %s351, 1
        %s849 = smul.addr %s848, 256
        %s850 = scalar_lea.vmem [#allocation19], %s849
        %p851 = pneg %p364
        %p852 = pneg %p361
        %p853 = scmp.lt.s32.totalorder %s50, 1
        %s854 = scalar_select %p853, %s50, 1
        %s855 = scalar_lea.vmem %s12, %s854
        %p856 = pneg %p390
        %p857 = pneg %p387
        %p858 = pneg %p416
        %p859 = pneg %p413
        %s860 = sand.u32 %s403, 1
        %s861 = scalar_lea.sflag [#allocation4], %s860
        %s862 = sand.u32 %s403, 1
        %s863 = smul.addr %s862, 48
        %s864 = scalar_lea.vmem [#allocation20], %s863
        %s865 = smul.u32 3, %s49
        %p866 = scmp.lt.s32.totalorder %s50, 1
        %s867 = scalar_select %p866, %s50, 1
        %s868 = smul.addr %s867, 4
        %s869 = scalar_lea.vmem %s10, %s868
        %p870 = scmp.lt.s32.totalorder %s50, 1
        %s871 = scalar_select %p870, %s50, 1
        %s872 = scalar_lea.vmem %s12, %s871
        %s873 = smul.u32 3, %s49
        %p875 = scmp.eq.s32.totalorder %s50, 0
        // Predicated region
        $region117: #{tpu_custom_call.1} parent=71 // pred_check
          %p876 = pneg %p875
        $region118: #{tpu_custom_call.1} parent=71 // pred_check_branch
          %878 = sbr.rel (%p876) target = $region120
        $region119: #{tpu_custom_call.1} parent=71 // pred_region
          %v879 = vld [vmem:[%s674] sm:$0xff]
          %v880 = vld [vmem:[%s674 + $0x8] sm:$0xff]
          %v881 = vld [vmem:[%s674 + $0x10] sm:$0xff]
          %v882 = vld [vmem:[%s674 + $0x18] sm:$0xff]
          %v883 = vld [vmem:[%s674 + $0x20] sm:$0xff]
          %v884 = vld [vmem:[%s674 + $0x28] sm:$0xff]
          %885 = vst [vmem:[%s864] sm:$0xff] %v879
          %886 = vst [vmem:[%s864 + $0x8] sm:$0xff] %v880
          %887 = vst [vmem:[%s864 + $0x10] sm:$0xff] %v881
          %888 = vst [vmem:[%s864 + $0x18] sm:$0xff] %v882
          %889 = vst [vmem:[%s864 + $0x20] sm:$0xff] %v883
          %890 = vst [vmem:[%s864 + $0x28] sm:$0xff] %v884
        $region120: #{tpu_custom_call.1} parent=71 // pred_fallthru
          _
        %v891 = vld [vmem:[%s864] sm:$0xff]
        %v892 = vld [vmem:[%s864 + $0x8] sm:$0xff]
        %v893 = vld [vmem:[%s864 + $0x10] sm:$0xff]
        %v894 = vld [vmem:[%s864 + $0x18] sm:$0xff]
        %v895 = vld [vmem:[%s864 + $0x20] sm:$0xff]
        %v896 = vld [vmem:[%s864 + $0x28] sm:$0xff]
        %v897 = vld [vmem:[%s683] sm:$0x1]
        %v898 = vld [vmem:[%s692] sm:$0x1]
        %899 = vadd.xlane.f32.xlu0 %v891
        %v900 = vpop.xlane.xlu0 %899
        %901 = vadd.xlane.f32.xlu0 %v892
        %v902 = vpop.xlane.xlu0 %901
        %903 = vadd.xlane.f32.xlu0 %v893
        %v904 = vpop.xlane.xlu0 %903
        %905 = vadd.xlane.f32.xlu0 %v894
        %v906 = vpop.xlane.xlu0 %905
        %907 = vadd.xlane.f32.xlu0 %v895
        %v908 = vpop.xlane.xlu0 %907
        %909 = vadd.xlane.f32.xlu0 %v896
        %v910 = vpop.xlane.xlu0 %909
        %v911 = vrcp.pop 128.0
        %v912 = vmul.f32 128.0, %v911
        %v913 = vsub.f32 1.0, %v912
        %v914 = vmul.f32 %v911, %v913
        %v915 = vadd.f32 %v911, %v914
        %vm916 = vweird.f32 %v911
        %v917 = vsel %vm916, %v911, %v915
        %v918 = vmul.f32 %v900, %v917
        %v919 = vmul.f32 %v902, %v917
        %v920 = vmul.f32 %v904, %v917
        %v921 = vmul.f32 %v906, %v917
        %v922 = vmul.f32 %v908, %v917
        %v923 = vmul.f32 %v910, %v917
        %v924 = vsub.f32 %v891, %v918
        %v925 = vsub.f32 %v892, %v919
        %v926 = vsub.f32 %v893, %v920
        %v927 = vsub.f32 %v894, %v921
        %v928 = vsub.f32 %v895, %v922
        %v929 = vsub.f32 %v896, %v923
        %v930 = vmul.f32 %v924, %v924
        %v931 = vmul.f32 %v925, %v925
        %v932 = vmul.f32 %v926, %v926
        %v933 = vmul.f32 %v927, %v927
        %v934 = vmul.f32 %v928, %v928
        %v935 = vmul.f32 %v929, %v929
        %936 = vadd.xlane.f32.xlu0 %v930
        %v937 = vpop.xlane.xlu0 %936
        %938 = vadd.xlane.f32.xlu0 %v931
        %v939 = vpop.xlane.xlu0 %938
        %940 = vadd.xlane.f32.xlu0 %v932
        %v941 = vpop.xlane.xlu0 %940
        %942 = vadd.xlane.f32.xlu0 %v933
        %v943 = vpop.xlane.xlu0 %942
        %944 = vadd.xlane.f32.xlu0 %v934
        %v945 = vpop.xlane.xlu0 %944
        %946 = vadd.xlane.f32.xlu0 %v935
        %v947 = vpop.xlane.xlu0 %946
        %v948 = vmul.f32 %v937, %v917
        %v949 = vmul.f32 %v939, %v917
        %v950 = vmul.f32 %v941, %v917
        %v951 = vmul.f32 %v943, %v917
        %v952 = vmul.f32 %v945, %v917
        %v953 = vmul.f32 %v947, %v917
        %v954 = vadd.f32 %v948, 1e-05
        %v955 = vadd.f32 %v949, 1e-05
        %v956 = vadd.f32 %v950, 1e-05
        %v957 = vadd.f32 %v951, 1e-05
        %v958 = vadd.f32 %v952, 1e-05
        %v959 = vadd.f32 %v953, 1e-05
        %v960 = vrsqrt.pop %v954
        %v961 = vmul.f32 %v960, %v954
        %v962 = vmul.f32 %v961, %v960
        %v963 = vmul.f32 0.5, %v962
        %v964 = vsub.f32 1.5, %v963
        %v965 = vmul.f32 %v960, %v964
        %vm966 = vweird.f32 %v954
        %vm967 = vweird.f32 %v960
        %vm968 = vmor %vm966, %vm967
        %v969 = vsel %vm968, %v960, %v965
        %v970 = vrsqrt.pop %v955
        %v971 = vmul.f32 %v970, %v955
        %v972 = vmul.f32 %v971, %v970
        %v973 = vmul.f32 0.5, %v972
        %v974 = vsub.f32 1.5, %v973
        %v975 = vmul.f32 %v970, %v974
        %vm976 = vweird.f32 %v955
        %vm977 = vweird.f32 %v970
        %vm978 = vmor %vm976, %vm977
        %v979 = vsel %vm978, %v970, %v975
        %v980 = vrsqrt.pop %v956
        %v981 = vmul.f32 %v980, %v956
        %v982 = vmul.f32 %v981, %v980
        %v983 = vmul.f32 0.5, %v982
        %v984 = vsub.f32 1.5, %v983
        %v985 = vmul.f32 %v980, %v984
        %vm986 = vweird.f32 %v956
        %vm987 = vweird.f32 %v980
        %vm988 = vmor %vm986, %vm987
        %v989 = vsel %vm988, %v980, %v985
        %v990 = vrsqrt.pop %v957
        %v991 = vmul.f32 %v990, %v957
        %v992 = vmul.f32 %v991, %v990
        %v993 = vmul.f32 0.5, %v992
        %v994 = vsub.f32 1.5, %v993
        %v995 = vmul.f32 %v990, %v994
        %vm996 = vweird.f32 %v957
        %vm997 = vweird.f32 %v990
        %vm998 = vmor %vm996, %vm997
        %v999 = vsel %vm998, %v990, %v995
        %v1000 = vrsqrt.pop %v958
        %v1001 = vmul.f32 %v1000, %v958
        %v1002 = vmul.f32 %v1001, %v1000
        %v1003 = vmul.f32 0.5, %v1002
        %v1004 = vsub.f32 1.5, %v1003
        %v1005 = vmul.f32 %v1000, %v1004
        %vm1006 = vweird.f32 %v958
        %vm1007 = vweird.f32 %v1000
        %vm1008 = vmor %vm1006, %vm1007
        %v1009 = vsel %vm1008, %v1000, %v1005
        %v1010 = vrsqrt.pop %v959
        %v1011 = vmul.f32 %v1010, %v959
        %v1012 = vmul.f32 %v1011, %v1010
        %v1013 = vmul.f32 0.5, %v1012
        %v1014 = vsub.f32 1.5, %v1013
        %v1015 = vmul.f32 %v1010, %v1014
        %vm1016 = vweird.f32 %v959
        %vm1017 = vweird.f32 %v1010
        %vm1018 = vmor %vm1016, %vm1017
        %v1019 = vsel %vm1018, %v1010, %v1015
        %v1020 = vmul.f32 %v924, %v969
        %v1021 = vmul.f32 %v925, %v979
        %v1022 = vmul.f32 %v926, %v989
        %v1023 = vmul.f32 %v927, %v999
        %v1024 = vmul.f32 %v928, %v1009
        %v1025 = vmul.f32 %v929, %v1019
        %v1027 = vperm.slane %v897, 0
        %v1029 = vmul.f32 %v1020, %v1027
        %v1030 = vmul.f32 %v1021, %v1027
        %v1031 = vmul.f32 %v1022, %v1027
        %v1032 = vmul.f32 %v1023, %v1027
        %v1033 = vmul.f32 %v1024, %v1027
        %v1034 = vmul.f32 %v1025, %v1027
        %v1036 = vperm.slane %v898, 0
        %v1038 = vadd.f32 %v1029, %v1036
        %v1039 = vadd.f32 %v1030, %v1036
        %v1040 = vadd.f32 %v1031, %v1036
        %v1041 = vadd.f32 %v1032, %v1036
        %v1042 = vadd.f32 %v1033, %v1036
        %v1043 = vadd.f32 %v1034, %v1036
        %v1044 = vpack.c.bf16 %v1039, %v1038
        %v1045 = vpack.c.bf16 %v1041, %v1040
        %v1046 = vpack.c.bf16 %v1043, %v1042
        %v1047 = vld [vmem:[%s702] sm:$0xff]
        %v1048 = vld [vmem:[%s702 + $0x8] sm:$0xf]
        %v1049 = vld [vmem:[%s702 + $0xc] sm:$0xff]
        %v1050 = vld [vmem:[%s702 + $0x14] sm:$0xf]
        %v1051 = vld [vmem:[%s702 + $0x18] sm:$0xff]
        %v1052 = vld [vmem:[%s702 + $0x20] sm:$0xf]
        %v1053 = vld [vmem:[%s702 + $0x24] sm:$0xff]
        %v1054 = vld [vmem:[%s702 + $0x2c] sm:$0xf]
        %v1055 = vld [vmem:[%s702 + $0x30] sm:$0xff]
        %v1056 = vld [vmem:[%s702 + $0x38] sm:$0xf]
        %v1057 = vld [vmem:[%s702 + $0x3c] sm:$0xff]
        %v1058 = vld [vmem:[%s702 + $0x44] sm:$0xf]
        %v1059 = vld [vmem:[%s702 + $0x48] sm:$0xff]
        %v1060 = vld [vmem:[%s702 + $0x50] sm:$0xf]
        %v1061 = vld [vmem:[%s702 + $0x54] sm:$0xff]
        %v1062 = vld [vmem:[%s702 + $0x5c] sm:$0xf]
        %v1063 = vld [vmem:[%s702 + $0x60] sm:$0xff]
        %v1064 = vld [vmem:[%s702 + $0x68] sm:$0xf]
        %v1065 = vld [vmem:[%s702 + $0x6c] sm:$0xff]
        %v1066 = vld [vmem:[%s702 + $0x74] sm:$0xf]
        %v1067 = vld [vmem:[%s702 + $0x78] sm:$0xff]
        %v1068 = vld [vmem:[%s702 + $0x80] sm:$0xf]
        %v1069 = vld [vmem:[%s702 + $0x84] sm:$0xff]
        %v1070 = vld [vmem:[%s702 + $0x8c] sm:$0xf]
        %v1071 = vld [vmem:[%s702 + $0x90] sm:$0xff]
        %v1072 = vld [vmem:[%s702 + $0x98] sm:$0xf]
        %v1073 = vld [vmem:[%s702 + $0x9c] sm:$0xff]
        %v1074 = vld [vmem:[%s702 + $0xa4] sm:$0xf]
        %v1075 = vld [vmem:[%s702 + $0xa8] sm:$0xff]
        %v1076 = vld [vmem:[%s702 + $0xb0] sm:$0xf]
        %v1077 = vld [vmem:[%s702 + $0xb4] sm:$0xff]
        %v1078 = vld [vmem:[%s702 + $0xbc] sm:$0xf]
        %v1079 = vld [vmem:[%s712] sm:$0x7]
        %v1081 = vperm.slane %v1079, 0
        %v1082 = vperm.slane %v1079, 1
        %v1083 = vperm.slane %v1079, 2
        %v1119 = vunpack.c.l.b16 %v1047
        %v1120 = vunpack.c.h.b16 %v1047
        %v1121 = vunpack.c.l.b16 %v1048
        %v1122 = vunpack.c.l.b16 %v1049
        %v1123 = vunpack.c.h.b16 %v1049
        %v1124 = vunpack.c.l.b16 %v1050
        %v1125 = vunpack.c.l.b16 %v1051
        %v1126 = vunpack.c.h.b16 %v1051
        %v1127 = vunpack.c.l.b16 %v1052
        %v1128 = vunpack.c.l.b16 %v1053
        %v1129 = vunpack.c.h.b16 %v1053
        %v1130 = vunpack.c.l.b16 %v1054
        %v1131 = vunpack.c.l.b16 %v1055
        %v1132 = vunpack.c.h.b16 %v1055
        %v1133 = vunpack.c.l.b16 %v1056
        %v1134 = vunpack.c.l.b16 %v1057
        %v1135 = vunpack.c.h.b16 %v1057
        %v1136 = vunpack.c.l.b16 %v1058
        %v1137 = vunpack.c.l.b16 %v1059
        %v1138 = vunpack.c.h.b16 %v1059
        %v1139 = vunpack.c.l.b16 %v1060
        %v1140 = vunpack.c.l.b16 %v1061
        %v1141 = vunpack.c.h.b16 %v1061
        %v1142 = vunpack.c.l.b16 %v1062
        %v1143 = vunpack.c.l.b16 %v1063
        %v1144 = vunpack.c.h.b16 %v1063
        %v1145 = vunpack.c.l.b16 %v1064
        %v1146 = vunpack.c.l.b16 %v1065
        %v1147 = vunpack.c.h.b16 %v1065
        %v1148 = vunpack.c.l.b16 %v1066
        %v1149 = vunpack.c.l.b16 %v1067
        %v1150 = vunpack.c.h.b16 %v1067
        %v1151 = vunpack.c.l.b16 %v1068
        %v1152 = vunpack.c.l.b16 %v1069
        %v1153 = vunpack.c.h.b16 %v1069
        %v1154 = vunpack.c.l.b16 %v1070
        %v1155 = vunpack.c.l.b16 %v1071
        %v1156 = vunpack.c.h.b16 %v1071
        %v1157 = vunpack.c.l.b16 %v1072
        %v1158 = vunpack.c.l.b16 %v1073
        %v1159 = vunpack.c.h.b16 %v1073
        %v1160 = vunpack.c.l.b16 %v1074
        %v1161 = vunpack.c.l.b16 %v1075
        %v1162 = vunpack.c.h.b16 %v1075
        %v1163 = vunpack.c.l.b16 %v1076
        %v1164 = vunpack.c.l.b16 %v1077
        %v1165 = vunpack.c.h.b16 %v1077
        %v1166 = vunpack.c.l.b16 %v1078
        %v1167 = vpack.c.b16 %v1122, %v1119
        %v1168 = vpack.c.b16 %v1123, %v1120
        %v1169 = vpack.c.b16 %v1124, %v1121
        %v1170 = vpack.c.b16 %v1128, %v1125
        %v1171 = vpack.c.b16 %v1129, %v1126
        %v1172 = vpack.c.b16 %v1130, %v1127
        %v1173 = vpack.c.b16 %v1134, %v1131
        %v1174 = vpack.c.b16 %v1135, %v1132
        %v1175 = vpack.c.b16 %v1136, %v1133
        %v1176 = vpack.c.b16 %v1140, %v1137
        %v1177 = vpack.c.b16 %v1141, %v1138
        %v1178 = vpack.c.b16 %v1142, %v1139
        %v1179 = vpack.c.b16 %v1146, %v1143
        %v1180 = vpack.c.b16 %v1147, %v1144
        %v1181 = vpack.c.b16 %v1148, %v1145
        %v1182 = vpack.c.b16 %v1152, %v1149
        %v1183 = vpack.c.b16 %v1153, %v1150
        %v1184 = vpack.c.b16 %v1154, %v1151
        %v1185 = vpack.c.b16 %v1158, %v1155
        %v1186 = vpack.c.b16 %v1159, %v1156
        %v1187 = vpack.c.b16 %v1160, %v1157
        %v1188 = vpack.c.b16 %v1164, %v1161
        %v1189 = vpack.c.b16 %v1165, %v1162
        %v1190 = vpack.c.b16 %v1166, %v1163
        %1215 = vmatpush.bf16.msra.mxu0 %v1188
        %1216 = vmatpush.bf16.msra.mxu0 %v1185
        %1217 = vmatpush.bf16.msra.mxu0 %v1182
        %1218 = vmatpush.bf16.msra.mxu0 %v1179
        %1219 = vmatpush.bf16.msra.mxu0 %v1176
        %1220 = vmatpush.bf16.msra.mxu0 %v1173
        %1221 = vmatpush.bf16.msra.mxu0 %v1170
        %1222 = vmatpush.bf16.msra.mxu0 %v1167
        %1223 = vmatmul.bf16.gmra.mxu0 %v1044
        %v1224 = vpop.f32.mrf.mxu0
        %v1225 = vadd.f32 %v1081, %v1224
        %v1226 = vpop.f32.mrf.mxu0
        %v1227 = vadd.f32 %v1081, %v1226
        %1228 = vmatmul.bf16.gmra.mxu0 %v1045
        %v1229 = vpop.f32.mrf.mxu0
        %v1230 = vadd.f32 %v1081, %v1229
        %v1231 = vpop.f32.mrf.mxu0
        %v1232 = vadd.f32 %v1081, %v1231
        %1233 = vmatmul.bf16.gmra.mxu0 %v1046
        %v1234 = vpop.f32.mrf.mxu0
        %v1235 = vadd.f32 %v1081, %v1234
        %v1236 = vpop.f32.mrf.mxu0
        %v1237 = vadd.f32 %v1081, %v1236
        %1238 = vdwg.mxu0
        %1239 = vmatpush.bf16.msra.mxu0 %v1189
        %1240 = vmatpush.bf16.msra.mxu0 %v1186
        %1241 = vmatpush.bf16.msra.mxu0 %v1183
        %1242 = vmatpush.bf16.msra.mxu0 %v1180
        %1243 = vmatpush.bf16.msra.mxu0 %v1177
        %1244 = vmatpush.bf16.msra.mxu0 %v1174
        %1245 = vmatpush.bf16.msra.mxu0 %v1171
        %1246 = vmatpush.bf16.msra.mxu0 %v1168
        %1247 = vmatmul.bf16.gmra.mxu0 %v1044
        %v1248 = vpop.f32.mrf.mxu0
        %v1249 = vadd.f32 %v1082, %v1248
        %v1250 = vpop.f32.mrf.mxu0
        %v1251 = vadd.f32 %v1082, %v1250
        %1252 = vmatmul.bf16.gmra.mxu0 %v1045
        %v1253 = vpop.f32.mrf.mxu0
        %v1254 = vadd.f32 %v1082, %v1253
        %v1255 = vpop.f32.mrf.mxu0
        %v1256 = vadd.f32 %v1082, %v1255
        %1257 = vmatmul.bf16.gmra.mxu0 %v1046
        %v1258 = vpop.f32.mrf.mxu0
        %v1259 = vadd.f32 %v1082, %v1258
        %v1260 = vpop.f32.mrf.mxu0
        %v1261 = vadd.f32 %v1082, %v1260
        %1262 = vdwg.mxu0
        %1263 = vmatpush.bf16.msra.mxu0 %v1190
        %1264 = vmatpush.bf16.msra.mxu0 %v1187
        %1265 = vmatpush.bf16.msra.mxu0 %v1184
        %1266 = vmatpush.bf16.msra.mxu0 %v1181
        %1267 = vmatpush.bf16.msra.mxu0 %v1178
        %1268 = vmatpush.bf16.msra.mxu0 %v1175
        %1269 = vmatpush.bf16.msra.mxu0 %v1172
        %1270 = vmatpush.bf16.msra.mxu0 %v1169
        %1271 = vmatmul.bf16.gmra.mxu0 %v1044
        %v1272 = vpop.f32.mrf.mxu0
        %v1273 = vadd.f32 %v1083, %v1272
        %v1274 = vpop.f32.mrf.mxu0
        %v1275 = vadd.f32 %v1083, %v1274
        %1276 = vmatmul.bf16.gmra.mxu0 %v1045
        %v1277 = vpop.f32.mrf.mxu0
        %v1278 = vadd.f32 %v1083, %v1277
        %v1279 = vpop.f32.mrf.mxu0
        %v1280 = vadd.f32 %v1083, %v1279
        %1281 = vmatmul.bf16.gmra.mxu0 %v1046
        %v1282 = vpop.f32.mrf.mxu0
        %v1283 = vadd.f32 %v1083, %v1282
        %v1284 = vpop.f32.mrf.mxu0
        %v1285 = vadd.f32 %v1083, %v1284
        %1286 = vdwg.mxu0
        %v1287 = vmul.f32 %v1225, 0.125
        %v1288 = vmul.f32 %v1227, 0.125
        %v1289 = vmul.f32 %v1230, 0.125
        %v1290 = vmul.f32 %v1232, 0.125
        %v1291 = vmul.f32 %v1235, 0.125
        %v1292 = vmul.f32 %v1237, 0.125
        %v1293 = vpack.c.bf16 %v1287, %v1287
        %v1294 = vpack.c.bf16 %v1288, %v1288
        %v1295 = vpack.c.bf16 %v1289, %v1289
        %v1296 = vpack.c.bf16 %v1290, %v1290
        %v1297 = vpack.c.bf16 %v1291, %v1291
        %v1298 = vpack.c.bf16 %v1292, %v1292
        %v1299 = vpack.c.bf16 %v1249, %v1249
        %v1300 = vpack.c.bf16 %v1251, %v1251
        %v1301 = vpack.c.bf16 %v1254, %v1254
        %v1302 = vpack.c.bf16 %v1256, %v1256
        %v1303 = vpack.c.bf16 %v1259, %v1259
        %v1304 = vpack.c.bf16 %v1261, %v1261
        %v1305 = vpack.c.bf16 %v1273, %v1273
        %v1306 = vpack.c.bf16 %v1275, %v1275
        %v1307 = vpack.c.bf16 %v1278, %v1278
        %v1308 = vpack.c.bf16 %v1280, %v1280
        %v1309 = vpack.c.bf16 %v1283, %v1283
        %v1310 = vpack.c.bf16 %v1285, %v1285
        %v1311 = vlaneseq
        %v1312 = vshrl.u32 %v1311, 7
        %v1313 = vadd.s32 %v1312, 8
        %v1314 = vlaneseq
        %v1315 = vand.u32 %v1314, 127
        %vm1316 = vcmp.gt.s32.totalorder %v1315, %v1312
        %vm1317 = vcmp.gt.s32.totalorder %v1315, %v1313
        %v1318 = vsel %vm1316, -1e+30, 0.0
        %v1319 = vsel %vm1317, -1e+30, 0.0
        %v1322 = vunpack.c.l.b16 %v1293
        %v1323 = vunpack.c.l.b16 %v1294
        %v1324 = vpack.c.b16 %v1323, %v1322
        %v1327 = vunpack.c.l.b16 %v1299
        %v1328 = vunpack.c.l.b16 %v1300
        %v1329 = vpack.c.b16 %v1328, %v1327
        %vm1330 = vcmask 523264
        %v1332 = vsel %vm1330, %v1324, 0
        %v1335 = vsel %vm1330, %v1329, 0
        %1337 = vmatpush.bf16.xpose.msra.mxu0 0
        %1338 = vmatpush.bf16.xpose.msra.mxu0 0
        %1339 = vmatpush.bf16.xpose.msra.mxu0 0
        %1340 = vmatpush.bf16.xpose.msra.mxu0 0
        %1341 = vmatpush.bf16.xpose.msra.mxu0 0
        %1342 = vmatpush.bf16.xpose.msra.mxu0 0
        %1343 = vmatpush.bf16.xpose.msra.mxu0 0
        %1344 = vmatpush.bf16.xpose.msra.mxu0 %v1335
        %1345 = vmatmul.bf16.gmra.mxu0 %v1332
        %v1346 = vpop.f32.mrf.mxu0
        %v1347 = vadd.f32 %v1318, %v1346
        %v1348 = vpop.f32.mrf.mxu0
        %v1349 = vadd.f32 %v1319, %v1348
        %1350 = vdwg.mxu0
        %v1353 = vunpack.c.l.b16 %v1295
        %v1354 = vunpack.c.l.b16 %v1296
        %v1355 = vpack.c.b16 %v1354, %v1353
        %v1358 = vunpack.c.l.b16 %v1301
        %v1359 = vunpack.c.l.b16 %v1302
        %v1360 = vpack.c.b16 %v1359, %v1358
        %v1362 = vsel %vm1330, %v1355, 0
        %v1365 = vsel %vm1330, %v1360, 0
        %1367 = vmatpush.bf16.xpose.msra.mxu0 0
        %1368 = vmatpush.bf16.xpose.msra.mxu0 0
        %1369 = vmatpush.bf16.xpose.msra.mxu0 0
        %1370 = vmatpush.bf16.xpose.msra.mxu0 0
        %1371 = vmatpush.bf16.xpose.msra.mxu0 0
        %1372 = vmatpush.bf16.xpose.msra.mxu0 0
        %1373 = vmatpush.bf16.xpose.msra.mxu0 0
        %1374 = vmatpush.bf16.xpose.msra.mxu0 %v1365
        %1375 = vmatmul.bf16.gmra.mxu0 %v1362
        %v1376 = vpop.f32.mrf.mxu0
        %v1377 = vadd.f32 %v1318, %v1376
        %v1378 = vpop.f32.mrf.mxu0
        %v1379 = vadd.f32 %v1319, %v1378
        %1380 = vdwg.mxu0
        %v1383 = vunpack.c.l.b16 %v1297
        %v1384 = vunpack.c.l.b16 %v1298
        %v1385 = vpack.c.b16 %v1384, %v1383
        %v1388 = vunpack.c.l.b16 %v1303
        %v1389 = vunpack.c.l.b16 %v1304
        %v1390 = vpack.c.b16 %v1389, %v1388
        %v1392 = vsel %vm1330, %v1385, 0
        %v1395 = vsel %vm1330, %v1390, 0
        %1397 = vmatpush.bf16.xpose.msra.mxu0 0
        %1398 = vmatpush.bf16.xpose.msra.mxu0 0
        %1399 = vmatpush.bf16.xpose.msra.mxu0 0
        %1400 = vmatpush.bf16.xpose.msra.mxu0 0
        %1401 = vmatpush.bf16.xpose.msra.mxu0 0
        %1402 = vmatpush.bf16.xpose.msra.mxu0 0
        %1403 = vmatpush.bf16.xpose.msra.mxu0 0
        %1404 = vmatpush.bf16.xpose.msra.mxu0 %v1395
        %1405 = vmatmul.bf16.gmra.mxu0 %v1392
        %v1406 = vpop.f32.mrf.mxu0
        %v1407 = vadd.f32 %v1318, %v1406
        %v1408 = vpop.f32.mrf.mxu0
        %v1409 = vadd.f32 %v1319, %v1408
        %1410 = vdwg.mxu0
        %vm1411 = vcmask 130048
        %v1412 = vsel %vm1411, %v1347, -inf
        %1413 = vmax.xlane.f32.xlu0 %v1412
        %v1414 = vpop.xlane.xlu0 %1413
        %v1415 = vsel %vm1411, %v1349, -inf
        %1416 = vmax.xlane.f32.xlu0 %v1415
        %v1417 = vpop.xlane.xlu0 %1416
        %v1418 = vsel %vm1411, %v1377, -inf
        %1419 = vmax.xlane.f32.xlu0 %v1418
        %v1420 = vpop.xlane.xlu0 %1419
        %v1421 = vsel %vm1411, %v1379, -inf
        %1422 = vmax.xlane.f32.xlu0 %v1421
        %v1423 = vpop.xlane.xlu0 %1422
        %v1424 = vsel %vm1411, %v1407, -inf
        %1425 = vmax.xlane.f32.xlu0 %v1424
        %v1426 = vpop.xlane.xlu0 %1425
        %v1427 = vsel %vm1411, %v1409, -inf
        %1428 = vmax.xlane.f32.xlu0 %v1427
        %v1429 = vpop.xlane.xlu0 %1428
        %v1430 = vsub.f32 %v1347, %v1414
        %v1431 = vsub.f32 %v1349, %v1417
        %v1432 = vsub.f32 %v1377, %v1420
        %v1433 = vsub.f32 %v1379, %v1423
        %v1434 = vsub.f32 %v1407, %v1426
        %v1435 = vsub.f32 %v1409, %v1429
        %v1436 = vmul.f32 %v1430, 1.442695
        %v1437 = vpow.pop %v1436
        %v1438 = vmul.f32 %v1431, 1.442695
        %v1439 = vpow.pop %v1438
        %v1440 = vmul.f32 %v1432, 1.442695
        %v1441 = vpow.pop %v1440
        %v1442 = vmul.f32 %v1433, 1.442695
        %v1443 = vpow.pop %v1442
        %v1444 = vmul.f32 %v1434, 1.442695
        %v1445 = vpow.pop %v1444
        %v1446 = vmul.f32 %v1435, 1.442695
        %v1447 = vpow.pop %v1446
        %v1448 = vsel %vm1411, %v1437, 0.0
        %1449 = vadd.xlane.f32.xlu0 %v1448
        %v1450 = vpop.xlane.xlu0 %1449
        %v1451 = vsel %vm1411, %v1439, 0.0
        %1452 = vadd.xlane.f32.xlu0 %v1451
        %v1453 = vpop.xlane.xlu0 %1452
        %v1454 = vsel %vm1411, %v1441, 0.0
        %1455 = vadd.xlane.f32.xlu0 %v1454
        %v1456 = vpop.xlane.xlu0 %1455
        %v1457 = vsel %vm1411, %v1443, 0.0
        %1458 = vadd.xlane.f32.xlu0 %v1457
        %v1459 = vpop.xlane.xlu0 %1458
        %v1460 = vsel %vm1411, %v1445, 0.0
        %1461 = vadd.xlane.f32.xlu0 %v1460
        %v1462 = vpop.xlane.xlu0 %1461
        %v1463 = vsel %vm1411, %v1447, 0.0
        %1464 = vadd.xlane.f32.xlu0 %v1463
        %v1465 = vpop.xlane.xlu0 %1464
        %v1466 = vrcp.pop %v1450
        %v1467 = vrcp.pop %v1453
        %v1468 = vrcp.pop %v1456
        %v1469 = vrcp.pop %v1459
        %v1470 = vrcp.pop %v1462
        %v1471 = vrcp.pop %v1465
        %v1472 = vmul.f32 %v1437, %v1466
        %v1473 = vmul.f32 %v1439, %v1467
        %v1474 = vmul.f32 %v1441, %v1468
        %v1475 = vmul.f32 %v1443, %v1469
        %v1476 = vmul.f32 %v1445, %v1470
        %v1477 = vmul.f32 %v1447, %v1471
        %v1478 = vpack.c.bf16 %v1472, %v1472
        %v1479 = vpack.c.bf16 %v1473, %v1473
        %v1480 = vpack.c.bf16 %v1474, %v1474
        %v1481 = vpack.c.bf16 %v1475, %v1475
        %v1482 = vpack.c.bf16 %v1476, %v1476
        %v1483 = vpack.c.bf16 %v1477, %v1477
        %v1486 = vunpack.c.l.b16 %v1478
        %v1487 = vunpack.c.l.b16 %v1479
        %v1488 = vpack.c.b16 %v1487, %v1486
        %v1491 = vunpack.c.l.b16 %v1305
        %v1492 = vunpack.c.l.b16 %v1306
        %v1493 = vpack.c.b16 %v1492, %v1491
        %v1496 = vsel %vm1411, %v1488, 0
        %1498 = vmatpush.bf16.msra.mxu0 0
        %1499 = vmatpush.bf16.msra.mxu0 0
        %1500 = vmatpush.bf16.msra.mxu0 0
        %1501 = vmatpush.bf16.msra.mxu0 0
        %1502 = vmatpush.bf16.msra.mxu0 0
        %1503 = vmatpush.bf16.msra.mxu0 0
        %1504 = vmatpush.bf16.msra.mxu0 0
        %1505 = vmatpush.bf16.msra.mxu0 %v1493
        %1506 = vmatmul.bf16.gmra.mxu0 %v1496
        %v1507 = vpop.f32.mrf.mxu0
        %v1508 = vadd.f32 0.0, %v1507
        %v1509 = vpop.f32.mrf.mxu0
        %v1510 = vadd.f32 0.0, %v1509
        %1511 = vdwg.mxu0
        %v1514 = vunpack.c.l.b16 %v1480
        %v1515 = vunpack.c.l.b16 %v1481
        %v1516 = vpack.c.b16 %v1515, %v1514
        %v1519 = vunpack.c.l.b16 %v1307
        %v1520 = vunpack.c.l.b16 %v1308
        %v1521 = vpack.c.b16 %v1520, %v1519
        %v1524 = vsel %vm1411, %v1516, 0
        %1526 = vmatpush.bf16.msra.mxu0 0
        %1527 = vmatpush.bf16.msra.mxu0 0
        %1528 = vmatpush.bf16.msra.mxu0 0
        %1529 = vmatpush.bf16.msra.mxu0 0
        %1530 = vmatpush.bf16.msra.mxu0 0
        %1531 = vmatpush.bf16.msra.mxu0 0
        %1532 = vmatpush.bf16.msra.mxu0 0
        %1533 = vmatpush.bf16.msra.mxu0 %v1521
        %1534 = vmatmul.bf16.gmra.mxu0 %v1524
        %v1535 = vpop.f32.mrf.mxu0
        %v1536 = vadd.f32 0.0, %v1535
        %v1537 = vpop.f32.mrf.mxu0
        %v1538 = vadd.f32 0.0, %v1537
        %1539 = vdwg.mxu0
        %v1542 = vunpack.c.l.b16 %v1482
        %v1543 = vunpack.c.l.b16 %v1483
        %v1544 = vpack.c.b16 %v1543, %v1542
        %v1547 = vunpack.c.l.b16 %v1309
        %v1548 = vunpack.c.l.b16 %v1310
        %v1549 = vpack.c.b16 %v1548, %v1547
        %v1552 = vsel %vm1411, %v1544, 0
        %1554 = vmatpush.bf16.msra.mxu0 0
        %1555 = vmatpush.bf16.msra.mxu0 0
        %1556 = vmatpush.bf16.msra.mxu0 0
        %1557 = vmatpush.bf16.msra.mxu0 0
        %1558 = vmatpush.bf16.msra.mxu0 0
        %1559 = vmatpush.bf16.msra.mxu0 0
        %1560 = vmatpush.bf16.msra.mxu0 0
        %1561 = vmatpush.bf16.msra.mxu0 %v1549
        %1562 = vmatmul.bf16.gmra.mxu0 %v1552
        %v1563 = vpop.f32.mrf.mxu0
        %v1564 = vadd.f32 0.0, %v1563
        %v1565 = vpop.f32.mrf.mxu0
        %v1566 = vadd.f32 0.0, %v1565
        %1567 = vdwg.mxu0
        %1568 = vrot.lane.b32.xlu0 %v1324, 64
        %v1569 = vpop.permute.xlu0 %1568
        %1570 = vrot.lane.b32.xlu0 %v1329, 64
        %v1571 = vpop.permute.xlu0 %1570
        %v1573 = vsel %vm1330, %v1569, 0
        %v1576 = vsel %vm1330, %v1571, 0
        %1578 = vmatpush.bf16.xpose.msra.mxu0 0
        %1579 = vmatpush.bf16.xpose.msra.mxu0 0
        %1580 = vmatpush.bf16.xpose.msra.mxu0 0
        %1581 = vmatpush.bf16.xpose.msra.mxu0 0
        %1582 = vmatpush.bf16.xpose.msra.mxu0 0
        %1583 = vmatpush.bf16.xpose.msra.mxu0 0
        %1584 = vmatpush.bf16.xpose.msra.mxu0 0
        %1585 = vmatpush.bf16.xpose.msra.mxu0 %v1576
        %1586 = vmatmul.bf16.gmra.mxu0 %v1573
        %v1587 = vpop.f32.mrf.mxu0
        %v1588 = vadd.f32 %v1318, %v1587
        %v1589 = vpop.f32.mrf.mxu0
        %v1590 = vadd.f32 %v1319, %v1589
        %1591 = vdwg.mxu0
        %1592 = vrot.lane.b32.xlu0 %v1355, 64
        %v1593 = vpop.permute.xlu0 %1592
        %1594 = vrot.lane.b32.xlu0 %v1360, 64
        %v1595 = vpop.permute.xlu0 %1594
        %v1597 = vsel %vm1330, %v1593, 0
        %v1600 = vsel %vm1330, %v1595, 0
        %1602 = vmatpush.bf16.xpose.msra.mxu0 0
        %1603 = vmatpush.bf16.xpose.msra.mxu0 0
        %1604 = vmatpush.bf16.xpose.msra.mxu0 0
        %1605 = vmatpush.bf16.xpose.msra.mxu0 0
        %1606 = vmatpush.bf16.xpose.msra.mxu0 0
        %1607 = vmatpush.bf16.xpose.msra.mxu0 0
        %1608 = vmatpush.bf16.xpose.msra.mxu0 0
        %1609 = vmatpush.bf16.xpose.msra.mxu0 %v1600
        %1610 = vmatmul.bf16.gmra.mxu0 %v1597
        %v1611 = vpop.f32.mrf.mxu0
        %v1612 = vadd.f32 %v1318, %v1611
        %v1613 = vpop.f32.mrf.mxu0
        %v1614 = vadd.f32 %v1319, %v1613
        %1615 = vdwg.mxu0
        %1616 = vrot.lane.b32.xlu0 %v1385, 64
        %v1617 = vpop.permute.xlu0 %1616
        %1618 = vrot.lane.b32.xlu0 %v1390, 64
        %v1619 = vpop.permute.xlu0 %1618
        %v1621 = vsel %vm1330, %v1617, 0
        %v1624 = vsel %vm1330, %v1619, 0
        %1626 = vmatpush.bf16.xpose.msra.mxu0 0
        %1627 = vmatpush.bf16.xpose.msra.mxu0 0
        %1628 = vmatpush.bf16.xpose.msra.mxu0 0
        %1629 = vmatpush.bf16.xpose.msra.mxu0 0
        %1630 = vmatpush.bf16.xpose.msra.mxu0 0
        %1631 = vmatpush.bf16.xpose.msra.mxu0 0
        %1632 = vmatpush.bf16.xpose.msra.mxu0 0
        %1633 = vmatpush.bf16.xpose.msra.mxu0 %v1624
        %1634 = vmatmul.bf16.gmra.mxu0 %v1621
        %v1635 = vpop.f32.mrf.mxu0
        %v1636 = vadd.f32 %v1318, %v1635
        %v1637 = vpop.f32.mrf.mxu0
        %v1638 = vadd.f32 %v1319, %v1637
        %1639 = vdwg.mxu0
        %v1640 = vsel %vm1411, %v1588, -inf
        %1641 = vmax.xlane.f32.xlu0 %v1640
        %v1642 = vpop.xlane.xlu0 %1641
        %v1643 = vsel %vm1411, %v1590, -inf
        %1644 = vmax.xlane.f32.xlu0 %v1643
        %v1645 = vpop.xlane.xlu0 %1644
        %v1646 = vsel %vm1411, %v1612, -inf
        %1647 = vmax.xlane.f32.xlu0 %v1646
        %v1648 = vpop.xlane.xlu0 %1647
        %v1649 = vsel %vm1411, %v1614, -inf
        %1650 = vmax.xlane.f32.xlu0 %v1649
        %v1651 = vpop.xlane.xlu0 %1650
        %v1652 = vsel %vm1411, %v1636, -inf
        %1653 = vmax.xlane.f32.xlu0 %v1652
        %v1654 = vpop.xlane.xlu0 %1653
        %v1655 = vsel %vm1411, %v1638, -inf
        %1656 = vmax.xlane.f32.xlu0 %v1655
        %v1657 = vpop.xlane.xlu0 %1656
        %v1658 = vsub.f32 %v1588, %v1642
        %v1659 = vsub.f32 %v1590, %v1645
        %v1660 = vsub.f32 %v1612, %v1648
        %v1661 = vsub.f32 %v1614, %v1651
        %v1662 = vsub.f32 %v1636, %v1654
        %v1663 = vsub.f32 %v1638, %v1657
        %v1664 = vmul.f32 %v1658, 1.442695
        %v1665 = vpow.pop %v1664
        %v1666 = vmul.f32 %v1659, 1.442695
        %v1667 = vpow.pop %v1666
        %v1668 = vmul.f32 %v1660, 1.442695
        %v1669 = vpow.pop %v1668
        %v1670 = vmul.f32 %v1661, 1.442695
        %v1671 = vpow.pop %v1670
        %v1672 = vmul.f32 %v1662, 1.442695
        %v1673 = vpow.pop %v1672
        %v1674 = vmul.f32 %v1663, 1.442695
        %v1675 = vpow.pop %v1674
        %v1676 = vsel %vm1411, %v1665, 0.0
        %1677 = vadd.xlane.f32.xlu0 %v1676
        %v1678 = vpop.xlane.xlu0 %1677
        %v1679 = vsel %vm1411, %v1667, 0.0
        %1680 = vadd.xlane.f32.xlu0 %v1679
        %v1681 = vpop.xlane.xlu0 %1680
        %v1682 = vsel %vm1411, %v1669, 0.0
        %1683 = vadd.xlane.f32.xlu0 %v1682
        %v1684 = vpop.xlane.xlu0 %1683
        %v1685 = vsel %vm1411, %v1671, 0.0
        %1686 = vadd.xlane.f32.xlu0 %v1685
        %v1687 = vpop.xlane.xlu0 %1686
        %v1688 = vsel %vm1411, %v1673, 0.0
        %1689 = vadd.xlane.f32.xlu0 %v1688
        %v1690 = vpop.xlane.xlu0 %1689
        %v1691 = vsel %vm1411, %v1675, 0.0
        %1692 = vadd.xlane.f32.xlu0 %v1691
        %v1693 = vpop.xlane.xlu0 %1692
        %v1694 = vrcp.pop %v1678
        %v1695 = vrcp.pop %v1681
        %v1696 = vrcp.pop %v1684
        %v1697 = vrcp.pop %v1687
        %v1698 = vrcp.pop %v1690
        %v1699 = vrcp.pop %v1693
        %v1700 = vmul.f32 %v1665, %v1694
        %v1701 = vmul.f32 %v1667, %v1695
        %v1702 = vmul.f32 %v1669, %v1696
        %v1703 = vmul.f32 %v1671, %v1697
        %v1704 = vmul.f32 %v1673, %v1698
        %v1705 = vmul.f32 %v1675, %v1699
        %v1706 = vpack.c.bf16 %v1700, %v1700
        %v1707 = vpack.c.bf16 %v1701, %v1701
        %v1708 = vpack.c.bf16 %v1702, %v1702
        %v1709 = vpack.c.bf16 %v1703, %v1703
        %v1710 = vpack.c.bf16 %v1704, %v1704
        %v1711 = vpack.c.bf16 %v1705, %v1705
        %v1714 = vunpack.c.l.b16 %v1706
        %v1715 = vunpack.c.l.b16 %v1707
        %v1716 = vpack.c.b16 %v1715, %v1714
        %1717 = vrot.lane.b32.xlu0 %v1493, 64
        %v1718 = vpop.permute.xlu0 %1717
        %v1721 = vsel %vm1411, %v1716, 0
        %1723 = vmatpush.bf16.msra.mxu0 0
        %1724 = vmatpush.bf16.msra.mxu0 0
        %1725 = vmatpush.bf16.msra.mxu0 0
        %1726 = vmatpush.bf16.msra.mxu0 0
        %1727 = vmatpush.bf16.msra.mxu0 0
        %1728 = vmatpush.bf16.msra.mxu0 0
        %1729 = vmatpush.bf16.msra.mxu0 0
        %1730 = vmatpush.bf16.msra.mxu0 %v1718
        %1731 = vmatmul.bf16.gmra.mxu0 %v1721
        %v1732 = vpop.f32.mrf.mxu0
        %v1733 = vadd.f32 0.0, %v1732
        %v1734 = vpop.f32.mrf.mxu0
        %v1735 = vadd.f32 0.0, %v1734
        %1736 = vdwg.mxu0
        %v1739 = vunpack.c.l.b16 %v1708
        %v1740 = vunpack.c.l.b16 %v1709
        %v1741 = vpack.c.b16 %v1740, %v1739
        %1742 = vrot.lane.b32.xlu0 %v1521, 64
        %v1743 = vpop.permute.xlu0 %1742
        %v1746 = vsel %vm1411, %v1741, 0
        %1748 = vmatpush.bf16.msra.mxu0 0
        %1749 = vmatpush.bf16.msra.mxu0 0
        %1750 = vmatpush.bf16.msra.mxu0 0
        %1751 = vmatpush.bf16.msra.mxu0 0
        %1752 = vmatpush.bf16.msra.mxu0 0
        %1753 = vmatpush.bf16.msra.mxu0 0
        %1754 = vmatpush.bf16.msra.mxu0 0
        %1755 = vmatpush.bf16.msra.mxu0 %v1743
        %1756 = vmatmul.bf16.gmra.mxu0 %v1746
        %v1757 = vpop.f32.mrf.mxu0
        %v1758 = vadd.f32 0.0, %v1757
        %v1759 = vpop.f32.mrf.mxu0
        %v1760 = vadd.f32 0.0, %v1759
        %1761 = vdwg.mxu0
        %v1764 = vunpack.c.l.b16 %v1710
        %v1765 = vunpack.c.l.b16 %v1711
        %v1766 = vpack.c.b16 %v1765, %v1764
        %1767 = vrot.lane.b32.xlu0 %v1549, 64
        %v1768 = vpop.permute.xlu0 %1767
        %v1771 = vsel %vm1411, %v1766, 0
        %1773 = vmatpush.bf16.msra.mxu0 0
        %1774 = vmatpush.bf16.msra.mxu0 0
        %1775 = vmatpush.bf16.msra.mxu0 0
        %1776 = vmatpush.bf16.msra.mxu0 0
        %1777 = vmatpush.bf16.msra.mxu0 0
        %1778 = vmatpush.bf16.msra.mxu0 0
        %1779 = vmatpush.bf16.msra.mxu0 0
        %1780 = vmatpush.bf16.msra.mxu0 %v1768
        %1781 = vmatmul.bf16.gmra.mxu0 %v1771
        %v1782 = vpop.f32.mrf.mxu0
        %v1783 = vadd.f32 0.0, %v1782
        %v1784 = vpop.f32.mrf.mxu0
        %v1785 = vadd.f32 0.0, %v1784
        %1786 = vdwg.mxu0
        %1793 = vrot.lane.b32.xlu0 %v1733, 64
        %v1794 = vpop.permute.xlu0 %1793
        %1795 = vrot.lane.b32.xlu0 %v1735, 64
        %v1796 = vpop.permute.xlu0 %1795
        %1797 = vrot.lane.b32.xlu0 %v1758, 64
        %v1798 = vpop.permute.xlu0 %1797
        %1799 = vrot.lane.b32.xlu0 %v1760, 64
        %v1800 = vpop.permute.xlu0 %1799
        %1801 = vrot.lane.b32.xlu0 %v1783, 64
        %v1802 = vpop.permute.xlu0 %1801
        %1803 = vrot.lane.b32.xlu0 %v1785, 64
        %v1804 = vpop.permute.xlu0 %1803
        %v1811 = vsel %vm1330, %v1508, %v1794
        %v1812 = vsel %vm1330, %v1510, %v1796
        %v1813 = vsel %vm1330, %v1536, %v1798
        %v1814 = vsel %vm1330, %v1538, %v1800
        %v1815 = vsel %vm1330, %v1564, %v1802
        %v1816 = vsel %vm1330, %v1566, %v1804
        %v1817 = vpack.c.bf16 %v1812, %v1811
        %v1818 = vpack.c.bf16 %v1814, %v1813
        %v1819 = vpack.c.bf16 %v1816, %v1815
        %v1820 = vld [vmem:[%s722] sm:$0xf]
        %v1821 = vld [vmem:[%s722 + $0x4] sm:$0xf]
        %v1822 = vld [vmem:[%s722 + $0x8] sm:$0xf]
        %v1823 = vld [vmem:[%s722 + $0xc] sm:$0xf]
        %v1824 = vld [vmem:[%s722 + $0x10] sm:$0xf]
        %v1825 = vld [vmem:[%s722 + $0x14] sm:$0xf]
        %v1826 = vld [vmem:[%s722 + $0x18] sm:$0xf]
        %v1827 = vld [vmem:[%s722 + $0x1c] sm:$0xf]
        %v1828 = vld [vmem:[%s722 + $0x20] sm:$0xf]
        %v1829 = vld [vmem:[%s722 + $0x24] sm:$0xf]
        %v1830 = vld [vmem:[%s722 + $0x28] sm:$0xf]
        %v1831 = vld [vmem:[%s722 + $0x2c] sm:$0xf]
        %v1832 = vld [vmem:[%s722 + $0x30] sm:$0xf]
        %v1833 = vld [vmem:[%s722 + $0x34] sm:$0xf]
        %v1834 = vld [vmem:[%s722 + $0x38] sm:$0xf]
        %v1835 = vld [vmem:[%s722 + $0x3c] sm:$0xf]
        %v1836 = vld [vmem:[%s731] sm:$0x1]
        %v1838 = vperm.slane %v1836, 0
        %v1856 = vunpack.c.l.b16 %v1820
        %v1857 = vunpack.c.l.b16 %v1821
        %v1858 = vunpack.c.l.b16 %v1822
        %v1859 = vunpack.c.l.b16 %v1823
        %v1860 = vunpack.c.l.b16 %v1824
        %v1861 = vunpack.c.l.b16 %v1825
        %v1862 = vunpack.c.l.b16 %v1826
        %v1863 = vunpack.c.l.b16 %v1827
        %v1864 = vunpack.c.l.b16 %v1828
        %v1865 = vunpack.c.l.b16 %v1829
        %v1866 = vunpack.c.l.b16 %v1830
        %v1867 = vunpack.c.l.b16 %v1831
        %v1868 = vunpack.c.l.b16 %v1832
        %v1869 = vunpack.c.l.b16 %v1833
        %v1870 = vunpack.c.l.b16 %v1834
        %v1871 = vunpack.c.l.b16 %v1835
        %v1872 = vpack.c.b16 %v1857, %v1856
        %v1873 = vpack.c.b16 %v1859, %v1858
        %v1874 = vpack.c.b16 %v1861, %v1860
        %v1875 = vpack.c.b16 %v1863, %v1862
        %v1876 = vpack.c.b16 %v1865, %v1864
        %v1877 = vpack.c.b16 %v1867, %v1866
        %v1878 = vpack.c.b16 %v1869, %v1868
        %v1879 = vpack.c.b16 %v1871, %v1870
        %1888 = vmatpush.bf16.msra.mxu0 %v1879
        %1889 = vmatpush.bf16.msra.mxu0 %v1878
        %1890 = vmatpush.bf16.msra.mxu0 %v1877
        %1891 = vmatpush.bf16.msra.mxu0 %v1876
        %1892 = vmatpush.bf16.msra.mxu0 %v1875
        %1893 = vmatpush.bf16.msra.mxu0 %v1874
        %1894 = vmatpush.bf16.msra.mxu0 %v1873
        %1895 = vmatpush.bf16.msra.mxu0 %v1872
        %1896 = vmatmul.bf16.gmra.mxu0 %v1817
        %v1897 = vpop.f32.mrf.mxu0
        %v1898 = vadd.f32 %v1838, %v1897
        %v1899 = vpop.f32.mrf.mxu0
        %v1900 = vadd.f32 %v1838, %v1899
        %1901 = vmatmul.bf16.gmra.mxu0 %v1818
        %v1902 = vpop.f32.mrf.mxu0
        %v1903 = vadd.f32 %v1838, %v1902
        %v1904 = vpop.f32.mrf.mxu0
        %v1905 = vadd.f32 %v1838, %v1904
        %1906 = vmatmul.bf16.gmra.mxu0 %v1819
        %v1907 = vpop.f32.mrf.mxu0
        %v1908 = vadd.f32 %v1838, %v1907
        %v1909 = vpop.f32.mrf.mxu0
        %v1910 = vadd.f32 %v1838, %v1909
        %1911 = vdwg.mxu0
        %v1912 = vadd.f32 %v891, %v1898
        %v1913 = vadd.f32 %v892, %v1900
        %v1914 = vadd.f32 %v893, %v1903
        %v1915 = vadd.f32 %v894, %v1905
        %v1916 = vadd.f32 %v895, %v1908
        %v1917 = vadd.f32 %v896, %v1910
        %v1918 = vld [vmem:[%s740] sm:$0x1]
        %v1919 = vld [vmem:[%s749] sm:$0x1]
        %1920 = vadd.xlane.f32.xlu0 %v1912
        %v1921 = vpop.xlane.xlu0 %1920
        %1922 = vadd.xlane.f32.xlu0 %v1913
        %v1923 = vpop.xlane.xlu0 %1922
        %1924 = vadd.xlane.f32.xlu0 %v1914
        %v1925 = vpop.xlane.xlu0 %1924
        %1926 = vadd.xlane.f32.xlu0 %v1915
        %v1927 = vpop.xlane.xlu0 %1926
        %1928 = vadd.xlane.f32.xlu0 %v1916
        %v1929 = vpop.xlane.xlu0 %1928
        %1930 = vadd.xlane.f32.xlu0 %v1917
        %v1931 = vpop.xlane.xlu0 %1930
        %v1932 = vmul.f32 %v1921, %v917
        %v1933 = vmul.f32 %v1923, %v917
        %v1934 = vmul.f32 %v1925, %v917
        %v1935 = vmul.f32 %v1927, %v917
        %v1936 = vmul.f32 %v1929, %v917
        %v1937 = vmul.f32 %v1931, %v917
        %v1938 = vsub.f32 %v1912, %v1932
        %v1939 = vsub.f32 %v1913, %v1933
        %v1940 = vsub.f32 %v1914, %v1934
        %v1941 = vsub.f32 %v1915, %v1935
        %v1942 = vsub.f32 %v1916, %v1936
        %v1943 = vsub.f32 %v1917, %v1937
        %v1944 = vmul.f32 %v1938, %v1938
        %v1945 = vmul.f32 %v1939, %v1939
        %v1946 = vmul.f32 %v1940, %v1940
        %v1947 = vmul.f32 %v1941, %v1941
        %v1948 = vmul.f32 %v1942, %v1942
        %v1949 = vmul.f32 %v1943, %v1943
        %1950 = vadd.xlane.f32.xlu0 %v1944
        %v1951 = vpop.xlane.xlu0 %1950
        %1952 = vadd.xlane.f32.xlu0 %v1945
        %v1953 = vpop.xlane.xlu0 %1952
        %1954 = vadd.xlane.f32.xlu0 %v1946
        %v1955 = vpop.xlane.xlu0 %1954
        %1956 = vadd.xlane.f32.xlu0 %v1947
        %v1957 = vpop.xlane.xlu0 %1956
        %1958 = vadd.xlane.f32.xlu0 %v1948
        %v1959 = vpop.xlane.xlu0 %1958
        %1960 = vadd.xlane.f32.xlu0 %v1949
        %v1961 = vpop.xlane.xlu0 %1960
        %v1962 = vmul.f32 %v1951, %v917
        %v1963 = vmul.f32 %v1953, %v917
        %v1964 = vmul.f32 %v1955, %v917
        %v1965 = vmul.f32 %v1957, %v917
        %v1966 = vmul.f32 %v1959, %v917
        %v1967 = vmul.f32 %v1961, %v917
        %v1968 = vadd.f32 %v1962, 1e-05
        %v1969 = vadd.f32 %v1963, 1e-05
        %v1970 = vadd.f32 %v1964, 1e-05
        %v1971 = vadd.f32 %v1965, 1e-05
        %v1972 = vadd.f32 %v1966, 1e-05
        %v1973 = vadd.f32 %v1967, 1e-05
        %v1974 = vrsqrt.pop %v1968
        %v1975 = vmul.f32 %v1974, %v1968
        %v1976 = vmul.f32 %v1975, %v1974
        %v1977 = vmul.f32 0.5, %v1976
        %v1978 = vsub.f32 1.5, %v1977
        %v1979 = vmul.f32 %v1974, %v1978
        %vm1980 = vweird.f32 %v1968
        %vm1981 = vweird.f32 %v1974
        %vm1982 = vmor %vm1980, %vm1981
        %v1983 = vsel %vm1982, %v1974, %v1979
        %v1984 = vrsqrt.pop %v1969
        %v1985 = vmul.f32 %v1984, %v1969
        %v1986 = vmul.f32 %v1985, %v1984
        %v1987 = vmul.f32 0.5, %v1986
        %v1988 = vsub.f32 1.5, %v1987
        %v1989 = vmul.f32 %v1984, %v1988
        %vm1990 = vweird.f32 %v1969
        %vm1991 = vweird.f32 %v1984
        %vm1992 = vmor %vm1990, %vm1991
        %v1993 = vsel %vm1992, %v1984, %v1989
        %v1994 = vrsqrt.pop %v1970
        %v1995 = vmul.f32 %v1994, %v1970
        %v1996 = vmul.f32 %v1995, %v1994
        %v1997 = vmul.f32 0.5, %v1996
        %v1998 = vsub.f32 1.5, %v1997
        %v1999 = vmul.f32 %v1994, %v1998
        %vm2000 = vweird.f32 %v1970
        %vm2001 = vweird.f32 %v1994
        %vm2002 = vmor %vm2000, %vm2001
        %v2003 = vsel %vm2002, %v1994, %v1999
        %v2004 = vrsqrt.pop %v1971
        %v2005 = vmul.f32 %v2004, %v1971
        %v2006 = vmul.f32 %v2005, %v2004
        %v2007 = vmul.f32 0.5, %v2006
        %v2008 = vsub.f32 1.5, %v2007
        %v2009 = vmul.f32 %v2004, %v2008
        %vm2010 = vweird.f32 %v1971
        %vm2011 = vweird.f32 %v2004
        %vm2012 = vmor %vm2010, %vm2011
        %v2013 = vsel %vm2012, %v2004, %v2009
        %v2014 = vrsqrt.pop %v1972
        %v2015 = vmul.f32 %v2014, %v1972
        %v2016 = vmul.f32 %v2015, %v2014
        %v2017 = vmul.f32 0.5, %v2016
        %v2018 = vsub.f32 1.5, %v2017
        %v2019 = vmul.f32 %v2014, %v2018
        %vm2020 = vweird.f32 %v1972
        %vm2021 = vweird.f32 %v2014
        %vm2022 = vmor %vm2020, %vm2021
        %v2023 = vsel %vm2022, %v2014, %v2019
        %v2024 = vrsqrt.pop %v1973
        %v2025 = vmul.f32 %v2024, %v1973
        %v2026 = vmul.f32 %v2025, %v2024
        %v2027 = vmul.f32 0.5, %v2026
        %v2028 = vsub.f32 1.5, %v2027
        %v2029 = vmul.f32 %v2024, %v2028
        %vm2030 = vweird.f32 %v1973
        %vm2031 = vweird.f32 %v2024
        %vm2032 = vmor %vm2030, %vm2031
        %v2033 = vsel %vm2032, %v2024, %v2029
        %v2034 = vmul.f32 %v1938, %v1983
        %v2035 = vmul.f32 %v1939, %v1993
        %v2036 = vmul.f32 %v1940, %v2003
        %v2037 = vmul.f32 %v1941, %v2013
        %v2038 = vmul.f32 %v1942, %v2023
        %v2039 = vmul.f32 %v1943, %v2033
        %v2041 = vperm.slane %v1918, 0
        %v2043 = vmul.f32 %v2034, %v2041
        %v2044 = vmul.f32 %v2035, %v2041
        %v2045 = vmul.f32 %v2036, %v2041
        %v2046 = vmul.f32 %v2037, %v2041
        %v2047 = vmul.f32 %v2038, %v2041
        %v2048 = vmul.f32 %v2039, %v2041
        %v2050 = vperm.slane %v1919, 0
        %v2052 = vadd.f32 %v2043, %v2050
        %v2053 = vadd.f32 %v2044, %v2050
        %v2054 = vadd.f32 %v2045, %v2050
        %v2055 = vadd.f32 %v2046, %v2050
        %v2056 = vadd.f32 %v2047, %v2050
        %v2057 = vadd.f32 %v2048, %v2050
        %v2058 = vpack.c.bf16 %v2053, %v2052
        %v2059 = vpack.c.bf16 %v2055, %v2054
        %v2060 = vpack.c.bf16 %v2057, %v2056
        %v2061 = vld [vmem:[%s759] sm:$0xff]
        %v2062 = vld [vmem:[%s759 + $0x8] sm:$0xff]
        %v2063 = vld [vmem:[%s759 + $0x10] sm:$0xff]
        %v2064 = vld [vmem:[%s759 + $0x18] sm:$0xff]
        %v2065 = vld [vmem:[%s759 + $0x20] sm:$0xff]
        %v2066 = vld [vmem:[%s759 + $0x28] sm:$0xff]
        %v2067 = vld [vmem:[%s759 + $0x30] sm:$0xff]
        %v2068 = vld [vmem:[%s759 + $0x38] sm:$0xff]
        %v2069 = vld [vmem:[%s759 + $0x40] sm:$0xff]
        %v2070 = vld [vmem:[%s759 + $0x48] sm:$0xff]
        %v2071 = vld [vmem:[%s759 + $0x50] sm:$0xff]
        %v2072 = vld [vmem:[%s759 + $0x58] sm:$0xff]
        %v2073 = vld [vmem:[%s759 + $0x60] sm:$0xff]
        %v2074 = vld [vmem:[%s759 + $0x68] sm:$0xff]
        %v2075 = vld [vmem:[%s759 + $0x70] sm:$0xff]
        %v2076 = vld [vmem:[%s759 + $0x78] sm:$0xff]
        %v2077 = vld [vmem:[%s759 + $0x80] sm:$0xff]
        %v2078 = vld [vmem:[%s759 + $0x88] sm:$0xff]
        %v2079 = vld [vmem:[%s759 + $0x90] sm:$0xff]
        %v2080 = vld [vmem:[%s759 + $0x98] sm:$0xff]
        %v2081 = vld [vmem:[%s759 + $0xa0] sm:$0xff]
        %v2082 = vld [vmem:[%s759 + $0xa8] sm:$0xff]
        %v2083 = vld [vmem:[%s759 + $0xb0] sm:$0xff]
        %v2084 = vld [vmem:[%s759 + $0xb8] sm:$0xff]
        %v2085 = vld [vmem:[%s759 + $0xc0] sm:$0xff]
        %v2086 = vld [vmem:[%s759 + $0xc8] sm:$0xff]
        %v2087 = vld [vmem:[%s759 + $0xd0] sm:$0xff]
        %v2088 = vld [vmem:[%s759 + $0xd8] sm:$0xff]
        %v2089 = vld [vmem:[%s759 + $0xe0] sm:$0xff]
        %v2090 = vld [vmem:[%s759 + $0xe8] sm:$0xff]
        %v2091 = vld [vmem:[%s759 + $0xf0] sm:$0xff]
        %v2092 = vld [vmem:[%s759 + $0xf8] sm:$0xff]
        %v2093 = vld [vmem:[%s869] sm:$0xf]
        %v2095 = vperm.slane %v2093, 0
        %v2096 = vperm.slane %v2093, 1
        %v2097 = vperm.slane %v2093, 2
        %v2098 = vperm.slane %v2093, 3
        %v2135 = vunpack.c.l.b16 %v2061
        %v2136 = vunpack.c.h.b16 %v2061
        %v2137 = vunpack.c.l.b16 %v2062
        %v2138 = vunpack.c.h.b16 %v2062
        %v2139 = vunpack.c.l.b16 %v2063
        %v2140 = vunpack.c.h.b16 %v2063
        %v2141 = vunpack.c.l.b16 %v2064
        %v2142 = vunpack.c.h.b16 %v2064
        %v2143 = vunpack.c.l.b16 %v2065
        %v2144 = vunpack.c.h.b16 %v2065
        %v2145 = vunpack.c.l.b16 %v2066
        %v2146 = vunpack.c.h.b16 %v2066
        %v2147 = vunpack.c.l.b16 %v2067
        %v2148 = vunpack.c.h.b16 %v2067
        %v2149 = vunpack.c.l.b16 %v2068
        %v2150 = vunpack.c.h.b16 %v2068
        %v2151 = vunpack.c.l.b16 %v2069
        %v2152 = vunpack.c.h.b16 %v2069
        %v2153 = vunpack.c.l.b16 %v2070
        %v2154 = vunpack.c.h.b16 %v2070
        %v2155 = vunpack.c.l.b16 %v2071
        %v2156 = vunpack.c.h.b16 %v2071
        %v2157 = vunpack.c.l.b16 %v2072
        %v2158 = vunpack.c.h.b16 %v2072
        %v2159 = vunpack.c.l.b16 %v2073
        %v2160 = vunpack.c.h.b16 %v2073
        %v2161 = vunpack.c.l.b16 %v2074
        %v2162 = vunpack.c.h.b16 %v2074
        %v2163 = vunpack.c.l.b16 %v2075
        %v2164 = vunpack.c.h.b16 %v2075
        %v2165 = vunpack.c.l.b16 %v2076
        %v2166 = vunpack.c.h.b16 %v2076
        %v2167 = vunpack.c.l.b16 %v2077
        %v2168 = vunpack.c.h.b16 %v2077
        %v2169 = vunpack.c.l.b16 %v2078
        %v2170 = vunpack.c.h.b16 %v2078
        %v2171 = vunpack.c.l.b16 %v2079
        %v2172 = vunpack.c.h.b16 %v2079
        %v2173 = vunpack.c.l.b16 %v2080
        %v2174 = vunpack.c.h.b16 %v2080
        %v2175 = vunpack.c.l.b16 %v2081
        %v2176 = vunpack.c.h.b16 %v2081
        %v2177 = vunpack.c.l.b16 %v2082
        %v2178 = vunpack.c.h.b16 %v2082
        %v2179 = vunpack.c.l.b16 %v2083
        %v2180 = vunpack.c.h.b16 %v2083
        %v2181 = vunpack.c.l.b16 %v2084
        %v2182 = vunpack.c.h.b16 %v2084
        %v2183 = vunpack.c.l.b16 %v2085
        %v2184 = vunpack.c.h.b16 %v2085
        %v2185 = vunpack.c.l.b16 %v2086
        %v2186 = vunpack.c.h.b16 %v2086
        %v2187 = vunpack.c.l.b16 %v2087
        %v2188 = vunpack.c.h.b16 %v2087
        %v2189 = vunpack.c.l.b16 %v2088
        %v2190 = vunpack.c.h.b16 %v2088
        %v2191 = vunpack.c.l.b16 %v2089
        %v2192 = vunpack.c.h.b16 %v2089
        %v2193 = vunpack.c.l.b16 %v2090
        %v2194 = vunpack.c.h.b16 %v2090
        %v2195 = vunpack.c.l.b16 %v2091
        %v2196 = vunpack.c.h.b16 %v2091
        %v2197 = vunpack.c.l.b16 %v2092
        %v2198 = vunpack.c.h.b16 %v2092
        %v2199 = vpack.c.b16 %v2139, %v2135
        %v2200 = vpack.c.b16 %v2140, %v2136
        %v2201 = vpack.c.b16 %v2141, %v2137
        %v2202 = vpack.c.b16 %v2142, %v2138
        %v2203 = vpack.c.b16 %v2147, %v2143
        %v2204 = vpack.c.b16 %v2148, %v2144
        %v2205 = vpack.c.b16 %v2149, %v2145
        %v2206 = vpack.c.b16 %v2150, %v2146
        %v2207 = vpack.c.b16 %v2155, %v2151
        %v2208 = vpack.c.b16 %v2156, %v2152
        %v2209 = vpack.c.b16 %v2157, %v2153
        %v2210 = vpack.c.b16 %v2158, %v2154
        %v2211 = vpack.c.b16 %v2163, %v2159
        %v2212 = vpack.c.b16 %v2164, %v2160
        %v2213 = vpack.c.b16 %v2165, %v2161
        %v2214 = vpack.c.b16 %v2166, %v2162
        %v2215 = vpack.c.b16 %v2171, %v2167
        %v2216 = vpack.c.b16 %v2172, %v2168
        %v2217 = vpack.c.b16 %v2173, %v2169
        %v2218 = vpack.c.b16 %v2174, %v2170
        %v2219 = vpack.c.b16 %v2179, %v2175
        %v2220 = vpack.c.b16 %v2180, %v2176
        %v2221 = vpack.c.b16 %v2181, %v2177
        %v2222 = vpack.c.b16 %v2182, %v2178
        %v2223 = vpack.c.b16 %v2187, %v2183
        %v2224 = vpack.c.b16 %v2188, %v2184
        %v2225 = vpack.c.b16 %v2189, %v2185
        %v2226 = vpack.c.b16 %v2190, %v2186
        %v2227 = vpack.c.b16 %v2195, %v2191
        %v2228 = vpack.c.b16 %v2196, %v2192
        %v2229 = vpack.c.b16 %v2197, %v2193
        %v2230 = vpack.c.b16 %v2198, %v2194
        %2263 = vmatpush.bf16.msra.mxu0 %v2227
        %2264 = vmatpush.bf16.msra.mxu0 %v2223
        %2265 = vmatpush.bf16.msra.mxu0 %v2219
        %2266 = vmatpush.bf16.msra.mxu0 %v2215
        %2267 = vmatpush.bf16.msra.mxu0 %v2211
        %2268 = vmatpush.bf16.msra.mxu0 %v2207
        %2269 = vmatpush.bf16.msra.mxu0 %v2203
        %2270 = vmatpush.bf16.msra.mxu0 %v2199
        %2271 = vmatmul.bf16.gmra.mxu0 %v2058
        %v2272 = vpop.f32.mrf.mxu0
        %v2273 = vadd.f32 %v2095, %v2272
        %v2274 = vpop.f32.mrf.mxu0
        %v2275 = vadd.f32 %v2095, %v2274
        %2276 = vmatmul.bf16.gmra.mxu0 %v2059
        %v2277 = vpop.f32.mrf.mxu0
        %v2278 = vadd.f32 %v2095, %v2277
        %v2279 = vpop.f32.mrf.mxu0
        %v2280 = vadd.f32 %v2095, %v2279
        %2281 = vmatmul.bf16.gmra.mxu0 %v2060
        %v2282 = vpop.f32.mrf.mxu0
        %v2283 = vadd.f32 %v2095, %v2282
        %v2284 = vpop.f32.mrf.mxu0
        %v2285 = vadd.f32 %v2095, %v2284
        %2286 = vdwg.mxu0
        %2287 = vmatpush.bf16.msra.mxu0 %v2228
        %2288 = vmatpush.bf16.msra.mxu0 %v2224
        %2289 = vmatpush.bf16.msra.mxu0 %v2220
        %2290 = vmatpush.bf16.msra.mxu0 %v2216
        %2291 = vmatpush.bf16.msra.mxu0 %v2212
        %2292 = vmatpush.bf16.msra.mxu0 %v2208
        %2293 = vmatpush.bf16.msra.mxu0 %v2204
        %2294 = vmatpush.bf16.msra.mxu0 %v2200
        %2295 = vmatmul.bf16.gmra.mxu0 %v2058
        %v2296 = vpop.f32.mrf.mxu0
        %v2297 = vadd.f32 %v2096, %v2296
        %v2298 = vpop.f32.mrf.mxu0
        %v2299 = vadd.f32 %v2096, %v2298
        %2300 = vmatmul.bf16.gmra.mxu0 %v2059
        %v2301 = vpop.f32.mrf.mxu0
        %v2302 = vadd.f32 %v2096, %v2301
        %v2303 = vpop.f32.mrf.mxu0
        %v2304 = vadd.f32 %v2096, %v2303
        %2305 = vmatmul.bf16.gmra.mxu0 %v2060
        %v2306 = vpop.f32.mrf.mxu0
        %v2307 = vadd.f32 %v2096, %v2306
        %v2308 = vpop.f32.mrf.mxu0
        %v2309 = vadd.f32 %v2096, %v2308
        %2310 = vdwg.mxu0
        %2311 = vmatpush.bf16.msra.mxu0 %v2229
        %2312 = vmatpush.bf16.msra.mxu0 %v2225
        %2313 = vmatpush.bf16.msra.mxu0 %v2221
        %2314 = vmatpush.bf16.msra.mxu0 %v2217
        %2315 = vmatpush.bf16.msra.mxu0 %v2213
        %2316 = vmatpush.bf16.msra.mxu0 %v2209
        %2317 = vmatpush.bf16.msra.mxu0 %v2205
        %2318 = vmatpush.bf16.msra.mxu0 %v2201
        %2319 = vmatmul.bf16.gmra.mxu0 %v2058
        %v2320 = vpop.f32.mrf.mxu0
        %v2321 = vadd.f32 %v2097, %v2320
        %v2322 = vpop.f32.mrf.mxu0
        %v2323 = vadd.f32 %v2097, %v2322
        %2324 = vmatmul.bf16.gmra.mxu0 %v2059
        %v2325 = vpop.f32.mrf.mxu0
        %v2326 = vadd.f32 %v2097, %v2325
        %v2327 = vpop.f32.mrf.mxu0
        %v2328 = vadd.f32 %v2097, %v2327
        %2329 = vmatmul.bf16.gmra.mxu0 %v2060
        %v2330 = vpop.f32.mrf.mxu0
        %v2331 = vadd.f32 %v2097, %v2330
        %v2332 = vpop.f32.mrf.mxu0
        %v2333 = vadd.f32 %v2097, %v2332
        %2334 = vdwg.mxu0
        %2335 = vmatpush.bf16.msra.mxu0 %v2230
        %2336 = vmatpush.bf16.msra.mxu0 %v2226
        %2337 = vmatpush.bf16.msra.mxu0 %v2222
        %2338 = vmatpush.bf16.msra.mxu0 %v2218
        %2339 = vmatpush.bf16.msra.mxu0 %v2214
        %2340 = vmatpush.bf16.msra.mxu0 %v2210
        %2341 = vmatpush.bf16.msra.mxu0 %v2206
        %2342 = vmatpush.bf16.msra.mxu0 %v2202
        %2343 = vmatmul.bf16.gmra.mxu0 %v2058
        %v2344 = vpop.f32.mrf.mxu0
        %v2345 = vadd.f32 %v2098, %v2344
        %v2346 = vpop.f32.mrf.mxu0
        %v2347 = vadd.f32 %v2098, %v2346
        %2348 = vmatmul.bf16.gmra.mxu0 %v2059
        %v2349 = vpop.f32.mrf.mxu0
        %v2350 = vadd.f32 %v2098, %v2349
        %v2351 = vpop.f32.mrf.mxu0
        %v2352 = vadd.f32 %v2098, %v2351
        %2353 = vmatmul.bf16.gmra.mxu0 %v2060
        %v2354 = vpop.f32.mrf.mxu0
        %v2355 = vadd.f32 %v2098, %v2354
        %v2356 = vpop.f32.mrf.mxu0
        %v2357 = vadd.f32 %v2098, %v2356
        %2358 = vdwg.mxu0
        %v2359 = vmul.f32 %v2273, 1.702
        %v2360 = vmul.f32 %v2297, 1.702
        %v2361 = vmul.f32 %v2321, 1.702
        %v2362 = vmul.f32 %v2345, 1.702
        %v2363 = vmul.f32 %v2275, 1.702
        %v2364 = vmul.f32 %v2299, 1.702
        %v2365 = vmul.f32 %v2323, 1.702
        %v2366 = vmul.f32 %v2347, 1.702
        %v2367 = vmul.f32 %v2278, 1.702
        %v2368 = vmul.f32 %v2302, 1.702
        %v2369 = vmul.f32 %v2326, 1.702
        %v2370 = vmul.f32 %v2350, 1.702
        %v2371 = vmul.f32 %v2280, 1.702
        %v2372 = vmul.f32 %v2304, 1.702
        %v2373 = vmul.f32 %v2328, 1.702
        %v2374 = vmul.f32 %v2352, 1.702
        %v2375 = vmul.f32 %v2283, 1.702
        %v2376 = vmul.f32 %v2307, 1.702
        %v2377 = vmul.f32 %v2331, 1.702
        %v2378 = vmul.f32 %v2355, 1.702
        %v2379 = vmul.f32 %v2285, 1.702
        %v2380 = vmul.f32 %v2309, 1.702
        %v2381 = vmul.f32 %v2333, 1.702
        %v2382 = vmul.f32 %v2357, 1.702
        %v2383 = vxor.u32 %v2359, 2147483648
        %v2384 = vxor.u32 %v2360, 2147483648
        %v2385 = vxor.u32 %v2361, 2147483648
        %v2386 = vxor.u32 %v2362, 2147483648
        %v2387 = vxor.u32 %v2363, 2147483648
        %v2388 = vxor.u32 %v2364, 2147483648
        %v2389 = vxor.u32 %v2365, 2147483648
        %v2390 = vxor.u32 %v2366, 2147483648
        %v2391 = vxor.u32 %v2367, 2147483648
        %v2392 = vxor.u32 %v2368, 2147483648
        %v2393 = vxor.u32 %v2369, 2147483648
        %v2394 = vxor.u32 %v2370, 2147483648
        %v2395 = vxor.u32 %v2371, 2147483648
        %v2396 = vxor.u32 %v2372, 2147483648
        %v2397 = vxor.u32 %v2373, 2147483648
        %v2398 = vxor.u32 %v2374, 2147483648
        %v2399 = vxor.u32 %v2375, 2147483648
        %v2400 = vxor.u32 %v2376, 2147483648
        %v2401 = vxor.u32 %v2377, 2147483648
        %v2402 = vxor.u32 %v2378, 2147483648
        %v2403 = vxor.u32 %v2379, 2147483648
        %v2404 = vxor.u32 %v2380, 2147483648
        %v2405 = vxor.u32 %v2381, 2147483648
        %v2406 = vxor.u32 %v2382, 2147483648
        %v2407 = vmul.f32 %v2383, 1.442695
        %v2408 = vpow.pop %v2407
        %v2409 = vmul.f32 %v2384, 1.442695
        %v2410 = vpow.pop %v2409
        %v2411 = vmul.f32 %v2385, 1.442695
        %v2412 = vpow.pop %v2411
        %v2413 = vmul.f32 %v2386, 1.442695
        %v2414 = vpow.pop %v2413
        %v2415 = vmul.f32 %v2387, 1.442695
        %v2416 = vpow.pop %v2415
        %v2417 = vmul.f32 %v2388, 1.442695
        %v2418 = vpow.pop %v2417
        %v2419 = vmul.f32 %v2389, 1.442695
        %v2420 = vpow.pop %v2419
        %v2421 = vmul.f32 %v2390, 1.442695
        %v2422 = vpow.pop %v2421
        %v2423 = vmul.f32 %v2391, 1.442695
        %v2424 = vpow.pop %v2423
        %v2425 = vmul.f32 %v2392, 1.442695
        %v2426 = vpow.pop %v2425
        %v2427 = vmul.f32 %v2393, 1.442695
        %v2428 = vpow.pop %v2427
        %v2429 = vmul.f32 %v2394, 1.442695
        %v2430 = vpow.pop %v2429
        %v2431 = vmul.f32 %v2395, 1.442695
        %v2432 = vpow.pop %v2431
        %v2433 = vmul.f32 %v2396, 1.442695
        %v2434 = vpow.pop %v2433
        %v2435 = vmul.f32 %v2397, 1.442695
        %v2436 = vpow.pop %v2435
        %v2437 = vmul.f32 %v2398, 1.442695
        %v2438 = vpow.pop %v2437
        %v2439 = vmul.f32 %v2399, 1.442695
        %v2440 = vpow.pop %v2439
        %v2441 = vmul.f32 %v2400, 1.442695
        %v2442 = vpow.pop %v2441
        %v2443 = vmul.f32 %v2401, 1.442695
        %v2444 = vpow.pop %v2443
        %v2445 = vmul.f32 %v2402, 1.442695
        %v2446 = vpow.pop %v2445
        %v2447 = vmul.f32 %v2403, 1.442695
        %v2448 = vpow.pop %v2447
        %v2449 = vmul.f32 %v2404, 1.442695
        %v2450 = vpow.pop %v2449
        %v2451 = vmul.f32 %v2405, 1.442695
        %v2452 = vpow.pop %v2451
        %v2453 = vmul.f32 %v2406, 1.442695
        %v2454 = vpow.pop %v2453
        %v2455 = vadd.f32 %v2408, 1.0
        %v2456 = vadd.f32 %v2410, 1.0
        %v2457 = vadd.f32 %v2412, 1.0
        %v2458 = vadd.f32 %v2414, 1.0
        %v2459 = vadd.f32 %v2416, 1.0
        %v2460 = vadd.f32 %v2418, 1.0
        %v2461 = vadd.f32 %v2420, 1.0
        %v2462 = vadd.f32 %v2422, 1.0
        %v2463 = vadd.f32 %v2424, 1.0
        %v2464 = vadd.f32 %v2426, 1.0
        %v2465 = vadd.f32 %v2428, 1.0
        %v2466 = vadd.f32 %v2430, 1.0
        %v2467 = vadd.f32 %v2432, 1.0
        %v2468 = vadd.f32 %v2434, 1.0
        %v2469 = vadd.f32 %v2436, 1.0
        %v2470 = vadd.f32 %v2438, 1.0
        %v2471 = vadd.f32 %v2440, 1.0
        %v2472 = vadd.f32 %v2442, 1.0
        %v2473 = vadd.f32 %v2444, 1.0
        %v2474 = vadd.f32 %v2446, 1.0
        %v2475 = vadd.f32 %v2448, 1.0
        %v2476 = vadd.f32 %v2450, 1.0
        %v2477 = vadd.f32 %v2452, 1.0
        %v2478 = vadd.f32 %v2454, 1.0
        %v2479 = vrcp.pop %v2455
        %v2480 = vmul.f32 %v2455, %v2479
        %v2481 = vsub.f32 1.0, %v2480
        %v2482 = vmul.f32 %v2479, %v2481
        %v2483 = vadd.f32 %v2479, %v2482
        %vm2484 = vweird.f32 %v2455
        %vm2485 = vweird.f32 %v2479
        %vm2486 = vmor %vm2484, %vm2485
        %v2487 = vsel %vm2486, %v2479, %v2483
        %v2488 = vand.u32 2147483647, %v2455
        %vm2489 = vcmp.eq.f32.partialorder %v2488, 8.507059e+37
        %v2490 = vand.u32 %v2455, 2147483648
        %v2491 = vor.u32 1.1754944e-38, %v2490
        %v2492 = vsel %vm2489, %v2491, %v2487
        %v2493 = vmul.f32 1.0, %v2492
        %v2494 = vrcp.pop %v2456
        %v2495 = vmul.f32 %v2456, %v2494
        %v2496 = vsub.f32 1.0, %v2495
        %v2497 = vmul.f32 %v2494, %v2496
        %v2498 = vadd.f32 %v2494, %v2497
        %vm2499 = vweird.f32 %v2456
        %vm2500 = vweird.f32 %v2494
        %vm2501 = vmor %vm2499, %vm2500
        %v2502 = vsel %vm2501, %v2494, %v2498
        %v2503 = vand.u32 2147483647, %v2456
        %vm2504 = vcmp.eq.f32.partialorder %v2503, 8.507059e+37
        %v2505 = vand.u32 %v2456, 2147483648
        %v2506 = vor.u32 1.1754944e-38, %v2505
        %v2507 = vsel %vm2504, %v2506, %v2502
        %v2508 = vmul.f32 1.0, %v2507
        %v2509 = vrcp.pop %v2457
        %v2510 = vmul.f32 %v2457, %v2509
        %v2511 = vsub.f32 1.0, %v2510
        %v2512 = vmul.f32 %v2509, %v2511
        %v2513 = vadd.f32 %v2509, %v2512
        %vm2514 = vweird.f32 %v2457
        %vm2515 = vweird.f32 %v2509
        %vm2516 = vmor %vm2514, %vm2515
        %v2517 = vsel %vm2516, %v2509, %v2513
        %v2518 = vand.u32 2147483647, %v2457
        %vm2519 = vcmp.eq.f32.partialorder %v2518, 8.507059e+37
        %v2520 = vand.u32 %v2457, 2147483648
        %v2521 = vor.u32 1.1754944e-38, %v2520
        %v2522 = vsel %vm2519, %v2521, %v2517
        %v2523 = vmul.f32 1.0, %v2522
        %v2524 = vrcp.pop %v2458
        %v2525 = vmul.f32 %v2458, %v2524
        %v2526 = vsub.f32 1.0, %v2525
        %v2527 = vmul.f32 %v2524, %v2526
        %v2528 = vadd.f32 %v2524, %v2527
        %vm2529 = vweird.f32 %v2458
        %vm2530 = vweird.f32 %v2524
        %vm2531 = vmor %vm2529, %vm2530
        %v2532 = vsel %vm2531, %v2524, %v2528
        %v2533 = vand.u32 2147483647, %v2458
        %vm2534 = vcmp.eq.f32.partialorder %v2533, 8.507059e+37
        %v2535 = vand.u32 %v2458, 2147483648
        %v2536 = vor.u32 1.1754944e-38, %v2535
        %v2537 = vsel %vm2534, %v2536, %v2532
        %v2538 = vmul.f32 1.0, %v2537
        %v2539 = vrcp.pop %v2459
        %v2540 = vmul.f32 %v2459, %v2539
        %v2541 = vsub.f32 1.0, %v2540
        %v2542 = vmul.f32 %v2539, %v2541
        %v2543 = vadd.f32 %v2539, %v2542
        %vm2544 = vweird.f32 %v2459
        %vm2545 = vweird.f32 %v2539
        %vm2546 = vmor %vm2544, %vm2545
        %v2547 = vsel %vm2546, %v2539, %v2543
        %v2548 = vand.u32 2147483647, %v2459
        %vm2549 = vcmp.eq.f32.partialorder %v2548, 8.507059e+37
        %v2550 = vand.u32 %v2459, 2147483648
        %v2551 = vor.u32 1.1754944e-38, %v2550
        %v2552 = vsel %vm2549, %v2551, %v2547
        %v2553 = vmul.f32 1.0, %v2552
        %v2554 = vrcp.pop %v2460
        %v2555 = vmul.f32 %v2460, %v2554
        %v2556 = vsub.f32 1.0, %v2555
        %v2557 = vmul.f32 %v2554, %v2556
        %v2558 = vadd.f32 %v2554, %v2557
        %vm2559 = vweird.f32 %v2460
        %vm2560 = vweird.f32 %v2554
        %vm2561 = vmor %vm2559, %vm2560
        %v2562 = vsel %vm2561, %v2554, %v2558
        %v2563 = vand.u32 2147483647, %v2460
        %vm2564 = vcmp.eq.f32.partialorder %v2563, 8.507059e+37
        %v2565 = vand.u32 %v2460, 2147483648
        %v2566 = vor.u32 1.1754944e-38, %v2565
        %v2567 = vsel %vm2564, %v2566, %v2562
        %v2568 = vmul.f32 1.0, %v2567
        %v2569 = vrcp.pop %v2461
        %v2570 = vmul.f32 %v2461, %v2569
        %v2571 = vsub.f32 1.0, %v2570
        %v2572 = vmul.f32 %v2569, %v2571
        %v2573 = vadd.f32 %v2569, %v2572
        %vm2574 = vweird.f32 %v2461
        %vm2575 = vweird.f32 %v2569
        %vm2576 = vmor %vm2574, %vm2575
        %v2577 = vsel %vm2576, %v2569, %v2573
        %v2578 = vand.u32 2147483647, %v2461
        %vm2579 = vcmp.eq.f32.partialorder %v2578, 8.507059e+37
        %v2580 = vand.u32 %v2461, 2147483648
        %v2581 = vor.u32 1.1754944e-38, %v2580
        %v2582 = vsel %vm2579, %v2581, %v2577
        %v2583 = vmul.f32 1.0, %v2582
        %v2584 = vrcp.pop %v2462
        %v2585 = vmul.f32 %v2462, %v2584
        %v2586 = vsub.f32 1.0, %v2585
        %v2587 = vmul.f32 %v2584, %v2586
        %v2588 = vadd.f32 %v2584, %v2587
        %vm2589 = vweird.f32 %v2462
        %vm2590 = vweird.f32 %v2584
        %vm2591 = vmor %vm2589, %vm2590
        %v2592 = vsel %vm2591, %v2584, %v2588
        %v2593 = vand.u32 2147483647, %v2462
        %vm2594 = vcmp.eq.f32.partialorder %v2593, 8.507059e+37
        %v2595 = vand.u32 %v2462, 2147483648
        %v2596 = vor.u32 1.1754944e-38, %v2595
        %v2597 = vsel %vm2594, %v2596, %v2592
        %v2598 = vmul.f32 1.0, %v2597
        %v2599 = vrcp.pop %v2463
        %v2600 = vmul.f32 %v2463, %v2599
        %v2601 = vsub.f32 1.0, %v2600
        %v2602 = vmul.f32 %v2599, %v2601
        %v2603 = vadd.f32 %v2599, %v2602
        %vm2604 = vweird.f32 %v2463
        %vm2605 = vweird.f32 %v2599
        %vm2606 = vmor %vm2604, %vm2605
        %v2607 = vsel %vm2606, %v2599, %v2603
        %v2608 = vand.u32 2147483647, %v2463
        %vm2609 = vcmp.eq.f32.partialorder %v2608, 8.507059e+37
        %v2610 = vand.u32 %v2463, 2147483648
        %v2611 = vor.u32 1.1754944e-38, %v2610
        %v2612 = vsel %vm2609, %v2611, %v2607
        %v2613 = vmul.f32 1.0, %v2612
        %v2614 = vrcp.pop %v2464
        %v2615 = vmul.f32 %v2464, %v2614
        %v2616 = vsub.f32 1.0, %v2615
        %v2617 = vmul.f32 %v2614, %v2616
        %v2618 = vadd.f32 %v2614, %v2617
        %vm2619 = vweird.f32 %v2464
        %vm2620 = vweird.f32 %v2614
        %vm2621 = vmor %vm2619, %vm2620
        %v2622 = vsel %vm2621, %v2614, %v2618
        %v2623 = vand.u32 2147483647, %v2464
        %vm2624 = vcmp.eq.f32.partialorder %v2623, 8.507059e+37
        %v2625 = vand.u32 %v2464, 2147483648
        %v2626 = vor.u32 1.1754944e-38, %v2625
        %v2627 = vsel %vm2624, %v2626, %v2622
        %v2628 = vmul.f32 1.0, %v2627
        %v2629 = vrcp.pop %v2465
        %v2630 = vmul.f32 %v2465, %v2629
        %v2631 = vsub.f32 1.0, %v2630
        %v2632 = vmul.f32 %v2629, %v2631
        %v2633 = vadd.f32 %v2629, %v2632
        %vm2634 = vweird.f32 %v2465
        %vm2635 = vweird.f32 %v2629
        %vm2636 = vmor %vm2634, %vm2635
        %v2637 = vsel %vm2636, %v2629, %v2633
        %v2638 = vand.u32 2147483647, %v2465
        %vm2639 = vcmp.eq.f32.partialorder %v2638, 8.507059e+37
        %v2640 = vand.u32 %v2465, 2147483648
        %v2641 = vor.u32 1.1754944e-38, %v2640
        %v2642 = vsel %vm2639, %v2641, %v2637
        %v2643 = vmul.f32 1.0, %v2642
        %v2644 = vrcp.pop %v2466
        %v2645 = vmul.f32 %v2466, %v2644
        %v2646 = vsub.f32 1.0, %v2645
        %v2647 = vmul.f32 %v2644, %v2646
        %v2648 = vadd.f32 %v2644, %v2647
        %vm2649 = vweird.f32 %v2466
        %vm2650 = vweird.f32 %v2644
        %vm2651 = vmor %vm2649, %vm2650
        %v2652 = vsel %vm2651, %v2644, %v2648
        %v2653 = vand.u32 2147483647, %v2466
        %vm2654 = vcmp.eq.f32.partialorder %v2653, 8.507059e+37
        %v2655 = vand.u32 %v2466, 2147483648
        %v2656 = vor.u32 1.1754944e-38, %v2655
        %v2657 = vsel %vm2654, %v2656, %v2652
        %v2658 = vmul.f32 1.0, %v2657
        %v2659 = vrcp.pop %v2467
        %v2660 = vmul.f32 %v2467, %v2659
        %v2661 = vsub.f32 1.0, %v2660
        %v2662 = vmul.f32 %v2659, %v2661
        %v2663 = vadd.f32 %v2659, %v2662
        %vm2664 = vweird.f32 %v2467
        %vm2665 = vweird.f32 %v2659
        %vm2666 = vmor %vm2664, %vm2665
        %v2667 = vsel %vm2666, %v2659, %v2663
        %v2668 = vand.u32 2147483647, %v2467
        %vm2669 = vcmp.eq.f32.partialorder %v2668, 8.507059e+37
        %v2670 = vand.u32 %v2467, 2147483648
        %v2671 = vor.u32 1.1754944e-38, %v2670
        %v2672 = vsel %vm2669, %v2671, %v2667
        %v2673 = vmul.f32 1.0, %v2672
        %v2674 = vrcp.pop %v2468
        %v2675 = vmul.f32 %v2468, %v2674
        %v2676 = vsub.f32 1.0, %v2675
        %v2677 = vmul.f32 %v2674, %v2676
        %v2678 = vadd.f32 %v2674, %v2677
        %vm2679 = vweird.f32 %v2468
        %vm2680 = vweird.f32 %v2674
        %vm2681 = vmor %vm2679, %vm2680
        %v2682 = vsel %vm2681, %v2674, %v2678
        %v2683 = vand.u32 2147483647, %v2468
        %vm2684 = vcmp.eq.f32.partialorder %v2683, 8.507059e+37
        %v2685 = vand.u32 %v2468, 2147483648
        %v2686 = vor.u32 1.1754944e-38, %v2685
        %v2687 = vsel %vm2684, %v2686, %v2682
        %v2688 = vmul.f32 1.0, %v2687
        %v2689 = vrcp.pop %v2469
        %v2690 = vmul.f32 %v2469, %v2689
        %v2691 = vsub.f32 1.0, %v2690
        %v2692 = vmul.f32 %v2689, %v2691
        %v2693 = vadd.f32 %v2689, %v2692
        %vm2694 = vweird.f32 %v2469
        %vm2695 = vweird.f32 %v2689
        %vm2696 = vmor %vm2694, %vm2695
        %v2697 = vsel %vm2696, %v2689, %v2693
        %v2698 = vand.u32 2147483647, %v2469
        %vm2699 = vcmp.eq.f32.partialorder %v2698, 8.507059e+37
        %v2700 = vand.u32 %v2469, 2147483648
        %v2701 = vor.u32 1.1754944e-38, %v2700
        %v2702 = vsel %vm2699, %v2701, %v2697
        %v2703 = vmul.f32 1.0, %v2702
        %v2704 = vrcp.pop %v2470
        %v2705 = vmul.f32 %v2470, %v2704
        %v2706 = vsub.f32 1.0, %v2705
        %v2707 = vmul.f32 %v2704, %v2706
        %v2708 = vadd.f32 %v2704, %v2707
        %vm2709 = vweird.f32 %v2470
        %vm2710 = vweird.f32 %v2704
        %vm2711 = vmor %vm2709, %vm2710
        %v2712 = vsel %vm2711, %v2704, %v2708
        %v2713 = vand.u32 2147483647, %v2470
        %vm2714 = vcmp.eq.f32.partialorder %v2713, 8.507059e+37
        %v2715 = vand.u32 %v2470, 2147483648
        %v2716 = vor.u32 1.1754944e-38, %v2715
        %v2717 = vsel %vm2714, %v2716, %v2712
        %v2718 = vmul.f32 1.0, %v2717
        %v2719 = vrcp.pop %v2471
        %v2720 = vmul.f32 %v2471, %v2719
        %v2721 = vsub.f32 1.0, %v2720
        %v2722 = vmul.f32 %v2719, %v2721
        %v2723 = vadd.f32 %v2719, %v2722
        %vm2724 = vweird.f32 %v2471
        %vm2725 = vweird.f32 %v2719
        %vm2726 = vmor %vm2724, %vm2725
        %v2727 = vsel %vm2726, %v2719, %v2723
        %v2728 = vand.u32 2147483647, %v2471
        %vm2729 = vcmp.eq.f32.partialorder %v2728, 8.507059e+37
        %v2730 = vand.u32 %v2471, 2147483648
        %v2731 = vor.u32 1.1754944e-38, %v2730
        %v2732 = vsel %vm2729, %v2731, %v2727
        %v2733 = vmul.f32 1.0, %v2732
        %v2734 = vrcp.pop %v2472
        %v2735 = vmul.f32 %v2472, %v2734
        %v2736 = vsub.f32 1.0, %v2735
        %v2737 = vmul.f32 %v2734, %v2736
        %v2738 = vadd.f32 %v2734, %v2737
        %vm2739 = vweird.f32 %v2472
        %vm2740 = vweird.f32 %v2734
        %vm2741 = vmor %vm2739, %vm2740
        %v2742 = vsel %vm2741, %v2734, %v2738
        %v2743 = vand.u32 2147483647, %v2472
        %vm2744 = vcmp.eq.f32.partialorder %v2743, 8.507059e+37
        %v2745 = vand.u32 %v2472, 2147483648
        %v2746 = vor.u32 1.1754944e-38, %v2745
        %v2747 = vsel %vm2744, %v2746, %v2742
        %v2748 = vmul.f32 1.0, %v2747
        %v2749 = vrcp.pop %v2473
        %v2750 = vmul.f32 %v2473, %v2749
        %v2751 = vsub.f32 1.0, %v2750
        %v2752 = vmul.f32 %v2749, %v2751
        %v2753 = vadd.f32 %v2749, %v2752
        %vm2754 = vweird.f32 %v2473
        %vm2755 = vweird.f32 %v2749
        %vm2756 = vmor %vm2754, %vm2755
        %v2757 = vsel %vm2756, %v2749, %v2753
        %v2758 = vand.u32 2147483647, %v2473
        %vm2759 = vcmp.eq.f32.partialorder %v2758, 8.507059e+37
        %v2760 = vand.u32 %v2473, 2147483648
        %v2761 = vor.u32 1.1754944e-38, %v2760
        %v2762 = vsel %vm2759, %v2761, %v2757
        %v2763 = vmul.f32 1.0, %v2762
        %v2764 = vrcp.pop %v2474
        %v2765 = vmul.f32 %v2474, %v2764
        %v2766 = vsub.f32 1.0, %v2765
        %v2767 = vmul.f32 %v2764, %v2766
        %v2768 = vadd.f32 %v2764, %v2767
        %vm2769 = vweird.f32 %v2474
        %vm2770 = vweird.f32 %v2764
        %vm2771 = vmor %vm2769, %vm2770
        %v2772 = vsel %vm2771, %v2764, %v2768
        %v2773 = vand.u32 2147483647, %v2474
        %vm2774 = vcmp.eq.f32.partialorder %v2773, 8.507059e+37
        %v2775 = vand.u32 %v2474, 2147483648
        %v2776 = vor.u32 1.1754944e-38, %v2775
        %v2777 = vsel %vm2774, %v2776, %v2772
        %v2778 = vmul.f32 1.0, %v2777
        %v2779 = vrcp.pop %v2475
        %v2780 = vmul.f32 %v2475, %v2779
        %v2781 = vsub.f32 1.0, %v2780
        %v2782 = vmul.f32 %v2779, %v2781
        %v2783 = vadd.f32 %v2779, %v2782
        %vm2784 = vweird.f32 %v2475
        %vm2785 = vweird.f32 %v2779
        %vm2786 = vmor %vm2784, %vm2785
        %v2787 = vsel %vm2786, %v2779, %v2783
        %v2788 = vand.u32 2147483647, %v2475
        %vm2789 = vcmp.eq.f32.partialorder %v2788, 8.507059e+37
        %v2790 = vand.u32 %v2475, 2147483648
        %v2791 = vor.u32 1.1754944e-38, %v2790
        %v2792 = vsel %vm2789, %v2791, %v2787
        %v2793 = vmul.f32 1.0, %v2792
        %v2794 = vrcp.pop %v2476
        %v2795 = vmul.f32 %v2476, %v2794
        %v2796 = vsub.f32 1.0, %v2795
        %v2797 = vmul.f32 %v2794, %v2796
        %v2798 = vadd.f32 %v2794, %v2797
        %vm2799 = vweird.f32 %v2476
        %vm2800 = vweird.f32 %v2794
        %vm2801 = vmor %vm2799, %vm2800
        %v2802 = vsel %vm2801, %v2794, %v2798
        %v2803 = vand.u32 2147483647, %v2476
        %vm2804 = vcmp.eq.f32.partialorder %v2803, 8.507059e+37
        %v2805 = vand.u32 %v2476, 2147483648
        %v2806 = vor.u32 1.1754944e-38, %v2805
        %v2807 = vsel %vm2804, %v2806, %v2802
        %v2808 = vmul.f32 1.0, %v2807
        %v2809 = vrcp.pop %v2477
        %v2810 = vmul.f32 %v2477, %v2809
        %v2811 = vsub.f32 1.0, %v2810
        %v2812 = vmul.f32 %v2809, %v2811
        %v2813 = vadd.f32 %v2809, %v2812
        %vm2814 = vweird.f32 %v2477
        %vm2815 = vweird.f32 %v2809
        %vm2816 = vmor %vm2814, %vm2815
        %v2817 = vsel %vm2816, %v2809, %v2813
        %v2818 = vand.u32 2147483647, %v2477
        %vm2819 = vcmp.eq.f32.partialorder %v2818, 8.507059e+37
        %v2820 = vand.u32 %v2477, 2147483648
        %v2821 = vor.u32 1.1754944e-38, %v2820
        %v2822 = vsel %vm2819, %v2821, %v2817
        %v2823 = vmul.f32 1.0, %v2822
        %v2824 = vrcp.pop %v2478
        %v2825 = vmul.f32 %v2478, %v2824
        %v2826 = vsub.f32 1.0, %v2825
        %v2827 = vmul.f32 %v2824, %v2826
        %v2828 = vadd.f32 %v2824, %v2827
        %vm2829 = vweird.f32 %v2478
        %vm2830 = vweird.f32 %v2824
        %vm2831 = vmor %vm2829, %vm2830
        %v2832 = vsel %vm2831, %v2824, %v2828
        %v2833 = vand.u32 2147483647, %v2478
        %vm2834 = vcmp.eq.f32.partialorder %v2833, 8.507059e+37
        %v2835 = vand.u32 %v2478, 2147483648
        %v2836 = vor.u32 1.1754944e-38, %v2835
        %v2837 = vsel %vm2834, %v2836, %v2832
        %v2838 = vmul.f32 1.0, %v2837
        %v2839 = vmul.f32 %v2273, %v2493
        %v2840 = vmul.f32 %v2297, %v2508
        %v2841 = vmul.f32 %v2321, %v2523
        %v2842 = vmul.f32 %v2345, %v2538
        %v2843 = vmul.f32 %v2275, %v2553
        %v2844 = vmul.f32 %v2299, %v2568
        %v2845 = vmul.f32 %v2323, %v2583
        %v2846 = vmul.f32 %v2347, %v2598
        %v2847 = vmul.f32 %v2278, %v2613
        %v2848 = vmul.f32 %v2302, %v2628
        %v2849 = vmul.f32 %v2326, %v2643
        %v2850 = vmul.f32 %v2350, %v2658
        %v2851 = vmul.f32 %v2280, %v2673
        %v2852 = vmul.f32 %v2304, %v2688
        %v2853 = vmul.f32 %v2328, %v2703
        %v2854 = vmul.f32 %v2352, %v2718
        %v2855 = vmul.f32 %v2283, %v2733
        %v2856 = vmul.f32 %v2307, %v2748
        %v2857 = vmul.f32 %v2331, %v2763
        %v2858 = vmul.f32 %v2355, %v2778
        %v2859 = vmul.f32 %v2285, %v2793
        %v2860 = vmul.f32 %v2309, %v2808
        %v2861 = vmul.f32 %v2333, %v2823
        %v2862 = vmul.f32 %v2357, %v2838
        %v2863 = vpack.c.bf16 %v2843, %v2839
        %v2864 = vpack.c.bf16 %v2844, %v2840
        %v2865 = vpack.c.bf16 %v2845, %v2841
        %v2866 = vpack.c.bf16 %v2846, %v2842
        %v2867 = vpack.c.bf16 %v2851, %v2847
        %v2868 = vpack.c.bf16 %v2852, %v2848
        %v2869 = vpack.c.bf16 %v2853, %v2849
        %v2870 = vpack.c.bf16 %v2854, %v2850
        %v2871 = vpack.c.bf16 %v2859, %v2855
        %v2872 = vpack.c.bf16 %v2860, %v2856
        %v2873 = vpack.c.bf16 %v2861, %v2857
        %v2874 = vpack.c.bf16 %v2862, %v2858
        %v2875 = vld [vmem:[%s769] sm:$0xf]
        %v2876 = vld [vmem:[%s769 + $0x4] sm:$0xf]
        %v2877 = vld [vmem:[%s769 + $0x8] sm:$0xf]
        %v2878 = vld [vmem:[%s769 + $0xc] sm:$0xf]
        %v2879 = vld [vmem:[%s769 + $0x10] sm:$0xf]
        %v2880 = vld [vmem:[%s769 + $0x14] sm:$0xf]
        %v2881 = vld [vmem:[%s769 + $0x18] sm:$0xf]
        %v2882 = vld [vmem:[%s769 + $0x1c] sm:$0xf]
        %v2883 = vld [vmem:[%s769 + $0x20] sm:$0xf]
        %v2884 = vld [vmem:[%s769 + $0x24] sm:$0xf]
        %v2885 = vld [vmem:[%s769 + $0x28] sm:$0xf]
        %v2886 = vld [vmem:[%s769 + $0x2c] sm:$0xf]
        %v2887 = vld [vmem:[%s769 + $0x30] sm:$0xf]
        %v2888 = vld [vmem:[%s769 + $0x34] sm:$0xf]
        %v2889 = vld [vmem:[%s769 + $0x38] sm:$0xf]
        %v2890 = vld [vmem:[%s769 + $0x3c] sm:$0xf]
        %v2891 = vld [vmem:[%s769 + $0x40] sm:$0xf]
        %v2892 = vld [vmem:[%s769 + $0x44] sm:$0xf]
        %v2893 = vld [vmem:[%s769 + $0x48] sm:$0xf]
        %v2894 = vld [vmem:[%s769 + $0x4c] sm:$0xf]
        %v2895 = vld [vmem:[%s769 + $0x50] sm:$0xf]
        %v2896 = vld [vmem:[%s769 + $0x54] sm:$0xf]
        %v2897 = vld [vmem:[%s769 + $0x58] sm:$0xf]
        %v2898 = vld [vmem:[%s769 + $0x5c] sm:$0xf]
        %v2899 = vld [vmem:[%s769 + $0x60] sm:$0xf]
        %v2900 = vld [vmem:[%s769 + $0x64] sm:$0xf]
        %v2901 = vld [vmem:[%s769 + $0x68] sm:$0xf]
        %v2902 = vld [vmem:[%s769 + $0x6c] sm:$0xf]
        %v2903 = vld [vmem:[%s769 + $0x70] sm:$0xf]
        %v2904 = vld [vmem:[%s769 + $0x74] sm:$0xf]
        %v2905 = vld [vmem:[%s769 + $0x78] sm:$0xf]
        %v2906 = vld [vmem:[%s769 + $0x7c] sm:$0xf]
        %v2907 = vld [vmem:[%s769 + $0x80] sm:$0xf]
        %v2908 = vld [vmem:[%s769 + $0x84] sm:$0xf]
        %v2909 = vld [vmem:[%s769 + $0x88] sm:$0xf]
        %v2910 = vld [vmem:[%s769 + $0x8c] sm:$0xf]
        %v2911 = vld [vmem:[%s769 + $0x90] sm:$0xf]
        %v2912 = vld [vmem:[%s769 + $0x94] sm:$0xf]
        %v2913 = vld [vmem:[%s769 + $0x98] sm:$0xf]
        %v2914 = vld [vmem:[%s769 + $0x9c] sm:$0xf]
        %v2915 = vld [vmem:[%s769 + $0xa0] sm:$0xf]
        %v2916 = vld [vmem:[%s769 + $0xa4] sm:$0xf]
        %v2917 = vld [vmem:[%s769 + $0xa8] sm:$0xf]
        %v2918 = vld [vmem:[%s769 + $0xac] sm:$0xf]
        %v2919 = vld [vmem:[%s769 + $0xb0] sm:$0xf]
        %v2920 = vld [vmem:[%s769 + $0xb4] sm:$0xf]
        %v2921 = vld [vmem:[%s769 + $0xb8] sm:$0xf]
        %v2922 = vld [vmem:[%s769 + $0xbc] sm:$0xf]
        %v2923 = vld [vmem:[%s769 + $0xc0] sm:$0xf]
        %v2924 = vld [vmem:[%s769 + $0xc4] sm:$0xf]
        %v2925 = vld [vmem:[%s769 + $0xc8] sm:$0xf]
        %v2926 = vld [vmem:[%s769 + $0xcc] sm:$0xf]
        %v2927 = vld [vmem:[%s769 + $0xd0] sm:$0xf]
        %v2928 = vld [vmem:[%s769 + $0xd4] sm:$0xf]
        %v2929 = vld [vmem:[%s769 + $0xd8] sm:$0xf]
        %v2930 = vld [vmem:[%s769 + $0xdc] sm:$0xf]
        %v2931 = vld [vmem:[%s769 + $0xe0] sm:$0xf]
        %v2932 = vld [vmem:[%s769 + $0xe4] sm:$0xf]
        %v2933 = vld [vmem:[%s769 + $0xe8] sm:$0xf]
        %v2934 = vld [vmem:[%s769 + $0xec] sm:$0xf]
        %v2935 = vld [vmem:[%s769 + $0xf0] sm:$0xf]
        %v2936 = vld [vmem:[%s769 + $0xf4] sm:$0xf]
        %v2937 = vld [vmem:[%s769 + $0xf8] sm:$0xf]
        %v2938 = vld [vmem:[%s769 + $0xfc] sm:$0xf]
        %v2939 = vld [vmem:[%s872] sm:$0x1]
        %v2941 = vperm.slane %v2939, 0
        %v3007 = vunpack.c.l.b16 %v2875
        %v3008 = vunpack.c.l.b16 %v2876
        %v3009 = vunpack.c.l.b16 %v2877
        %v3010 = vunpack.c.l.b16 %v2878
        %v3011 = vunpack.c.l.b16 %v2879
        %v3012 = vunpack.c.l.b16 %v2880
        %v3013 = vunpack.c.l.b16 %v2881
        %v3014 = vunpack.c.l.b16 %v2882
        %v3015 = vunpack.c.l.b16 %v2883
        %v3016 = vunpack.c.l.b16 %v2884
        %v3017 = vunpack.c.l.b16 %v2885
        %v3018 = vunpack.c.l.b16 %v2886
        %v3019 = vunpack.c.l.b16 %v2887
        %v3020 = vunpack.c.l.b16 %v2888
        %v3021 = vunpack.c.l.b16 %v2889
        %v3022 = vunpack.c.l.b16 %v2890
        %v3023 = vunpack.c.l.b16 %v2891
        %v3024 = vunpack.c.l.b16 %v2892
        %v3025 = vunpack.c.l.b16 %v2893
        %v3026 = vunpack.c.l.b16 %v2894
        %v3027 = vunpack.c.l.b16 %v2895
        %v3028 = vunpack.c.l.b16 %v2896
        %v3029 = vunpack.c.l.b16 %v2897
        %v3030 = vunpack.c.l.b16 %v2898
        %v3031 = vunpack.c.l.b16 %v2899
        %v3032 = vunpack.c.l.b16 %v2900
        %v3033 = vunpack.c.l.b16 %v2901
        %v3034 = vunpack.c.l.b16 %v2902
        %v3035 = vunpack.c.l.b16 %v2903
        %v3036 = vunpack.c.l.b16 %v2904
        %v3037 = vunpack.c.l.b16 %v2905
        %v3038 = vunpack.c.l.b16 %v2906
        %v3039 = vunpack.c.l.b16 %v2907
        %v3040 = vunpack.c.l.b16 %v2908
        %v3041 = vunpack.c.l.b16 %v2909
        %v3042 = vunpack.c.l.b16 %v2910
        %v3043 = vunpack.c.l.b16 %v2911
        %v3044 = vunpack.c.l.b16 %v2912
        %v3045 = vunpack.c.l.b16 %v2913
        %v3046 = vunpack.c.l.b16 %v2914
        %v3047 = vunpack.c.l.b16 %v2915
        %v3048 = vunpack.c.l.b16 %v2916
        %v3049 = vunpack.c.l.b16 %v2917
        %v3050 = vunpack.c.l.b16 %v2918
        %v3051 = vunpack.c.l.b16 %v2919
        %v3052 = vunpack.c.l.b16 %v2920
        %v3053 = vunpack.c.l.b16 %v2921
        %v3054 = vunpack.c.l.b16 %v2922
        %v3055 = vunpack.c.l.b16 %v2923
        %v3056 = vunpack.c.l.b16 %v2924
        %v3057 = vunpack.c.l.b16 %v2925
        %v3058 = vunpack.c.l.b16 %v2926
        %v3059 = vunpack.c.l.b16 %v2927
        %v3060 = vunpack.c.l.b16 %v2928
        %v3061 = vunpack.c.l.b16 %v2929
        %v3062 = vunpack.c.l.b16 %v2930
        %v3063 = vunpack.c.l.b16 %v2931
        %v3064 = vunpack.c.l.b16 %v2932
        %v3065 = vunpack.c.l.b16 %v2933
        %v3066 = vunpack.c.l.b16 %v2934
        %v3067 = vunpack.c.l.b16 %v2935
        %v3068 = vunpack.c.l.b16 %v2936
        %v3069 = vunpack.c.l.b16 %v2937
        %v3070 = vunpack.c.l.b16 %v2938
        %v3071 = vpack.c.b16 %v3008, %v3007
        %v3072 = vpack.c.b16 %v3010, %v3009
        %v3073 = vpack.c.b16 %v3012, %v3011
        %v3074 = vpack.c.b16 %v3014, %v3013
        %v3075 = vpack.c.b16 %v3016, %v3015
        %v3076 = vpack.c.b16 %v3018, %v3017
        %v3077 = vpack.c.b16 %v3020, %v3019
        %v3078 = vpack.c.b16 %v3022, %v3021
        %v3079 = vpack.c.b16 %v3024, %v3023
        %v3080 = vpack.c.b16 %v3026, %v3025
        %v3081 = vpack.c.b16 %v3028, %v3027
        %v3082 = vpack.c.b16 %v3030, %v3029
        %v3083 = vpack.c.b16 %v3032, %v3031
        %v3084 = vpack.c.b16 %v3034, %v3033
        %v3085 = vpack.c.b16 %v3036, %v3035
        %v3086 = vpack.c.b16 %v3038, %v3037
        %v3087 = vpack.c.b16 %v3040, %v3039
        %v3088 = vpack.c.b16 %v3042, %v3041
        %v3089 = vpack.c.b16 %v3044, %v3043
        %v3090 = vpack.c.b16 %v3046, %v3045
        %v3091 = vpack.c.b16 %v3048, %v3047
        %v3092 = vpack.c.b16 %v3050, %v3049
        %v3093 = vpack.c.b16 %v3052, %v3051
        %v3094 = vpack.c.b16 %v3054, %v3053
        %v3095 = vpack.c.b16 %v3056, %v3055
        %v3096 = vpack.c.b16 %v3058, %v3057
        %v3097 = vpack.c.b16 %v3060, %v3059
        %v3098 = vpack.c.b16 %v3062, %v3061
        %v3099 = vpack.c.b16 %v3064, %v3063
        %v3100 = vpack.c.b16 %v3066, %v3065
        %v3101 = vpack.c.b16 %v3068, %v3067
        %v3102 = vpack.c.b16 %v3070, %v3069
        %3135 = vmatpush.bf16.msra.mxu0 %v3078
        %3136 = vmatpush.bf16.msra.mxu0 %v3077
        %3137 = vmatpush.bf16.msra.mxu0 %v3076
        %3138 = vmatpush.bf16.msra.mxu0 %v3075
        %3139 = vmatpush.bf16.msra.mxu0 %v3074
        %3140 = vmatpush.bf16.msra.mxu0 %v3073
        %3141 = vmatpush.bf16.msra.mxu0 %v3072
        %3142 = vmatpush.bf16.msra.mxu0 %v3071
        %3143 = vmatmul.bf16.gmra.mxu0 %v2863
        %v3144 = vpop.f32.mrf.mxu0
        %v3145 = vadd.f32 %v2941, %v3144
        %v3146 = vpop.f32.mrf.mxu0
        %v3147 = vadd.f32 %v2941, %v3146
        %3148 = vmatmul.bf16.gmra.mxu0 %v2867
        %v3149 = vpop.f32.mrf.mxu0
        %v3150 = vadd.f32 %v2941, %v3149
        %v3151 = vpop.f32.mrf.mxu0
        %v3152 = vadd.f32 %v2941, %v3151
        %3153 = vmatmul.bf16.gmra.mxu0 %v2871
        %v3154 = vpop.f32.mrf.mxu0
        %v3155 = vadd.f32 %v2941, %v3154
        %v3156 = vpop.f32.mrf.mxu0
        %v3157 = vadd.f32 %v2941, %v3156
        %3158 = vdwg.mxu0
        %3159 = vmatpush.bf16.msra.mxu0 %v3086
        %3160 = vmatpush.bf16.msra.mxu0 %v3085
        %3161 = vmatpush.bf16.msra.mxu0 %v3084
        %3162 = vmatpush.bf16.msra.mxu0 %v3083
        %3163 = vmatpush.bf16.msra.mxu0 %v3082
        %3164 = vmatpush.bf16.msra.mxu0 %v3081
        %3165 = vmatpush.bf16.msra.mxu0 %v3080
        %3166 = vmatpush.bf16.msra.mxu0 %v3079
        %3167 = vmatmul.bf16.gmra.mxu0 %v2864
        %v3168 = vpop.f32.mrf.mxu0
        %v3169 = vadd.f32 %v3145, %v3168
        %v3170 = vpop.f32.mrf.mxu0
        %v3171 = vadd.f32 %v3147, %v3170
        %3172 = vmatmul.bf16.gmra.mxu0 %v2868
        %v3173 = vpop.f32.mrf.mxu0
        %v3174 = vadd.f32 %v3150, %v3173
        %v3175 = vpop.f32.mrf.mxu0
        %v3176 = vadd.f32 %v3152, %v3175
        %3177 = vmatmul.bf16.gmra.mxu0 %v2872
        %v3178 = vpop.f32.mrf.mxu0
        %v3179 = vadd.f32 %v3155, %v3178
        %v3180 = vpop.f32.mrf.mxu0
        %v3181 = vadd.f32 %v3157, %v3180
        %3182 = vdwg.mxu0
        %3183 = vmatpush.bf16.msra.mxu0 %v3094
        %3184 = vmatpush.bf16.msra.mxu0 %v3093
        %3185 = vmatpush.bf16.msra.mxu0 %v3092
        %3186 = vmatpush.bf16.msra.mxu0 %v3091
        %3187 = vmatpush.bf16.msra.mxu0 %v3090
        %3188 = vmatpush.bf16.msra.mxu0 %v3089
        %3189 = vmatpush.bf16.msra.mxu0 %v3088
        %3190 = vmatpush.bf16.msra.mxu0 %v3087
        %3191 = vmatmul.bf16.gmra.mxu0 %v2865
        %v3192 = vpop.f32.mrf.mxu0
        %v3193 = vadd.f32 %v3169, %v3192
        %v3194 = vpop.f32.mrf.mxu0
        %v3195 = vadd.f32 %v3171, %v3194
        %3196 = vmatmul.bf16.gmra.mxu0 %v2869
        %v3197 = vpop.f32.mrf.mxu0
        %v3198 = vadd.f32 %v3174, %v3197
        %v3199 = vpop.f32.mrf.mxu0
        %v3200 = vadd.f32 %v3176, %v3199
        %3201 = vmatmul.bf16.gmra.mxu0 %v2873
        %v3202 = vpop.f32.mrf.mxu0
        %v3203 = vadd.f32 %v3179, %v3202
        %v3204 = vpop.f32.mrf.mxu0
        %v3205 = vadd.f32 %v3181, %v3204
        %3206 = vdwg.mxu0
        %3207 = vmatpush.bf16.msra.mxu0 %v3102
        %3208 = vmatpush.bf16.msra.mxu0 %v3101
        %3209 = vmatpush.bf16.msra.mxu0 %v3100
        %3210 = vmatpush.bf16.msra.mxu0 %v3099
        %3211 = vmatpush.bf16.msra.mxu0 %v3098
        %3212 = vmatpush.bf16.msra.mxu0 %v3097
        %3213 = vmatpush.bf16.msra.mxu0 %v3096
        %3214 = vmatpush.bf16.msra.mxu0 %v3095
        %3215 = vmatmul.bf16.gmra.mxu0 %v2866
        %v3216 = vpop.f32.mrf.mxu0
        %v3217 = vadd.f32 %v3193, %v3216
        %v3218 = vpop.f32.mrf.mxu0
        %v3219 = vadd.f32 %v3195, %v3218
        %3220 = vmatmul.bf16.gmra.mxu0 %v2870
        %v3221 = vpop.f32.mrf.mxu0
        %v3222 = vadd.f32 %v3198, %v3221
        %v3223 = vpop.f32.mrf.mxu0
        %v3224 = vadd.f32 %v3200, %v3223
        %3225 = vmatmul.bf16.gmra.mxu0 %v2874
        %v3226 = vpop.f32.mrf.mxu0
        %v3227 = vadd.f32 %v3203, %v3226
        %v3228 = vpop.f32.mrf.mxu0
        %v3229 = vadd.f32 %v3205, %v3228
        %3230 = vdwg.mxu0
        %v3231 = vadd.f32 %v1912, %v3217
        %v3232 = vadd.f32 %v1913, %v3219
        %v3233 = vadd.f32 %v1914, %v3222
        %v3234 = vadd.f32 %v1915, %v3224
        %v3235 = vadd.f32 %v1916, %v3227
        %v3236 = vadd.f32 %v1917, %v3229
        %3237 = vst [vmem:[%s864] sm:$0xff] %v3231
        %3238 = vst [vmem:[%s864 + $0x8] sm:$0xff] %v3232
        %3239 = vst [vmem:[%s864 + $0x10] sm:$0xff] %v3233
        %3240 = vst [vmem:[%s864 + $0x18] sm:$0xff] %v3234
        %3241 = vst [vmem:[%s864 + $0x20] sm:$0xff] %v3235
        %3242 = vst [vmem:[%s864 + $0x28] sm:$0xff] %v3236
        %s3243 = sand.u32 %s403, 1
        %s3244 = scalar_lea.sflag [#allocation4], %s3243
        %s3245 = sand.u32 %s403, 1
        %s3246 = smul.addr %s3245, 48
        %s3247 = scalar_lea.vmem [#allocation20], %s3246
        // Predicated region
        $region121: #{tpu_custom_call.1} parent=71 // pred_check
          %p3248 = pneg %p413
        $region122: #{tpu_custom_call.1} parent=71 // pred_check_branch
          %3250 = sbr.rel (%p3248) target = $region124
        $region123: #{tpu_custom_call.1} parent=71 // pred_region
          %s3251 = smul.u32 3, %s49
          %3253 = vsyncadd %s3244, 0
          %s3254 = smul.addr %s3251, 2
          %s3255 = smul.addr %s3254, 8
          %s3256 = scalar_lea.hbm %s13, %s3255
          %s3257 = sshll.u32 %s3247, 4
          %s3258 = int_to_ptr.vmem [resolvable:$true] %s3257
          %s3259 = sshll.u32 %s3256, 4
          %s3260 = int_to_ptr.hbm [resolvable:$true] %s3259
          %3265 = dma.vmem_to_hbm [thread:$0]  %s3258, 768, %s3260, %s3244, 128, 128, 8
        $region124: #{tpu_custom_call.1} parent=71 // pred_fallthru
          _
      $region72: #{tpu_custom_call.1} parent=5 // pred_fallthru
        _
      %p3266 = scmp.le.s32.totalorder 2, %s40
      // Predicated region
      $region125: #{tpu_custom_call.1} parent=5 // pred_check
        %p3267 = pneg %p3266
      $region126: #{tpu_custom_call.1} parent=5 // pred_check_branch
        %3269 = sbr.rel (%p3267) target = $region128
      $region127: #{tpu_custom_call.1} parent=5 // pred_region
        %s3270 = ssub.s32 %s40, 2
        // Predicated region
        $region129: #{tpu_custom_call.1} parent=127 // pred_check
          %p3271 = pneg %p419
        $region130: #{tpu_custom_call.1} parent=127 // pred_check_branch
          %3273 = sbr.rel (%p3271) target = $region132
        $region131: #{tpu_custom_call.1} parent=127 // pred_region
          %s3274 = sand.u32 %s404, 1
          %s3275 = scalar_lea.sflag [#allocation4], %s3274
          %s3276 = sand.u32 %s404, 1
          %s3277 = smul.addr %s3276, 48
          %s3278 = scalar_lea.vmem [#allocation20], %s3277
          %3280 = dma.done %s3275, 768
        $region132: #{tpu_custom_call.1} parent=127 // pred_fallthru
          _
      $region128: #{tpu_custom_call.1} parent=5 // pred_fallthru
        _
    $region6: #{tpu_custom_call.1} parent=1 // loop_footer
      %s44 = sadd.s32 1, %s40
    $region7: #{tpu_custom_call.1} parent=1 // loop_footer_branch
      %39 = sbr.rel target = $region3
    $region8: #{tpu_custom_call.1} parent=1 // loop_exit
      _
    %3281 = vsyncpa [#allocation3], 1
    %s3282 = scalar_lea.sflag [#allocation3], 1
    %3283 = vsyncpa %s3282, 1
    %3284 = vsyncpa [#allocation6], 1
    %s3285 = scalar_lea.sflag [#allocation6], 1
    %3286 = vsyncpa %s3285, 1
    %3287 = vsyncpa [#allocation9], 1
    %s3288 = scalar_lea.sflag [#allocation9], 1
    %3289 = vsyncpa %s3288, 1
    %3290 = vsyncpa [#allocation12], 1
    %s3291 = scalar_lea.sflag [#allocation12], 1
    %3292 = vsyncpa %s3291, 1
    %3293 = vsyncpa [#allocation15], 1
    %s3294 = scalar_lea.sflag [#allocation15], 1
    %3295 = vsyncpa %s3294, 1
    %3296 = vsyncpa [#allocation18], 1
    %s3297 = scalar_lea.sflag [#allocation18], 1
    %3298 = vsyncpa %s3297, 1
    %3299 = vsyncpa [#allocation4], 1
    %s3300 = scalar_lea.sflag [#allocation4], 1
    %3301 = vsyncpa %s3300, 1

</llo_original>
